<compile_context>
chip_gen: v5e
topology: v5e:2x2
jax: 0.10.0
libtpu: 0.0.40
codegen_flags: <defaults>
</compile_context>

<pallas_src>
import functools

import jax
import jax.numpy as jnp
from jax.experimental import pallas as pl
from jax.experimental.pallas import tpu as pltpu

BN_EPS = 1e-5


def _onet_decoder_kernel(p_ref, cs_ref,
                         fcp_w_ref, fc0_w_ref, fc1_w_ref,
                         fcout_w_ref, fcout_b_ref,
                         logits_ref, *, sub):
    """One (batch element, point tile) of DecoderCBatchNorm in (H, TT) layout.

    The point tile is processed in `sub`-lane stripes (trace-time unrolled) so the
    per-stripe live set (net + h, ~2*H*sub/1024 vregs) stays within the register file.
    """
    bt = p_ref.shape[-1]
    n_stripes = bt // sub

    def cbn_relu(x, k):
        # Conditional batch norm + relu; per-batch scale/shift precomputed in the
        # wrapper with BN running stats AND all additive conv biases already folded.
        s = cs_ref[0, :, k:k + 1]            # (H, 1)  scale
        b = cs_ref[0, :, 12 + k:13 + k]      # (H, 1)  shift (biases folded)
        return jnp.maximum(s * x + b, 0.0)

    def conv1x1(w_ref, blk, x):
        # Conv1d(H -> H, k=1) == (H_out, H_in) @ (H_in, sub); bf16 in, f32 accumulate.
        return jnp.dot(w_ref[blk], x.astype(w_ref.dtype),
                       preferred_element_type=jnp.float32)

    for stripe in range(n_stripes):
        lo = stripe * sub
        p = p_ref[0, :, lo:lo + sub]                       # (3, sub)  f32, channel-first

        # fc_p : Conv1d(3 -> H, k=1) as 3 VPU FMAs (a K=3 MXU pass would waste rows).
        # All constant bias terms live in the folded CBN shifts, so no bias add here.
        net = (fcp_w_ref[:, 0:1] * p[0:1, :]
               + fcp_w_ref[:, 1:2] * p[1:2, :]
               + fcp_w_ref[:, 2:3] * p[2:3, :])            # (H, sub)  f32

        # 5 conditional ResNet blocks (trace-time unrolled).
        for blk in range(5):
            h = cbn_relu(net, 2 * blk)
            h = conv1x1(fc0_w_ref, blk, h)
            h = cbn_relu(h, 2 * blk + 1)
            net = net + conv1x1(fc1_w_ref, blk, h)         # residual shortcut

        # Final CBN -> relu -> Conv1d(H -> 1, k=1).  M=1 projection kept OFF the MXU:
        # VPU broadcast-mul along sublanes + cross-sublane (XLU) reduce, f32.
        h = cbn_relu(net, 10)
        logits = (jnp.sum(fcout_w_ref[...] * h, axis=0, keepdims=True)
                  + fcout_b_ref[...])                      # (1, sub)

        logits_ref[:, :, lo:lo + sub] = logits[None]       # lane-dense store


def _round_up(x, m):
    return ((x + m - 1) // m) * m


def _cbn_affines(features, params):
    """Fold predicted CBN gamma/beta with eval-mode BN running stats -> scale/shift."""
    n_bn, _, h = params["bn_gw"].shape
    bn_mean = params.get("bn_mean", jnp.zeros((n_bn, h), jnp.float32))
    bn_var = params.get("bn_var", jnp.ones((n_bn, h), jnp.float32))
    inv_std = 1.0 / jnp.sqrt(bn_var + BN_EPS)                                 # (11, H)
    gamma = jnp.einsum("bc,kch->bkh", features, params["bn_gw"]) + params["bn_gb"]
    beta = jnp.einsum("bc,kch->bkh", features, params["bn_bw"]) + params["bn_bb"]
    scale = gamma * inv_std                                                   # (B, 11, H)
    shift = beta - gamma * (bn_mean * inv_std)
    return scale, shift


def onet_forward(points, features, z, params, *, block_t=2048):
    """ONet.forward decode path. points (B,T,3), features (B,C), z (B,Z) -> (B,T) x2."""
    B, T, _ = points.shape
    H = params["fc0_w"].shape[-1]

    points = points.astype(jnp.float32)
    features = features.astype(jnp.float32)
    z = z.astype(jnp.float32)

    # Lane-aligned point tile: as large as block_t allows (amortise per-grid-step
    # overhead), but keep >= 4 parallel grid steps so v7x's two TCs both get work.
    bt = max(128, min(_round_up(block_t, 128), _round_up(T, 128)))
    while bt > 512 and B * ((T + bt - 1) // bt) < 4:
        bt = max(512, _round_up(bt // 2, 128))
    Tp = _round_up(T, bt)
    if Tp != T:
        points = jnp.pad(points, ((0, 0), (0, Tp - T), (0, 0)))
    p_t = jnp.swapaxes(points, 1, 2)                                          # (B, 3, Tp)

    # In-kernel stripe width: bounds live vregs to the 512-lane level.
    sub = bt
    if bt > 512:
        for cand in (512, 256, 128):
            if bt % cand == 0:
                sub = cand
                break

    # --- per-batch-element precompute (hoists all M=1 matmuls out of the kernel) ---
    scale, shift = _cbn_affines(features, params)                             # (B, 11, H)
    zb = z @ params["fcz_w"] + params["fcz_b"] + params["fcp_b"]              # (B, H)
    fc0_b = params["fc0_b"][:, :, 0]                                          # (5, H)
    fc1_b = params["fc1_b"][:, :, 0]                                          # (5, H)

    # Fold every additive per-channel constant into the CBN shifts:
    #   shift[2k]   += scale[2k]   * (fc_p bias + fc_z(z) + sum_{j<k} fc1_b[j])
    #   shift[2k+1] += scale[2k+1] * fc0_b[k]
    #   shift[10]   += scale[10]   * (fc_p bias + fc_z(z) + sum_j fc1_b[j])
    cum = zb
    for blk in range(5):
        shift = shift.at[:, 2 * blk].add(scale[:, 2 * blk] * cum)
        shift = shift.at[:, 2 * blk + 1].add(scale[:, 2 * blk + 1] * fc0_b[blk][None])
        cum = cum + fc1_b[blk][None]
    shift = shift.at[:, 10].add(scale[:, 10] * cum)

    # Pack scale/shift lane-dense: (B, H, 24) = [11 scales | pad | 11 shifts | pad].
    pad = jnp.zeros((B, H, 1), jnp.float32)
    cs = jnp.concatenate([jnp.swapaxes(scale, 1, 2), pad,
                          jnp.swapaxes(shift, 1, 2), pad], axis=-1)           # (B, H, 24)

    wdt = jnp.bfloat16                      # MXU-native; f32 accumulation in-kernel
    fcp_w = params["fcp_w"].astype(jnp.float32)            # VPU FMA path, keep f32
    fc0_w = params["fc0_w"].astype(wdt)
    fc1_w = params["fc1_w"].astype(wdt)
    fcout_w = params["fcout_w"].reshape(H, 1).astype(jnp.float32)   # VPU/XLU path, f32
    fcout_b = params["fcout_b"].astype(jnp.float32)                 # (1, 1)

    # Grid-invariant weights (<100 KB total at H=64): VMEM is nowhere near binding on
    # any generation, so no Buffered(1) trick; revisit only if HIDDEN >= 512.
    def full_spec(arr):
        nd = arr.ndim
        return pl.BlockSpec(arr.shape, lambda b, t, _nd=nd: (0,) * _nd)

    weights = (fcp_w, fc0_w, fc1_w, fcout_w, fcout_b)

    in_specs = [
        pl.BlockSpec((1, 3, bt), lambda b, t: (b, 0, t)),        # points, channel-first
        pl.BlockSpec((1, H, 24), lambda b, t: (b, 0, 0)),        # packed CBN scale/shift
    ] + [full_spec(w) for w in weights]

    out_specs = pl.BlockSpec((1, 1, bt), lambda b, t: (b, 0, t))  # logits (lane-dense)
    out_shape = jax.ShapeDtypeStruct((B, 1, Tp), jnp.float32)

    logits3 = pl.pallas_call(
        functools.partial(_onet_decoder_kernel, sub=sub),
        out_shape=out_shape,
        grid_spec=pltpu.PrefetchScalarGridSpec(
            num_scalar_prefetch=0,
            grid=(B, Tp // bt),
            in_specs=in_specs,
            out_specs=out_specs,
        ),
        compiler_params=pltpu.CompilerParams(
            dimension_semantics=("parallel", "parallel")),
    )(p_t, cs, *weights)

    logits = logits3[:, 0, :T]
    # Bernoulli(logits).probs == sigmoid(logits); computed in the wrapper so the
    # kernel issues a single output DMA per grid step.
    return logits, jax.nn.sigmoid(logits)


def onet_reference(points, features, z, params):
    """Pure-JAX reference with the same bf16-weight / f32-accumulate math."""
    scale, shift = _cbn_affines(features, params)                 # (B, 11, H)
    zb = z @ params["fcz_w"] + params["fcz_b"] + params["fcp_b"]  # (B, H)

    def bf(x):
        return x.astype(jnp.bfloat16).astype(jnp.float32)

    def cbn_relu(x, k):
        return jnp.maximum(scale[:, k][:, None, :] * x + shift[:, k][:, None, :], 0.0)

    net = jnp.einsum("btd,hd->bth", points.astype(jnp.float32),
                     params["fcp_w"]) + zb[:, None, :]
    for blk in range(5):
        h = cbn_relu(net, 2 * blk)
        h = (jnp.einsum("bti,oi->bto", bf(h), bf(params["fc0_w"][blk]))
             + params["fc0_b"][blk][:, 0])
        h = cbn_relu(h, 2 * blk + 1)
        net = net + (jnp.einsum("bti,oi->bto", bf(h), bf(params["fc1_w"][blk]))
                     + params["fc1_b"][blk][:, 0])
    h = cbn_relu(net, 10)
    logits = (jnp.einsum("bth,h->bt", h, params["fcout_w"][0])
              + params["fcout_b"][0, 0])
    return logits, jax.nn.sigmoid(logits)


def init_params(key, *, c_dim, z_dim, hidden):
    """Deterministic synthetic parameters (shapes follow DecoderCBatchNorm.__init__).

    Conv1d(k=1) weights are stored (out, in) like PyTorch's squeezed weights so the
    kernel's (H_out, H_in) @ (H_in, TT) matmuls use them directly; fcz_w is stored
    (in, out) because it is only used for the wrapper-side z @ W bias fold.
    """
    ks = iter(jax.random.split(key, 32))
    H, C, Z = hidden, c_dim, z_dim

    def w(shape, fan_in):
        return (jax.random.normal(next(ks), shape, jnp.float32)
                * (1.0 / jnp.sqrt(jnp.float32(fan_in))))

    params = {
        "fcp_w": w((H, 3), 3),                 # Conv1d(3, H, 1).weight.squeeze(-1)
        "fcp_b": w((H,), H),
        "fcz_w": w((Z, H), Z),                 # Linear(Z, H).weight^T (wrapper only)
        "fcz_b": w((H,), H),
        # 11 CBatchNorm1d layers: bn_0/bn_1 of blocks 0..4 plus the final bn
        "bn_gw": w((11, C, H), C) * 0.1,       # conv_gamma weights (C -> H)
        "bn_gb": jnp.ones((11, H), jnp.float32)
                 + 0.05 * jax.random.normal(next(ks), (11, H), jnp.float32),
        "bn_bw": w((11, C, H), C) * 0.1,       # conv_beta weights
        "bn_bb": 0.05 * jax.random.normal(next(ks), (11, H), jnp.float32),
        # eval-mode BatchNorm1d(affine=False) running statistics (folded in wrapper)
        "bn_mean": jnp.zeros((11, H), jnp.float32),
        "bn_var": jnp.ones((11, H), jnp.float32),
        # 5 CResnetBlockConv1d: fc_0 / fc_1 (Conv1d(H, H, 1)), weights (out, in)
        "fc0_w": w((5, H, H), H),
        "fc0_b": w((5, H, 1), H),
        "fc1_w": w((5, H, H), H) * 0.1,        # fc_1 is zero-init in torch; small here
        "fc1_b": w((5, H, 1), H),
        # fc_out : Conv1d(H, 1, 1)
        "fcout_w": w((1, H), H),
        "fcout_b": w((1, 1), 1),
    }
    return params


if __name__ == "__main__":
    # Small, shape-consistent configuration.
    B = 2          # number of bounding boxes (batch)
    T = 1024       # sampled query points per box
    FEAT = 32      # proposal feature dim
    NUM_CLS = 8    # one-hot class codes (use_cls_for_completion=True)
    Z_DIM = 16     # latent dim (prior mean used since sample=False)
    HIDDEN = 64    # decoder hidden size
    C_DIM = FEAT + NUM_CLS

    key = jax.random.PRNGKey(0)
    k_pts, k_feat, k_cls, k_par = jax.random.split(key, 4)

    points = jax.random.uniform(k_pts, (B, T, 3), jnp.float32, -0.5, 0.5)
    proposal_features = jax.random.normal(k_feat, (B, FEAT), jnp.float32)
    cls_labels = jax.random.randint(k_cls, (B,), 0, NUM_CLS)
    cls_codes = jax.nn.one_hot(cls_labels, NUM_CLS, dtype=jnp.float32)

    # ONet.forward glue: concat class codes; z taken from the prior mean (sample=False).
    features = jnp.concatenate([proposal_features, cls_codes], axis=-1)   # (B, C_DIM)
    z = jnp.zeros((B, Z_DIM), jnp.float32)                                # prior mean

    params = init_params(k_par, c_dim=C_DIM, z_dim=Z_DIM, hidden=HIDDEN)

    fwd = jax.jit(functools.partial(onet_forward, block_t=2048))
    logits, probs = fwd(points, features, z, params)
    jax.block_until_ready((logits, probs))

    assert logits.shape == (B, T) and probs.shape == (B, T)
    assert bool(jnp.all(jnp.isfinite(logits))) and bool(jnp.all(jnp.isfinite(probs)))

    # Cross-check against the pure-JAX reference (same bf16-weight math).
    ref_logits, ref_probs = onet_reference(points, features, z, params)
    max_err = float(jnp.max(jnp.abs(logits - ref_logits)))
    assert max_err < 1e-2, f"kernel/reference mismatch: {max_err}"

    print("KERNEL_OK")
</pallas_src>

<mosaic_0001>
module attributes {stable_mosaic.version = 11 : i64} {
  func.func @_onet_decoder_kernel(%arg0: i32, %arg1: i32, %arg2: memref<1x3x512xf32, #tpu.memory_space<vmem>>, %arg3: memref<1x64x24xf32, #tpu.memory_space<vmem>>, %arg4: memref<64x3xf32, #tpu.memory_space<vmem>>, %arg5: memref<5x64x64xbf16, #tpu.memory_space<vmem>>, %arg6: memref<5x64x64xbf16, #tpu.memory_space<vmem>>, %arg7: memref<64x1xf32, #tpu.memory_space<vmem>>, %arg8: memref<1x1xf32, #tpu.memory_space<vmem>>, %arg9: memref<1x1x512xf32, #tpu.memory_space<vmem>>) attributes {dimension_semantics = [#tpu.dimension_semantics<parallel>, #tpu.dimension_semantics<parallel>], iteration_bounds = array<i64: 2, 2>, scalar_prefetch = 0 : i64, scratch_operands = 0 : i64, tpu.core_type = #tpu.core_type<tc>, window_params = [{transform_indices = @transform_0, window_bounds = array<i64: 1, 3, 512>}, {transform_indices = @transform_1, window_bounds = array<i64: 1, 64, 24>}, {pipeline_mode = #tpu.pipeline_mode<synchronous>, transform_indices = @transform_2, window_bounds = array<i64: 64, 3>}, {pipeline_mode = #tpu.pipeline_mode<synchronous>, transform_indices = @transform_3, window_bounds = array<i64: 5, 64, 64>}, {pipeline_mode = #tpu.pipeline_mode<synchronous>, transform_indices = @transform_4, window_bounds = array<i64: 5, 64, 64>}, {pipeline_mode = #tpu.pipeline_mode<synchronous>, transform_indices = @transform_5, window_bounds = array<i64: 64, 1>}, {pipeline_mode = #tpu.pipeline_mode<synchronous>, transform_indices = @transform_6, window_bounds = array<i64: 1, 1>}, {transform_indices = @transform_7, window_bounds = array<i64: 1, 1, 512>}]} {
    %c0 = arith.constant 0 : index
    %c0_0 = arith.constant 0 : index
    %c0_1 = arith.constant 0 : index
    %0 = vector.load %arg2[%c0, %c0_0, %c0_1] : memref<1x3x512xf32, #tpu.memory_space<vmem>>, vector<1x3x512xf32>
    %1 = vector.shape_cast %0 : vector<1x3x512xf32> to vector<3x512xf32>
    %c0_2 = arith.constant 0 : index
    %c0_3 = arith.constant 0 : index
    %2 = vector.load %arg4[%c0_2, %c0_3] : memref<64x3xf32, #tpu.memory_space<vmem>>, vector<64x1xf32>
    %3 = vector.extract_strided_slice %1 {offsets = [0, 0], sizes = [1, 512], strides = [1, 1]} : vector<3x512xf32> to vector<1x512xf32>
    %4 = vector.broadcast %2 : vector<64x1xf32> to vector<64x512xf32>
    %5 = vector.broadcast %3 : vector<1x512xf32> to vector<64x512xf32>
    %6 = arith.mulf %4, %5 : vector<64x512xf32>
    %c0_4 = arith.constant 0 : index
    %c1 = arith.constant 1 : index
    %7 = vector.load %arg4[%c0_4, %c1] : memref<64x3xf32, #tpu.memory_space<vmem>>, vector<64x1xf32>
    %8 = vector.extract_strided_slice %1 {offsets = [1, 0], sizes = [1, 512], strides = [1, 1]} : vector<3x512xf32> to vector<1x512xf32>
    %9 = vector.broadcast %7 : vector<64x1xf32> to vector<64x512xf32>
    %10 = vector.broadcast %8 : vector<1x512xf32> to vector<64x512xf32>
    %11 = arith.mulf %9, %10 : vector<64x512xf32>
    %12 = arith.addf %6, %11 : vector<64x512xf32>
    %c0_5 = arith.constant 0 : index
    %c2 = arith.constant 2 : index
    %13 = vector.load %arg4[%c0_5, %c2] : memref<64x3xf32, #tpu.memory_space<vmem>>, vector<64x1xf32>
    %14 = vector.extract_strided_slice %1 {offsets = [2, 0], sizes = [1, 512], strides = [1, 1]} : vector<3x512xf32> to vector<1x512xf32>
    %15 = vector.broadcast %13 : vector<64x1xf32> to vector<64x512xf32>
    %16 = vector.broadcast %14 : vector<1x512xf32> to vector<64x512xf32>
    %17 = arith.mulf %15, %16 : vector<64x512xf32>
    %18 = arith.addf %12, %17 : vector<64x512xf32>
    %c0_6 = arith.constant 0 : index
    %c0_7 = arith.constant 0 : index
    %c0_8 = arith.constant 0 : index
    %19 = vector.load %arg3[%c0_6, %c0_7, %c0_8] : memref<1x64x24xf32, #tpu.memory_space<vmem>>, vector<1x64x1xf32>
    %20 = vector.shape_cast %19 : vector<1x64x1xf32> to vector<64x1xf32>
    %c0_9 = arith.constant 0 : index
    %c0_10 = arith.constant 0 : index
    %c12 = arith.constant 12 : index
    %21 = vector.load %arg3[%c0_9, %c0_10, %c12] : memref<1x64x24xf32, #tpu.memory_space<vmem>>, vector<1x64x1xf32>
    %22 = vector.shape_cast %21 : vector<1x64x1xf32> to vector<64x1xf32>
    %23 = vector.broadcast %20 : vector<64x1xf32> to vector<64x512xf32>
    %24 = arith.mulf %23, %18 : vector<64x512xf32>
    %25 = vector.broadcast %22 : vector<64x1xf32> to vector<64x512xf32>
    %26 = arith.addf %24, %25 : vector<64x512xf32>
    %cst = arith.constant 0.000000e+00 : f32
    %27 = vector.broadcast %cst : f32 to vector<64x512xf32>
    %28 = arith.maximumf %26, %27 : vector<64x512xf32>
    %c0_11 = arith.constant 0 : index
    %c0_12 = arith.constant 0 : index
    %c0_13 = arith.constant 0 : index
    %29 = vector.load %arg5[%c0_11, %c0_12, %c0_13] : memref<5x64x64xbf16, #tpu.memory_space<vmem>>, vector<1x64x64xbf16>
    %30 = vector.shape_cast %29 : vector<1x64x64xbf16> to vector<64x64xbf16>
    %31 = arith.truncf %28 : vector<64x512xf32> to vector<64x512xbf16>
    %cst_14 = arith.constant dense<0.000000e+00> : vector<64x512xf32>
    %32 = tpu.matmul %30, %31, %cst_14 {dimension_numbers = #tpu.dot_dimension_numbers<[1], [0], [0], [1], [0, 0, 1, 1], [], []>} : vector<64x64xbf16>, vector<64x512xbf16>, vector<64x512xf32> -> vector<64x512xf32>
    %c0_15 = arith.constant 0 : index
    %c0_16 = arith.constant 0 : index
    %c1_17 = arith.constant 1 : index
    %33 = vector.load %arg3[%c0_15, %c0_16, %c1_17] : memref<1x64x24xf32, #tpu.memory_space<vmem>>, vector<1x64x1xf32>
    %34 = vector.shape_cast %33 : vector<1x64x1xf32> to vector<64x1xf32>
    %c0_18 = arith.constant 0 : index
    %c0_19 = arith.constant 0 : index
    %c13 = arith.constant 13 : index
    %35 = vector.load %arg3[%c0_18, %c0_19, %c13] : memref<1x64x24xf32, #tpu.memory_space<vmem>>, vector<1x64x1xf32>
    %36 = vector.shape_cast %35 : vector<1x64x1xf32> to vector<64x1xf32>
    %37 = vector.broadcast %34 : vector<64x1xf32> to vector<64x512xf32>
    %38 = arith.mulf %37, %32 : vector<64x512xf32>
    %39 = vector.broadcast %36 : vector<64x1xf32> to vector<64x512xf32>
    %40 = arith.addf %38, %39 : vector<64x512xf32>
    %cst_20 = arith.constant 0.000000e+00 : f32
    %41 = vector.broadcast %cst_20 : f32 to vector<64x512xf32>
    %42 = arith.maximumf %40, %41 : vector<64x512xf32>
    %c0_21 = arith.constant 0 : index
    %c0_22 = arith.constant 0 : index
    %c0_23 = arith.constant 0 : index
    %43 = vector.load %arg6[%c0_21, %c0_22, %c0_23] : memref<5x64x64xbf16, #tpu.memory_space<vmem>>, vector<1x64x64xbf16>
    %44 = vector.shape_cast %43 : vector<1x64x64xbf16> to vector<64x64xbf16>
    %45 = arith.truncf %42 : vector<64x512xf32> to vector<64x512xbf16>
    %cst_24 = arith.constant dense<0.000000e+00> : vector<64x512xf32>
    %46 = tpu.matmul %44, %45, %cst_24 {dimension_numbers = #tpu.dot_dimension_numbers<[1], [0], [0], [1], [0, 0, 1, 1], [], []>} : vector<64x64xbf16>, vector<64x512xbf16>, vector<64x512xf32> -> vector<64x512xf32>
    %47 = arith.addf %18, %46 : vector<64x512xf32>
    %c0_25 = arith.constant 0 : index
    %c0_26 = arith.constant 0 : index
    %c2_27 = arith.constant 2 : index
    %48 = vector.load %arg3[%c0_25, %c0_26, %c2_27] : memref<1x64x24xf32, #tpu.memory_space<vmem>>, vector<1x64x1xf32>
    %49 = vector.shape_cast %48 : vector<1x64x1xf32> to vector<64x1xf32>
    %c0_28 = arith.constant 0 : index
    %c0_29 = arith.constant 0 : index
    %c14 = arith.constant 14 : index
    %50 = vector.load %arg3[%c0_28, %c0_29, %c14] : memref<1x64x24xf32, #tpu.memory_space<vmem>>, vector<1x64x1xf32>
    %51 = vector.shape_cast %50 : vector<1x64x1xf32> to vector<64x1xf32>
    %52 = vector.broadcast %49 : vector<64x1xf32> to vector<64x512xf32>
    %53 = arith.mulf %52, %47 : vector<64x512xf32>
    %54 = vector.broadcast %51 : vector<64x1xf32> to vector<64x512xf32>
    %55 = arith.addf %53, %54 : vector<64x512xf32>
    %cst_30 = arith.constant 0.000000e+00 : f32
    %56 = vector.broadcast %cst_30 : f32 to vector<64x512xf32>
    %57 = arith.maximumf %55, %56 : vector<64x512xf32>
    %c1_31 = arith.constant 1 : index
    %c0_32 = arith.constant 0 : index
    %c0_33 = arith.constant 0 : index
    %58 = vector.load %arg5[%c1_31, %c0_32, %c0_33] : memref<5x64x64xbf16, #tpu.memory_space<vmem>>, vector<1x64x64xbf16>
    %59 = vector.shape_cast %58 : vector<1x64x64xbf16> to vector<64x64xbf16>
    %60 = arith.truncf %57 : vector<64x512xf32> to vector<64x512xbf16>
    %cst_34 = arith.constant dense<0.000000e+00> : vector<64x512xf32>
    %61 = tpu.matmul %59, %60, %cst_34 {dimension_numbers = #tpu.dot_dimension_numbers<[1], [0], [0], [1], [0, 0, 1, 1], [], []>} : vector<64x64xbf16>, vector<64x512xbf16>, vector<64x512xf32> -> vector<64x512xf32>
    %c0_35 = arith.constant 0 : index
    %c0_36 = arith.constant 0 : index
    %c3 = arith.constant 3 : index
    %62 = vector.load %arg3[%c0_35, %c0_36, %c3] : memref<1x64x24xf32, #tpu.memory_space<vmem>>, vector<1x64x1xf32>
    %63 = vector.shape_cast %62 : vector<1x64x1xf32> to vector<64x1xf32>
    %c0_37 = arith.constant 0 : index
    %c0_38 = arith.constant 0 : index
    %c15 = arith.constant 15 : index
    %64 = vector.load %arg3[%c0_37, %c0_38, %c15] : memref<1x64x24xf32, #tpu.memory_space<vmem>>, vector<1x64x1xf32>
    %65 = vector.shape_cast %64 : vector<1x64x1xf32> to vector<64x1xf32>
    %66 = vector.broadcast %63 : vector<64x1xf32> to vector<64x512xf32>
    %67 = arith.mulf %66, %61 : vector<64x512xf32>
    %68 = vector.broadcast %65 : vector<64x1xf32> to vector<64x512xf32>
    %69 = arith.addf %67, %68 : vector<64x512xf32>
    %cst_39 = arith.constant 0.000000e+00 : f32
    %70 = vector.broadcast %cst_39 : f32 to vector<64x512xf32>
    %71 = arith.maximumf %69, %70 : vector<64x512xf32>
    %c1_40 = arith.constant 1 : index
    %c0_41 = arith.constant 0 : index
    %c0_42 = arith.constant 0 : index
    %72 = vector.load %arg6[%c1_40, %c0_41, %c0_42] : memref<5x64x64xbf16, #tpu.memory_space<vmem>>, vector<1x64x64xbf16>
    %73 = vector.shape_cast %72 : vector<1x64x64xbf16> to vector<64x64xbf16>
    %74 = arith.truncf %71 : vector<64x512xf32> to vector<64x512xbf16>
    %cst_43 = arith.constant dense<0.000000e+00> : vector<64x512xf32>
    %75 = tpu.matmul %73, %74, %cst_43 {dimension_numbers = #tpu.dot_dimension_numbers<[1], [0], [0], [1], [0, 0, 1, 1], [], []>} : vector<64x64xbf16>, vector<64x512xbf16>, vector<64x512xf32> -> vector<64x512xf32>
    %76 = arith.addf %47, %75 : vector<64x512xf32>
    %c0_44 = arith.constant 0 : index
    %c0_45 = arith.constant 0 : index
    %c4 = arith.constant 4 : index
    %77 = vector.load %arg3[%c0_44, %c0_45, %c4] : memref<1x64x24xf32, #tpu.memory_space<vmem>>, vector<1x64x1xf32>
    %78 = vector.shape_cast %77 : vector<1x64x1xf32> to vector<64x1xf32>
    %c0_46 = arith.constant 0 : index
    %c0_47 = arith.constant 0 : index
    %c16 = arith.constant 16 : index
    %79 = vector.load %arg3[%c0_46, %c0_47, %c16] : memref<1x64x24xf32, #tpu.memory_space<vmem>>, vector<1x64x1xf32>
    %80 = vector.shape_cast %79 : vector<1x64x1xf32> to vector<64x1xf32>
    %81 = vector.broadcast %78 : vector<64x1xf32> to vector<64x512xf32>
    %82 = arith.mulf %81, %76 : vector<64x512xf32>
    %83 = vector.broadcast %80 : vector<64x1xf32> to vector<64x512xf32>
    %84 = arith.addf %82, %83 : vector<64x512xf32>
    %cst_48 = arith.constant 0.000000e+00 : f32
    %85 = vector.broadcast %cst_48 : f32 to vector<64x512xf32>
    %86 = arith.maximumf %84, %85 : vector<64x512xf32>
    %c2_49 = arith.constant 2 : index
    %c0_50 = arith.constant 0 : index
    %c0_51 = arith.constant 0 : index
    %87 = vector.load %arg5[%c2_49, %c0_50, %c0_51] : memref<5x64x64xbf16, #tpu.memory_space<vmem>>, vector<1x64x64xbf16>
    %88 = vector.shape_cast %87 : vector<1x64x64xbf16> to vector<64x64xbf16>
    %89 = arith.truncf %86 : vector<64x512xf32> to vector<64x512xbf16>
    %cst_52 = arith.constant dense<0.000000e+00> : vector<64x512xf32>
    %90 = tpu.matmul %88, %89, %cst_52 {dimension_numbers = #tpu.dot_dimension_numbers<[1], [0], [0], [1], [0, 0, 1, 1], [], []>} : vector<64x64xbf16>, vector<64x512xbf16>, vector<64x512xf32> -> vector<64x512xf32>
    %c0_53 = arith.constant 0 : index
    %c0_54 = arith.constant 0 : index
    %c5 = arith.constant 5 : index
    %91 = vector.load %arg3[%c0_53, %c0_54, %c5] : memref<1x64x24xf32, #tpu.memory_space<vmem>>, vector<1x64x1xf32>
    %92 = vector.shape_cast %91 : vector<1x64x1xf32> to vector<64x1xf32>
    %c0_55 = arith.constant 0 : index
    %c0_56 = arith.constant 0 : index
    %c17 = arith.constant 17 : index
    %93 = vector.load %arg3[%c0_55, %c0_56, %c17] : memref<1x64x24xf32, #tpu.memory_space<vmem>>, vector<1x64x1xf32>
    %94 = vector.shape_cast %93 : vector<1x64x1xf32> to vector<64x1xf32>
    %95 = vector.broadcast %92 : vector<64x1xf32> to vector<64x512xf32>
    %96 = arith.mulf %95, %90 : vector<64x512xf32>
    %97 = vector.broadcast %94 : vector<64x1xf32> to vector<64x512xf32>
    %98 = arith.addf %96, %97 : vector<64x512xf32>
    %cst_57 = arith.constant 0.000000e+00 : f32
    %99 = vector.broadcast %cst_57 : f32 to vector<64x512xf32>
    %100 = arith.maximumf %98, %99 : vector<64x512xf32>
    %c2_58 = arith.constant 2 : index
    %c0_59 = arith.constant 0 : index
    %c0_60 = arith.constant 0 : index
    %101 = vector.load %arg6[%c2_58, %c0_59, %c0_60] : memref<5x64x64xbf16, #tpu.memory_space<vmem>>, vector<1x64x64xbf16>
    %102 = vector.shape_cast %101 : vector<1x64x64xbf16> to vector<64x64xbf16>
    %103 = arith.truncf %100 : vector<64x512xf32> to vector<64x512xbf16>
    %cst_61 = arith.constant dense<0.000000e+00> : vector<64x512xf32>
    %104 = tpu.matmul %102, %103, %cst_61 {dimension_numbers = #tpu.dot_dimension_numbers<[1], [0], [0], [1], [0, 0, 1, 1], [], []>} : vector<64x64xbf16>, vector<64x512xbf16>, vector<64x512xf32> -> vector<64x512xf32>
    %105 = arith.addf %76, %104 : vector<64x512xf32>
    %c0_62 = arith.constant 0 : index
    %c0_63 = arith.constant 0 : index
    %c6 = arith.constant 6 : index
    %106 = vector.load %arg3[%c0_62, %c0_63, %c6] : memref<1x64x24xf32, #tpu.memory_space<vmem>>, vector<1x64x1xf32>
    %107 = vector.shape_cast %106 : vector<1x64x1xf32> to vector<64x1xf32>
    %c0_64 = arith.constant 0 : index
    %c0_65 = arith.constant 0 : index
    %c18 = arith.constant 18 : index
    %108 = vector.load %arg3[%c0_64, %c0_65, %c18] : memref<1x64x24xf32, #tpu.memory_space<vmem>>, vector<1x64x1xf32>
    %109 = vector.shape_cast %108 : vector<1x64x1xf32> to vector<64x1xf32>
    %110 = vector.broadcast %107 : vector<64x1xf32> to vector<64x512xf32>
    %111 = arith.mulf %110, %105 : vector<64x512xf32>
    %112 = vector.broadcast %109 : vector<64x1xf32> to vector<64x512xf32>
    %113 = arith.addf %111, %112 : vector<64x512xf32>
    %cst_66 = arith.constant 0.000000e+00 : f32
    %114 = vector.broadcast %cst_66 : f32 to vector<64x512xf32>
    %115 = arith.maximumf %113, %114 : vector<64x512xf32>
    %c3_67 = arith.constant 3 : index
    %c0_68 = arith.constant 0 : index
    %c0_69 = arith.constant 0 : index
    %116 = vector.load %arg5[%c3_67, %c0_68, %c0_69] : memref<5x64x64xbf16, #tpu.memory_space<vmem>>, vector<1x64x64xbf16>
    %117 = vector.shape_cast %116 : vector<1x64x64xbf16> to vector<64x64xbf16>
    %118 = arith.truncf %115 : vector<64x512xf32> to vector<64x512xbf16>
    %cst_70 = arith.constant dense<0.000000e+00> : vector<64x512xf32>
    %119 = tpu.matmul %117, %118, %cst_70 {dimension_numbers = #tpu.dot_dimension_numbers<[1], [0], [0], [1], [0, 0, 1, 1], [], []>} : vector<64x64xbf16>, vector<64x512xbf16>, vector<64x512xf32> -> vector<64x512xf32>
    %c0_71 = arith.constant 0 : index
    %c0_72 = arith.constant 0 : index
    %c7 = arith.constant 7 : index
    %120 = vector.load %arg3[%c0_71, %c0_72, %c7] : memref<1x64x24xf32, #tpu.memory_space<vmem>>, vector<1x64x1xf32>
    %121 = vector.shape_cast %120 : vector<1x64x1xf32> to vector<64x1xf32>
    %c0_73 = arith.constant 0 : index
    %c0_74 = arith.constant 0 : index
    %c19 = arith.constant 19 : index
    %122 = vector.load %arg3[%c0_73, %c0_74, %c19] : memref<1x64x24xf32, #tpu.memory_space<vmem>>, vector<1x64x1xf32>
    %123 = vector.shape_cast %122 : vector<1x64x1xf32> to vector<64x1xf32>
    %124 = vector.broadcast %121 : vector<64x1xf32> to vector<64x512xf32>
    %125 = arith.mulf %124, %119 : vector<64x512xf32>
    %126 = vector.broadcast %123 : vector<64x1xf32> to vector<64x512xf32>
    %127 = arith.addf %125, %126 : vector<64x512xf32>
    %cst_75 = arith.constant 0.000000e+00 : f32
    %128 = vector.broadcast %cst_75 : f32 to vector<64x512xf32>
    %129 = arith.maximumf %127, %128 : vector<64x512xf32>
    %c3_76 = arith.constant 3 : index
    %c0_77 = arith.constant 0 : index
    %c0_78 = arith.constant 0 : index
    %130 = vector.load %arg6[%c3_76, %c0_77, %c0_78] : memref<5x64x64xbf16, #tpu.memory_space<vmem>>, vector<1x64x64xbf16>
    %131 = vector.shape_cast %130 : vector<1x64x64xbf16> to vector<64x64xbf16>
    %132 = arith.truncf %129 : vector<64x512xf32> to vector<64x512xbf16>
    %cst_79 = arith.constant dense<0.000000e+00> : vector<64x512xf32>
    %133 = tpu.matmul %131, %132, %cst_79 {dimension_numbers = #tpu.dot_dimension_numbers<[1], [0], [0], [1], [0, 0, 1, 1], [], []>} : vector<64x64xbf16>, vector<64x512xbf16>, vector<64x512xf32> -> vector<64x512xf32>
    %134 = arith.addf %105, %133 : vector<64x512xf32>
    %c0_80 = arith.constant 0 : index
    %c0_81 = arith.constant 0 : index
    %c8 = arith.constant 8 : index
    %135 = vector.load %arg3[%c0_80, %c0_81, %c8] : memref<1x64x24xf32, #tpu.memory_space<vmem>>, vector<1x64x1xf32>
    %136 = vector.shape_cast %135 : vector<1x64x1xf32> to vector<64x1xf32>
    %c0_82 = arith.constant 0 : index
    %c0_83 = arith.constant 0 : index
    %c20 = arith.constant 20 : index
    %137 = vector.load %arg3[%c0_82, %c0_83, %c20] : memref<1x64x24xf32, #tpu.memory_space<vmem>>, vector<1x64x1xf32>
    %138 = vector.shape_cast %137 : vector<1x64x1xf32> to vector<64x1xf32>
    %139 = vector.broadcast %136 : vector<64x1xf32> to vector<64x512xf32>
    %140 = arith.mulf %139, %134 : vector<64x512xf32>
    %141 = vector.broadcast %138 : vector<64x1xf32> to vector<64x512xf32>
    %142 = arith.addf %140, %141 : vector<64x512xf32>
    %cst_84 = arith.constant 0.000000e+00 : f32
    %143 = vector.broadcast %cst_84 : f32 to vector<64x512xf32>
    %144 = arith.maximumf %142, %143 : vector<64x512xf32>
    %c4_85 = arith.constant 4 : index
    %c0_86 = arith.constant 0 : index
    %c0_87 = arith.constant 0 : index
    %145 = vector.load %arg5[%c4_85, %c0_86, %c0_87] : memref<5x64x64xbf16, #tpu.memory_space<vmem>>, vector<1x64x64xbf16>
    %146 = vector.shape_cast %145 : vector<1x64x64xbf16> to vector<64x64xbf16>
    %147 = arith.truncf %144 : vector<64x512xf32> to vector<64x512xbf16>
    %cst_88 = arith.constant dense<0.000000e+00> : vector<64x512xf32>
    %148 = tpu.matmul %146, %147, %cst_88 {dimension_numbers = #tpu.dot_dimension_numbers<[1], [0], [0], [1], [0, 0, 1, 1], [], []>} : vector<64x64xbf16>, vector<64x512xbf16>, vector<64x512xf32> -> vector<64x512xf32>
    %c0_89 = arith.constant 0 : index
    %c0_90 = arith.constant 0 : index
    %c9 = arith.constant 9 : index
    %149 = vector.load %arg3[%c0_89, %c0_90, %c9] : memref<1x64x24xf32, #tpu.memory_space<vmem>>, vector<1x64x1xf32>
    %150 = vector.shape_cast %149 : vector<1x64x1xf32> to vector<64x1xf32>
    %c0_91 = arith.constant 0 : index
    %c0_92 = arith.constant 0 : index
    %c21 = arith.constant 21 : index
    %151 = vector.load %arg3[%c0_91, %c0_92, %c21] : memref<1x64x24xf32, #tpu.memory_space<vmem>>, vector<1x64x1xf32>
    %152 = vector.shape_cast %151 : vector<1x64x1xf32> to vector<64x1xf32>
    %153 = vector.broadcast %150 : vector<64x1xf32> to vector<64x512xf32>
    %154 = arith.mulf %153, %148 : vector<64x512xf32>
    %155 = vector.broadcast %152 : vector<64x1xf32> to vector<64x512xf32>
    %156 = arith.addf %154, %155 : vector<64x512xf32>
    %cst_93 = arith.constant 0.000000e+00 : f32
    %157 = vector.broadcast %cst_93 : f32 to vector<64x512xf32>
    %158 = arith.maximumf %156, %157 : vector<64x512xf32>
    %c4_94 = arith.constant 4 : index
    %c0_95 = arith.constant 0 : index
    %c0_96 = arith.constant 0 : index
    %159 = vector.load %arg6[%c4_94, %c0_95, %c0_96] : memref<5x64x64xbf16, #tpu.memory_space<vmem>>, vector<1x64x64xbf16>
    %160 = vector.shape_cast %159 : vector<1x64x64xbf16> to vector<64x64xbf16>
    %161 = arith.truncf %158 : vector<64x512xf32> to vector<64x512xbf16>
    %cst_97 = arith.constant dense<0.000000e+00> : vector<64x512xf32>
    %162 = tpu.matmul %160, %161, %cst_97 {dimension_numbers = #tpu.dot_dimension_numbers<[1], [0], [0], [1], [0, 0, 1, 1], [], []>} : vector<64x64xbf16>, vector<64x512xbf16>, vector<64x512xf32> -> vector<64x512xf32>
    %163 = arith.addf %134, %162 : vector<64x512xf32>
    %c0_98 = arith.constant 0 : index
    %c0_99 = arith.constant 0 : index
    %c10 = arith.constant 10 : index
    %164 = vector.load %arg3[%c0_98, %c0_99, %c10] : memref<1x64x24xf32, #tpu.memory_space<vmem>>, vector<1x64x1xf32>
    %165 = vector.shape_cast %164 : vector<1x64x1xf32> to vector<64x1xf32>
    %c0_100 = arith.constant 0 : index
    %c0_101 = arith.constant 0 : index
    %c22 = arith.constant 22 : index
    %166 = vector.load %arg3[%c0_100, %c0_101, %c22] : memref<1x64x24xf32, #tpu.memory_space<vmem>>, vector<1x64x1xf32>
    %167 = vector.shape_cast %166 : vector<1x64x1xf32> to vector<64x1xf32>
    %168 = vector.broadcast %165 : vector<64x1xf32> to vector<64x512xf32>
    %169 = arith.mulf %168, %163 : vector<64x512xf32>
    %170 = vector.broadcast %167 : vector<64x1xf32> to vector<64x512xf32>
    %171 = arith.addf %169, %170 : vector<64x512xf32>
    %cst_102 = arith.constant 0.000000e+00 : f32
    %172 = vector.broadcast %cst_102 : f32 to vector<64x512xf32>
    %173 = arith.maximumf %171, %172 : vector<64x512xf32>
    %c0_103 = arith.constant 0 : index
    %c0_104 = arith.constant 0 : index
    %174 = vector.load %arg7[%c0_103, %c0_104] : memref<64x1xf32, #tpu.memory_space<vmem>>, vector<64x1xf32>
    %175 = vector.broadcast %174 : vector<64x1xf32> to vector<64x512xf32>
    %176 = arith.mulf %175, %173 : vector<64x512xf32>
    %cst_105 = arith.constant dense<0.000000e+00> : vector<512xf32>
    %177 = vector.multi_reduction <add>, %176, %cst_105 [0] : vector<64x512xf32> to vector<512xf32>
    %178 = vector.shape_cast %177 : vector<512xf32> to vector<1x512xf32>
    %c0_106 = arith.constant 0 : index
    %c0_107 = arith.constant 0 : index
    %179 = vector.load %arg8[%c0_106, %c0_107] : memref<1x1xf32, #tpu.memory_space<vmem>>, vector<1x1xf32>
    %180 = vector.broadcast %179 : vector<1x1xf32> to vector<1x512xf32>
    %181 = arith.addf %178, %180 : vector<1x512xf32>
    %182 = vector.shape_cast %181 : vector<1x512xf32> to vector<1x1x512xf32>
    %c0_108 = arith.constant 0 : index
    %c0_109 = arith.constant 0 : index
    %c0_110 = arith.constant 0 : index
    %183 = vector.load %arg9[%c0_108, %c0_109, %c0_110] : memref<1x1x512xf32, #tpu.memory_space<vmem>>, vector<1x1x512xf32>
    tpu.vector_store %arg9[%c0_108, %c0_109, %c0_110], %182 {strides = array<i32>} : memref<1x1x512xf32, #tpu.memory_space<vmem>>, vector<1x1x512xf32>,
    return
  }
  func.func @transform_0(%arg0: i32, %arg1: i32) -> (i32, i32, i32) {
    %c0_i32 = arith.constant 0 : i32
    %c0_i32_0 = arith.constant 0 : i32
    return %arg0, %c0_i32, %arg1 : i32, i32, i32
  }
  func.func @transform_1(%arg0: i32, %arg1: i32) -> (i32, i32, i32) {
    %c0_i32 = arith.constant 0 : i32
    %c0_i32_0 = arith.constant 0 : i32
    %c0_i32_1 = arith.constant 0 : i32
    return %arg0, %c0_i32, %c0_i32_0 : i32, i32, i32
  }
  func.func @transform_2(%arg0: i32, %arg1: i32) -> (i32, i32) {
    %c0_i32 = arith.constant 0 : i32
    %c0_i32_0 = arith.constant 0 : i32
    %c0_i32_1 = arith.constant 0 : i32
    return %c0_i32, %c0_i32_0 : i32, i32
  }
  func.func @transform_3(%arg0: i32, %arg1: i32) -> (i32, i32, i32) {
    %c0_i32 = arith.constant 0 : i32
    %c0_i32_0 = arith.constant 0 : i32
    %c0_i32_1 = arith.constant 0 : i32
    %c0_i32_2 = arith.constant 0 : i32
    return %c0_i32, %c0_i32_0, %c0_i32_1 : i32, i32, i32
  }
  func.func @transform_4(%arg0: i32, %arg1: i32) -> (i32, i32, i32) {
    %c0_i32 = arith.constant 0 : i32
    %c0_i32_0 = arith.constant 0 : i32
    %c0_i32_1 = arith.constant 0 : i32
    %c0_i32_2 = arith.constant 0 : i32
    return %c0_i32, %c0_i32_0, %c0_i32_1 : i32, i32, i32
  }
  func.func @transform_5(%arg0: i32, %arg1: i32) -> (i32, i32) {
    %c0_i32 = arith.constant 0 : i32
    %c0_i32_0 = arith.constant 0 : i32
    %c0_i32_1 = arith.constant 0 : i32
    return %c0_i32, %c0_i32_0 : i32, i32
  }
  func.func @transform_6(%arg0: i32, %arg1: i32) -> (i32, i32) {
    %c0_i32 = arith.constant 0 : i32
    %c0_i32_0 = arith.constant 0 : i32
    %c0_i32_1 = arith.constant 0 : i32
    return %c0_i32, %c0_i32_0 : i32, i32
  }
  func.func @transform_7(%arg0: i32, %arg1: i32) -> (i32, i32, i32) {
    %c0_i32 = arith.constant 0 : i32
    %c0_i32_0 = arith.constant 0 : i32
    return %arg0, %c0_i32, %arg1 : i32, i32, i32
  }
}

</mosaic_0001>

<llo_original>
// kernel: onet_forward.1
$region0: #{onet_forward.1}
  #allocation0 [shape = 'u32[]', space=smem, size = 0x4, offset = 0x4, fixed_abs, tag = 'smem constant byte address 0x4 - core index']
  #allocation1 [shape = 'u32[72,128]{1,0:T(1,128)}', space=vmem, size = 0x9000, scoped, tag = 'internal scratch']
  #allocation2 [shape = 'f32[1,1]{1,0:T(1,128)S(1)}', space=vmem, size = 0x200, scoped, tag = 'scoped memory for onet_forward.1']
  %s0 = inlined_call_operand.vmem [shape: f32[2,3,1024], index: 0, kind: input, shape index: {}]
  %s1 = inlined_call_operand.vmem [shape: f32[2,64,24], index: 1, kind: input, shape index: {}]
  %s2 = inlined_call_operand.vmem [shape: f32[64,3], index: 2, kind: input, shape index: {}]
  %s3 = inlined_call_operand.vmem [shape: bf16[5,64,64], index: 3, kind: input, shape index: {}]
  %s4 = inlined_call_operand.vmem [shape: bf16[5,64,64], index: 4, kind: input, shape index: {}]
  %s5 = inlined_call_operand.vmem [shape: f32[64,1], index: 5, kind: input, shape index: {}]
  %s6 = inlined_call_operand.<no memory space> [shape: f32[1,1], index: 6, kind: input, shape index: {}]
  %s7 = inlined_call_operand.vmem [shape: f32[2,1,1024], index: 7, kind: output, shape index: {}]
  %s8 = sld [smem:[#allocation0]]
  $region61: #{onet_forward.1} parent=0
    _
  %s10 = ssub.s32 1, %s8
  %s11 = scalar_select 0, %s10, %s8
  %v12 = vstv %s6
  %13 = vst [vmem:[#allocation2] sm:$0x1] %v12
  loop: start=0, step=1, limit=6
  $region2: #{onet_forward.1} parent=0 // loop_pre_header
    _
  $region3: #{onet_forward.1} parent=0 // loop_header
    %s15 = sphi 0, %s19
    %p16 = scmp.ge.s32.totalorder %s15, 6
    %s22 = sphi 0, %s34
    %s23 = sphi 0, %s30
    %s24 = sphi 0, %s22
    %s25 = sphi 0, %s23
    %s26 = sphi 0, %s24
    %s27 = sphi 0, %s25
    %s39 = sphi 0, %s41
    %s42 = sphi 0, %s39
    %s43 = sphi 0, %s42
    %s59 = sphi 0, %s43
    %s65 = sphi 0, %s67
    %s68 = sphi 0, %s65
    %s69 = sphi 0, %s68
    %s85 = sphi 0, %s69
    %s89 = sphi 0, %s89
    %s91 = sphi 0, %s89
    %s92 = sphi 0, %s91
    %s106 = sphi 0, %s92
    %s110 = sphi 0, %s110
    %s112 = sphi 0, %s110
    %s113 = sphi 0, %s112
    %s127 = sphi 0, %s113
    %s131 = sphi 0, %s131
    %s133 = sphi 0, %s131
    %s134 = sphi 0, %s133
    %s148 = sphi 0, %s134
    %s152 = sphi 0, %s152
    %s154 = sphi 0, %s152
    %s155 = sphi 0, %s154
    %s169 = sphi 0, %s155
    %s173 = sphi 0, %s173
    %s175 = sphi 0, %s173
    %s176 = sphi 0, %s175
    %s190 = sphi 0, %s176
    %s198 = sphi 0, %s200
    %s201 = sphi 0, %s198
    %s202 = sphi 0, %s201
    %s218 = sphi 0, %s202
  $region4: #{onet_forward.1} parent=0 // loop_header_branch
    %18 = sbr.rel (%p16) target = $region8
  $region5: #{onet_forward.1} parent=0 // loop_body
    %s20 = ssub.s32 %s15, 1
    %s21 = ssub.s32 %s15, 2
    %s28 = sadd.s32 1, %s23
    %p29 = scmp.ge.s32.totalorder %s28, 2
    %s30 = scalar_select %p29, 0, %s28
    %s31 = sadd.s32 1, %s22
    %s32 = scalar_select %p29, %s31, %s22
    %p33 = scmp.ge.s32.totalorder %s32, 2
    %s34 = scalar_select %p33, 0, %s32
    %s35 = ssub.s32 %s22, %s34
    %s36 = ssub.s32 %s23, %s30
    %s37 = sor.u32 %s35, %s36
    %p38 = scmp.eq.s32.totalorder %s37, 0
    %s40 = sadd.s32 %s39, 1
    %s41 = scalar_select %p38, %s39, %s40
    %p44 = pneg %p38
    %p45 = scmp.eq.s32.totalorder %s15, 3
    %p46 = por %p44, %p45
    %p47 = scmp.ne.s32.totalorder %s39, %s42
    %p48 = scmp.eq.s32.totalorder %s15, 0
    %p49 = por %p47, %p48
    %p50 = scmp.ne.s32.totalorder %s39, %s42
    %p51 = scmp.eq.s32.totalorder %s20, 3
    %p52 = por %p50, %p51
    %p53 = scmp.ne.s32.totalorder %s42, %s43
    %p54 = scmp.eq.s32.totalorder %s20, 0
    %p55 = por %p53, %p54
    %p56 = scmp.ne.s32.totalorder %s42, %s43
    %p57 = scmp.eq.s32.totalorder %s21, 3
    %p58 = por %p56, %p57
    %p60 = scmp.ne.s32.totalorder %s43, %s59
    %p61 = scmp.eq.s32.totalorder %s21, 0
    %p62 = por %p60, %p61
    %s63 = ssub.s32 %s22, %s34
    %p64 = scmp.eq.s32.totalorder %s63, 0
    %s66 = sadd.s32 %s65, 1
    %s67 = scalar_select %p64, %s65, %s66
    %p70 = pneg %p64
    %p71 = scmp.eq.s32.totalorder %s15, 3
    %p72 = por %p70, %p71
    %p73 = scmp.ne.s32.totalorder %s65, %s68
    %p74 = scmp.eq.s32.totalorder %s15, 0
    %p75 = por %p73, %p74
    %p76 = scmp.ne.s32.totalorder %s65, %s68
    %p77 = scmp.eq.s32.totalorder %s20, 3
    %p78 = por %p76, %p77
    %p79 = scmp.ne.s32.totalorder %s68, %s69
    %p80 = scmp.eq.s32.totalorder %s20, 0
    %p81 = por %p79, %p80
    %p82 = scmp.ne.s32.totalorder %s68, %s69
    %p83 = scmp.eq.s32.totalorder %s21, 3
    %p84 = por %p82, %p83
    %p86 = scmp.ne.s32.totalorder %s69, %s85
    %p87 = scmp.eq.s32.totalorder %s21, 0
    %p88 = por %p86, %p87
    %s90 = sadd.s32 %s89, 1
    %p93 = scmp.eq.s32.totalorder %s15, 3
    %p94 = scmp.ne.s32.totalorder %s89, %s91
    %p95 = scmp.eq.s32.totalorder %s15, 0
    %p96 = por %p94, %p95
    %p97 = scmp.ne.s32.totalorder %s89, %s91
    %p98 = scmp.eq.s32.totalorder %s20, 3
    %p99 = por %p97, %p98
    %p100 = scmp.ne.s32.totalorder %s91, %s92
    %p101 = scmp.eq.s32.totalorder %s20, 0
    %p102 = por %p100, %p101
    %p103 = scmp.ne.s32.totalorder %s91, %s92
    %p104 = scmp.eq.s32.totalorder %s21, 3
    %p105 = por %p103, %p104
    %p107 = scmp.ne.s32.totalorder %s92, %s106
    %p108 = scmp.eq.s32.totalorder %s21, 0
    %p109 = por %p107, %p108
    %s111 = sadd.s32 %s110, 1
    %p114 = scmp.eq.s32.totalorder %s15, 3
    %p115 = scmp.ne.s32.totalorder %s110, %s112
    %p116 = scmp.eq.s32.totalorder %s15, 0
    %p117 = por %p115, %p116
    %p118 = scmp.ne.s32.totalorder %s110, %s112
    %p119 = scmp.eq.s32.totalorder %s20, 3
    %p120 = por %p118, %p119
    %p121 = scmp.ne.s32.totalorder %s112, %s113
    %p122 = scmp.eq.s32.totalorder %s20, 0
    %p123 = por %p121, %p122
    %p124 = scmp.ne.s32.totalorder %s112, %s113
    %p125 = scmp.eq.s32.totalorder %s21, 3
    %p126 = por %p124, %p125
    %p128 = scmp.ne.s32.totalorder %s113, %s127
    %p129 = scmp.eq.s32.totalorder %s21, 0
    %p130 = por %p128, %p129
    %s132 = sadd.s32 %s131, 1
    %p135 = scmp.eq.s32.totalorder %s15, 3
    %p136 = scmp.ne.s32.totalorder %s131, %s133
    %p137 = scmp.eq.s32.totalorder %s15, 0
    %p138 = por %p136, %p137
    %p139 = scmp.ne.s32.totalorder %s131, %s133
    %p140 = scmp.eq.s32.totalorder %s20, 3
    %p141 = por %p139, %p140
    %p142 = scmp.ne.s32.totalorder %s133, %s134
    %p143 = scmp.eq.s32.totalorder %s20, 0
    %p144 = por %p142, %p143
    %p145 = scmp.ne.s32.totalorder %s133, %s134
    %p146 = scmp.eq.s32.totalorder %s21, 3
    %p147 = por %p145, %p146
    %p149 = scmp.ne.s32.totalorder %s134, %s148
    %p150 = scmp.eq.s32.totalorder %s21, 0
    %p151 = por %p149, %p150
    %s153 = sadd.s32 %s152, 1
    %p156 = scmp.eq.s32.totalorder %s15, 3
    %p157 = scmp.ne.s32.totalorder %s152, %s154
    %p158 = scmp.eq.s32.totalorder %s15, 0
    %p159 = por %p157, %p158
    %p160 = scmp.ne.s32.totalorder %s152, %s154
    %p161 = scmp.eq.s32.totalorder %s20, 3
    %p162 = por %p160, %p161
    %p163 = scmp.ne.s32.totalorder %s154, %s155
    %p164 = scmp.eq.s32.totalorder %s20, 0
    %p165 = por %p163, %p164
    %p166 = scmp.ne.s32.totalorder %s154, %s155
    %p167 = scmp.eq.s32.totalorder %s21, 3
    %p168 = por %p166, %p167
    %p170 = scmp.ne.s32.totalorder %s155, %s169
    %p171 = scmp.eq.s32.totalorder %s21, 0
    %p172 = por %p170, %p171
    %s174 = sadd.s32 %s173, 1
    %p177 = scmp.eq.s32.totalorder %s15, 3
    %p178 = scmp.ne.s32.totalorder %s173, %s175
    %p179 = scmp.eq.s32.totalorder %s15, 0
    %p180 = por %p178, %p179
    %p181 = scmp.ne.s32.totalorder %s173, %s175
    %p182 = scmp.eq.s32.totalorder %s20, 3
    %p183 = por %p181, %p182
    %p184 = scmp.ne.s32.totalorder %s175, %s176
    %p185 = scmp.eq.s32.totalorder %s20, 0
    %p186 = por %p184, %p185
    %p187 = scmp.ne.s32.totalorder %s175, %s176
    %p188 = scmp.eq.s32.totalorder %s21, 3
    %p189 = por %p187, %p188
    %p191 = scmp.ne.s32.totalorder %s176, %s190
    %p192 = scmp.eq.s32.totalorder %s21, 0
    %p193 = por %p191, %p192
    %s194 = ssub.s32 %s22, %s34
    %s195 = ssub.s32 %s23, %s30
    %s196 = sor.u32 %s194, %s195
    %p197 = scmp.eq.s32.totalorder %s196, 0
    %s199 = sadd.s32 %s198, 1
    %s200 = scalar_select %p197, %s198, %s199
    %p203 = pneg %p197
    %p204 = scmp.eq.s32.totalorder %s15, 3
    %p205 = por %p203, %p204
    %p206 = scmp.ne.s32.totalorder %s198, %s201
    %p207 = scmp.eq.s32.totalorder %s15, 0
    %p208 = por %p206, %p207
    %p209 = scmp.ne.s32.totalorder %s198, %s201
    %p210 = scmp.eq.s32.totalorder %s20, 3
    %p211 = por %p209, %p210
    %p212 = scmp.ne.s32.totalorder %s201, %s202
    %p213 = scmp.eq.s32.totalorder %s20, 0
    %p214 = por %p212, %p213
    %p215 = scmp.ne.s32.totalorder %s201, %s202
    %p216 = scmp.eq.s32.totalorder %s21, 3
    %p217 = por %p215, %p216
    %p219 = scmp.ne.s32.totalorder %s202, %s218
    %p220 = scmp.eq.s32.totalorder %s21, 0
    %p221 = por %p219, %p220
    %p222 = scmp.le.s32.totalorder 1, %s15
    %p223 = scmp.lt.s32.totalorder %s15, 5
    %p224 = pnand %p222, %p223
    %p225 = pneg %p224
    // Predicated region
    $region9: #{onet_forward.1} parent=5 // pred_check
      _
    $region10: #{onet_forward.1} parent=5 // pred_check_branch
      %227 = sbr.rel (%p224) target = $region12
    $region11: #{onet_forward.1} parent=5 // pred_region
      %s228 = ssub.s32 %s15, 1
      // Predicated region
      $region13: #{onet_forward.1} parent=11 // pred_check
        %p229 = pneg %p102
      $region14: #{onet_forward.1} parent=11 // pred_check_branch
        %231 = sbr.rel (%p229) target = $region16
      $region15: #{onet_forward.1} parent=11 // pred_region
        _
      $region16: #{onet_forward.1} parent=11 // pred_fallthru
        _
      // Predicated region
      $region17: #{onet_forward.1} parent=11 // pred_check
        %p232 = pneg %p123
      $region18: #{onet_forward.1} parent=11 // pred_check_branch
        %234 = sbr.rel (%p232) target = $region20
      $region19: #{onet_forward.1} parent=11 // pred_region
        _
      $region20: #{onet_forward.1} parent=11 // pred_fallthru
        _
      // Predicated region
      $region21: #{onet_forward.1} parent=11 // pred_check
        %p235 = pneg %p144
      $region22: #{onet_forward.1} parent=11 // pred_check_branch
        %237 = sbr.rel (%p235) target = $region24
      $region23: #{onet_forward.1} parent=11 // pred_region
        _
      $region24: #{onet_forward.1} parent=11 // pred_fallthru
        _
      // Predicated region
      $region25: #{onet_forward.1} parent=11 // pred_check
        %p238 = pneg %p165
      $region26: #{onet_forward.1} parent=11 // pred_check_branch
        %240 = sbr.rel (%p238) target = $region28
      $region27: #{onet_forward.1} parent=11 // pred_region
        _
      $region28: #{onet_forward.1} parent=11 // pred_fallthru
        _
      // Predicated region
      $region29: #{onet_forward.1} parent=11 // pred_check
        %p241 = pneg %p186
      $region30: #{onet_forward.1} parent=11 // pred_check_branch
        %243 = sbr.rel (%p241) target = $region32
      $region31: #{onet_forward.1} parent=11 // pred_region
        _
      $region32: #{onet_forward.1} parent=11 // pred_fallthru
        _
    $region12: #{onet_forward.1} parent=5 // pred_fallthru
      _
    %p244 = scmp.lt.s32.totalorder %s15, 4
    // Predicated region
    $region33: #{onet_forward.1} parent=5 // pred_check
      %p245 = pneg %p244
    $region34: #{onet_forward.1} parent=5 // pred_check_branch
      %247 = sbr.rel (%p245) target = $region36
    $region35: #{onet_forward.1} parent=5 // pred_region
      // Predicated region
      $region37: #{onet_forward.1} parent=35 // pred_check
        %p248 = pneg %p49
      $region38: #{onet_forward.1} parent=35 // pred_check_branch
        %250 = sbr.rel (%p248) target = $region40
      $region39: #{onet_forward.1} parent=35 // pred_region
        %s251 = smul.u32 4, %s23
        %p252 = scmp.lt.s32.totalorder %s22, 1
        %s253 = scalar_select %p252, %s22, 1
        %p254 = scmp.lt.s32.totalorder %s251, 7
        %s255 = scalar_select %p254, %s251, 7
        %s256 = smul.addr %s253, 8
        %s257 = sadd.s32 %s255, %s256
        %s258 = smul.addr %s257, 4
        %s259 = scalar_lea.vmem %s0, %s258
        %s260 = smul.u32 4, %s23
      $region40: #{onet_forward.1} parent=35 // pred_fallthru
        _
      // Predicated region
      $region41: #{onet_forward.1} parent=35 // pred_check
        %p261 = pneg %p75
      $region42: #{onet_forward.1} parent=35 // pred_check_branch
        %263 = sbr.rel (%p261) target = $region44
      $region43: #{onet_forward.1} parent=35 // pred_region
        %p264 = scmp.lt.s32.totalorder %s22, 1
        %s265 = scalar_select %p264, %s22, 1
        %s266 = smul.addr %s265, 8
        %s267 = smul.addr %s266, 8
        %s268 = scalar_lea.vmem %s1, %s267
      $region44: #{onet_forward.1} parent=35 // pred_fallthru
        _
    $region36: #{onet_forward.1} parent=5 // pred_fallthru
      _
    %p269 = scmp.le.s32.totalorder 1, %s15
    %p270 = scmp.lt.s32.totalorder %s15, 5
    %p271 = pnand %p269, %p270
    %p272 = pneg %p271
    // Predicated region
    $region45: #{onet_forward.1} parent=5 // pred_check
      _
    $region46: #{onet_forward.1} parent=5 // pred_check_branch
      %274 = sbr.rel (%p271) target = $region48
    $region47: #{onet_forward.1} parent=5 // pred_region
      %s275 = ssub.s32 %s15, 1
      %s276 = smul.u32 4, %s25
      %p277 = scmp.lt.s32.totalorder %s24, 1
      %s278 = scalar_select %p277, %s24, 1
      %p279 = scmp.lt.s32.totalorder %s276, 7
      %s280 = scalar_select %p279, %s276, 7
      %s281 = smul.addr %s278, 8
      %s282 = sadd.s32 %s280, %s281
      %s283 = smul.addr %s282, 4
      %s284 = scalar_lea.vmem %s0, %s283
      %p285 = pneg %p55
      %p286 = pneg %p52
      %p287 = scmp.lt.s32.totalorder %s24, 1
      %s288 = scalar_select %p287, %s24, 1
      %s289 = smul.addr %s288, 8
      %s290 = smul.addr %s289, 8
      %s291 = scalar_lea.vmem %s1, %s290
      %p292 = pneg %p81
      %p293 = pneg %p78
      %p294 = pneg %p102
      %p295 = pneg %p99
      %p296 = pneg %p123
      %p297 = pneg %p120
      %p298 = pneg %p144
      %p299 = pneg %p141
      %p300 = pneg %p165
      %p301 = pneg %p162
      %p302 = pneg %p186
      %p303 = pneg %p183
      %p304 = pneg %p214
      %p305 = pneg %p211
      %s306 = smul.u32 4, %s25
      %p307 = scmp.lt.s32.totalorder %s24, 1
      %s308 = scalar_select %p307, %s24, 1
      %p309 = scmp.lt.s32.totalorder %s306, 7
      %s310 = scalar_select %p309, %s306, 7
      %s311 = smul.addr %s308, 8
      %s312 = sadd.s32 %s310, %s311
      %s313 = scalar_lea.vmem %s7, %s312
      %s314 = smul.u32 4, %s25
      %p315 = scmp.lt.s32.totalorder %s24, 1
      %s316 = scalar_select %p315, %s24, 1
      %p317 = scmp.lt.s32.totalorder %s314, 7
      %s318 = scalar_select %p317, %s314, 7
      %s319 = smul.addr %s316, 8
      %s320 = sadd.s32 %s318, %s319
      %s321 = smul.addr %s320, 4
      %s322 = scalar_lea.vmem %s0, %s321
      %s323 = smul.u32 4, %s25
      %p324 = scmp.lt.s32.totalorder %s24, 1
      %s325 = scalar_select %p324, %s24, 1
      %s326 = smul.addr %s325, 8
      %s327 = smul.addr %s326, 8
      %s328 = scalar_lea.vmem %s1, %s327
      %s329 = smul.u32 4, %s25
      %p330 = scmp.lt.s32.totalorder %s24, 1
      %s331 = scalar_select %p330, %s24, 1
      %p332 = scmp.lt.s32.totalorder %s329, 7
      %s333 = scalar_select %p332, %s329, 7
      %s334 = smul.addr %s331, 8
      %s335 = sadd.s32 %s333, %s334
      %s336 = scalar_lea.vmem %s7, %s335
      %s337 = smul.u32 4, %s25
      %v339 = vld [vmem:[%s322] sm:$0x77]
      %v340 = vld [vmem:[%s322 + $0x8] sm:$0x77]
      %v341 = vld [vmem:[%s2] sm:$0xff]
      %v342 = vld [vmem:[%s2 + $0x8] sm:$0xff]
      %v343 = vld [vmem:[%s2 + $0x10] sm:$0xff]
      %v344 = vld [vmem:[%s2 + $0x18] sm:$0xff]
      %v345 = vld [vmem:[%s2 + $0x20] sm:$0xff]
      %v346 = vld [vmem:[%s2 + $0x28] sm:$0xff]
      %v347 = vld [vmem:[%s2 + $0x30] sm:$0xff]
      %v348 = vld [vmem:[%s2 + $0x38] sm:$0xff]
      %350 = vset.pattern.permute.xlu0 0
      %351 = vperm.xlu0 %350, %v341
      %v352 = vpop.permute.xlu0 %351
      %355 = vset.pattern.permute.xlu0 0
      %356 = vperm.xlu0 %355, %v342
      %v357 = vpop.permute.xlu0 %356
      %360 = vset.pattern.permute.xlu0 0
      %361 = vperm.xlu0 %360, %v343
      %v362 = vpop.permute.xlu0 %361
      %365 = vset.pattern.permute.xlu0 0
      %366 = vperm.xlu0 %365, %v344
      %v367 = vpop.permute.xlu0 %366
      %370 = vset.pattern.permute.xlu0 0
      %371 = vperm.xlu0 %370, %v345
      %v372 = vpop.permute.xlu0 %371
      %375 = vset.pattern.permute.xlu0 0
      %376 = vperm.xlu0 %375, %v346
      %v377 = vpop.permute.xlu0 %376
      %380 = vset.pattern.permute.xlu0 0
      %381 = vperm.xlu0 %380, %v347
      %v382 = vpop.permute.xlu0 %381
      %385 = vset.pattern.permute.xlu0 0
      %386 = vperm.xlu0 %385, %v348
      %v387 = vpop.permute.xlu0 %386
      %v391 = vperm.slane %v339, 0
      %v392 = vperm.slane %v339, 4
      %v393 = vperm.slane %v340, 0
      %v394 = vperm.slane %v340, 4
      %v399 = vperm.slane %v391, 0
      %v400 = vperm.slane %v392, 0
      %v401 = vperm.slane %v393, 0
      %v402 = vperm.slane %v394, 0
      %v403 = vmul.f32 %v352, %v399
      %v404 = vmul.f32 %v352, %v400
      %v405 = vmul.f32 %v352, %v401
      %v406 = vmul.f32 %v352, %v402
      %v407 = vmul.f32 %v357, %v399
      %v408 = vmul.f32 %v357, %v400
      %v409 = vmul.f32 %v357, %v401
      %v410 = vmul.f32 %v357, %v402
      %v411 = vmul.f32 %v362, %v399
      %v412 = vmul.f32 %v362, %v400
      %v413 = vmul.f32 %v362, %v401
      %v414 = vmul.f32 %v362, %v402
      %v415 = vmul.f32 %v367, %v399
      %v416 = vmul.f32 %v367, %v400
      %v417 = vmul.f32 %v367, %v401
      %v418 = vmul.f32 %v367, %v402
      %v419 = vmul.f32 %v372, %v399
      %v420 = vmul.f32 %v372, %v400
      %v421 = vmul.f32 %v372, %v401
      %v422 = vmul.f32 %v372, %v402
      %v423 = vmul.f32 %v377, %v399
      %v424 = vmul.f32 %v377, %v400
      %v425 = vmul.f32 %v377, %v401
      %v426 = vmul.f32 %v377, %v402
      %v427 = vmul.f32 %v382, %v399
      %v428 = vmul.f32 %v382, %v400
      %v429 = vmul.f32 %v382, %v401
      %v430 = vmul.f32 %v382, %v402
      %v431 = vmul.f32 %v387, %v399
      %v432 = vmul.f32 %v387, %v400
      %v433 = vmul.f32 %v387, %v401
      %v434 = vmul.f32 %v387, %v402
      %435 = vset.pattern.permute.xlu0 1
      %436 = vperm.xlu0 %435, %v341
      %v437 = vpop.permute.xlu0 %436
      %439 = vset.pattern.permute.xlu0 1
      %440 = vperm.xlu0 %439, %v342
      %v441 = vpop.permute.xlu0 %440
      %443 = vset.pattern.permute.xlu0 1
      %444 = vperm.xlu0 %443, %v343
      %v445 = vpop.permute.xlu0 %444
      %447 = vset.pattern.permute.xlu0 1
      %448 = vperm.xlu0 %447, %v344
      %v449 = vpop.permute.xlu0 %448
      %451 = vset.pattern.permute.xlu0 1
      %452 = vperm.xlu0 %451, %v345
      %v453 = vpop.permute.xlu0 %452
      %455 = vset.pattern.permute.xlu0 1
      %456 = vperm.xlu0 %455, %v346
      %v457 = vpop.permute.xlu0 %456
      %459 = vset.pattern.permute.xlu0 1
      %460 = vperm.xlu0 %459, %v347
      %v461 = vpop.permute.xlu0 %460
      %463 = vset.pattern.permute.xlu0 1
      %464 = vperm.xlu0 %463, %v348
      %v465 = vpop.permute.xlu0 %464
      %v467 = vperm.slane %v339, 1
      %v468 = vperm.slane %v339, 5
      %v469 = vperm.slane %v340, 1
      %v470 = vperm.slane %v340, 5
      %v475 = vperm.slane %v467, 1
      %v476 = vperm.slane %v468, 1
      %v477 = vperm.slane %v469, 1
      %v478 = vperm.slane %v470, 1
      %v479 = vmul.f32 %v437, %v475
      %v480 = vmul.f32 %v437, %v476
      %v481 = vmul.f32 %v437, %v477
      %v482 = vmul.f32 %v437, %v478
      %v483 = vmul.f32 %v441, %v475
      %v484 = vmul.f32 %v441, %v476
      %v485 = vmul.f32 %v441, %v477
      %v486 = vmul.f32 %v441, %v478
      %v487 = vmul.f32 %v445, %v475
      %v488 = vmul.f32 %v445, %v476
      %v489 = vmul.f32 %v445, %v477
      %v490 = vmul.f32 %v445, %v478
      %v491 = vmul.f32 %v449, %v475
      %v492 = vmul.f32 %v449, %v476
      %v493 = vmul.f32 %v449, %v477
      %v494 = vmul.f32 %v449, %v478
      %v495 = vmul.f32 %v453, %v475
      %v496 = vmul.f32 %v453, %v476
      %v497 = vmul.f32 %v453, %v477
      %v498 = vmul.f32 %v453, %v478
      %v499 = vmul.f32 %v457, %v475
      %v500 = vmul.f32 %v457, %v476
      %v501 = vmul.f32 %v457, %v477
      %v502 = vmul.f32 %v457, %v478
      %v503 = vmul.f32 %v461, %v475
      %v504 = vmul.f32 %v461, %v476
      %v505 = vmul.f32 %v461, %v477
      %v506 = vmul.f32 %v461, %v478
      %v507 = vmul.f32 %v465, %v475
      %v508 = vmul.f32 %v465, %v476
      %v509 = vmul.f32 %v465, %v477
      %v510 = vmul.f32 %v465, %v478
      %v511 = vadd.f32 %v403, %v479
      %v512 = vadd.f32 %v404, %v480
      %v513 = vadd.f32 %v405, %v481
      %v514 = vadd.f32 %v406, %v482
      %v515 = vadd.f32 %v407, %v483
      %v516 = vadd.f32 %v408, %v484
      %v517 = vadd.f32 %v409, %v485
      %v518 = vadd.f32 %v410, %v486
      %v519 = vadd.f32 %v411, %v487
      %v520 = vadd.f32 %v412, %v488
      %v521 = vadd.f32 %v413, %v489
      %v522 = vadd.f32 %v414, %v490
      %v523 = vadd.f32 %v415, %v491
      %v524 = vadd.f32 %v416, %v492
      %v525 = vadd.f32 %v417, %v493
      %v526 = vadd.f32 %v418, %v494
      %v527 = vadd.f32 %v419, %v495
      %v528 = vadd.f32 %v420, %v496
      %v529 = vadd.f32 %v421, %v497
      %v530 = vadd.f32 %v422, %v498
      %v531 = vadd.f32 %v423, %v499
      %v532 = vadd.f32 %v424, %v500
      %v533 = vadd.f32 %v425, %v501
      %v534 = vadd.f32 %v426, %v502
      %v535 = vadd.f32 %v427, %v503
      %v536 = vadd.f32 %v428, %v504
      %v537 = vadd.f32 %v429, %v505
      %v538 = vadd.f32 %v430, %v506
      %v539 = vadd.f32 %v431, %v507
      %v540 = vadd.f32 %v432, %v508
      %v541 = vadd.f32 %v433, %v509
      %v542 = vadd.f32 %v434, %v510
      %543 = vset.pattern.permute.xlu0 2
      %544 = vperm.xlu0 %543, %v341
      %v545 = vpop.permute.xlu0 %544
      %547 = vset.pattern.permute.xlu0 2
      %548 = vperm.xlu0 %547, %v342
      %v549 = vpop.permute.xlu0 %548
      %551 = vset.pattern.permute.xlu0 2
      %552 = vperm.xlu0 %551, %v343
      %v553 = vpop.permute.xlu0 %552
      %555 = vset.pattern.permute.xlu0 2
      %556 = vperm.xlu0 %555, %v344
      %v557 = vpop.permute.xlu0 %556
      %559 = vset.pattern.permute.xlu0 2
      %560 = vperm.xlu0 %559, %v345
      %v561 = vpop.permute.xlu0 %560
      %563 = vset.pattern.permute.xlu0 2
      %564 = vperm.xlu0 %563, %v346
      %v565 = vpop.permute.xlu0 %564
      %567 = vset.pattern.permute.xlu0 2
      %568 = vperm.xlu0 %567, %v347
      %v569 = vpop.permute.xlu0 %568
      %571 = vset.pattern.permute.xlu0 2
      %572 = vperm.xlu0 %571, %v348
      %v573 = vpop.permute.xlu0 %572
      %v575 = vperm.slane %v339, 2
      %v576 = vperm.slane %v339, 6
      %v577 = vperm.slane %v340, 2
      %v578 = vperm.slane %v340, 6
      %v583 = vperm.slane %v575, 2
      %v584 = vperm.slane %v576, 2
      %v585 = vperm.slane %v577, 2
      %v586 = vperm.slane %v578, 2
      %v587 = vmul.f32 %v545, %v583
      %v588 = vmul.f32 %v545, %v584
      %v589 = vmul.f32 %v545, %v585
      %v590 = vmul.f32 %v545, %v586
      %v591 = vmul.f32 %v549, %v583
      %v592 = vmul.f32 %v549, %v584
      %v593 = vmul.f32 %v549, %v585
      %v594 = vmul.f32 %v549, %v586
      %v595 = vmul.f32 %v553, %v583
      %v596 = vmul.f32 %v553, %v584
      %v597 = vmul.f32 %v553, %v585
      %v598 = vmul.f32 %v553, %v586
      %v599 = vmul.f32 %v557, %v583
      %v600 = vmul.f32 %v557, %v584
      %v601 = vmul.f32 %v557, %v585
      %v602 = vmul.f32 %v557, %v586
      %v603 = vmul.f32 %v561, %v583
      %v604 = vmul.f32 %v561, %v584
      %v605 = vmul.f32 %v561, %v585
      %v606 = vmul.f32 %v561, %v586
      %v607 = vmul.f32 %v565, %v583
      %v608 = vmul.f32 %v565, %v584
      %v609 = vmul.f32 %v565, %v585
      %v610 = vmul.f32 %v565, %v586
      %v611 = vmul.f32 %v569, %v583
      %v612 = vmul.f32 %v569, %v584
      %v613 = vmul.f32 %v569, %v585
      %v614 = vmul.f32 %v569, %v586
      %v615 = vmul.f32 %v573, %v583
      %v616 = vmul.f32 %v573, %v584
      %v617 = vmul.f32 %v573, %v585
      %v618 = vmul.f32 %v573, %v586
      %v619 = vadd.f32 %v511, %v587
      %v620 = vadd.f32 %v512, %v588
      %v621 = vadd.f32 %v513, %v589
      %v622 = vadd.f32 %v514, %v590
      %v623 = vadd.f32 %v515, %v591
      %v624 = vadd.f32 %v516, %v592
      %v625 = vadd.f32 %v517, %v593
      %v626 = vadd.f32 %v518, %v594
      %v627 = vadd.f32 %v519, %v595
      %v628 = vadd.f32 %v520, %v596
      %v629 = vadd.f32 %v521, %v597
      %v630 = vadd.f32 %v522, %v598
      %v631 = vadd.f32 %v523, %v599
      %v632 = vadd.f32 %v524, %v600
      %v633 = vadd.f32 %v525, %v601
      %v634 = vadd.f32 %v526, %v602
      %v635 = vadd.f32 %v527, %v603
      %v636 = vadd.f32 %v528, %v604
      %v637 = vadd.f32 %v529, %v605
      %v638 = vadd.f32 %v530, %v606
      %v639 = vadd.f32 %v531, %v607
      %v640 = vadd.f32 %v532, %v608
      %v641 = vadd.f32 %v533, %v609
      %v642 = vadd.f32 %v534, %v610
      %v643 = vadd.f32 %v535, %v611
      %v644 = vadd.f32 %v536, %v612
      %v645 = vadd.f32 %v537, %v613
      %v646 = vadd.f32 %v538, %v614
      %v647 = vadd.f32 %v539, %v615
      %v648 = vadd.f32 %v540, %v616
      %v649 = vadd.f32 %v541, %v617
      %v650 = vadd.f32 %v542, %v618
      %v651 = vld [vmem:[%s328] sm:$0xff]
      %v652 = vld [vmem:[%s328 + $0x8] sm:$0xff]
      %v653 = vld [vmem:[%s328 + $0x10] sm:$0xff]
      %v654 = vld [vmem:[%s328 + $0x18] sm:$0xff]
      %v655 = vld [vmem:[%s328 + $0x20] sm:$0xff]
      %v656 = vld [vmem:[%s328 + $0x28] sm:$0xff]
      %v657 = vld [vmem:[%s328 + $0x30] sm:$0xff]
      %v658 = vld [vmem:[%s328 + $0x38] sm:$0xff]
      %660 = vset.pattern.permute.xlu0 0
      %661 = vperm.xlu0 %660, %v651
      %v662 = vpop.permute.xlu0 %661
      %665 = vset.pattern.permute.xlu0 0
      %666 = vperm.xlu0 %665, %v652
      %v667 = vpop.permute.xlu0 %666
      %670 = vset.pattern.permute.xlu0 0
      %671 = vperm.xlu0 %670, %v653
      %v672 = vpop.permute.xlu0 %671
      %675 = vset.pattern.permute.xlu0 0
      %676 = vperm.xlu0 %675, %v654
      %v677 = vpop.permute.xlu0 %676
      %680 = vset.pattern.permute.xlu0 0
      %681 = vperm.xlu0 %680, %v655
      %v682 = vpop.permute.xlu0 %681
      %685 = vset.pattern.permute.xlu0 0
      %686 = vperm.xlu0 %685, %v656
      %v687 = vpop.permute.xlu0 %686
      %690 = vset.pattern.permute.xlu0 0
      %691 = vperm.xlu0 %690, %v657
      %v692 = vpop.permute.xlu0 %691
      %695 = vset.pattern.permute.xlu0 0
      %696 = vperm.xlu0 %695, %v658
      %v697 = vpop.permute.xlu0 %696
      %v699 = vmul.f32 %v662, %v619
      %v700 = vmul.f32 %v662, %v620
      %v701 = vmul.f32 %v662, %v621
      %v702 = vmul.f32 %v662, %v622
      %v703 = vmul.f32 %v667, %v623
      %v704 = vmul.f32 %v667, %v624
      %v705 = vmul.f32 %v667, %v625
      %v706 = vmul.f32 %v667, %v626
      %v707 = vmul.f32 %v672, %v627
      %v708 = vmul.f32 %v672, %v628
      %v709 = vmul.f32 %v672, %v629
      %v710 = vmul.f32 %v672, %v630
      %v711 = vmul.f32 %v677, %v631
      %v712 = vmul.f32 %v677, %v632
      %v713 = vmul.f32 %v677, %v633
      %v714 = vmul.f32 %v677, %v634
      %v715 = vmul.f32 %v682, %v635
      %v716 = vmul.f32 %v682, %v636
      %v717 = vmul.f32 %v682, %v637
      %v718 = vmul.f32 %v682, %v638
      %v719 = vmul.f32 %v687, %v639
      %v720 = vmul.f32 %v687, %v640
      %v721 = vmul.f32 %v687, %v641
      %v722 = vmul.f32 %v687, %v642
      %v723 = vmul.f32 %v692, %v643
      %v724 = vmul.f32 %v692, %v644
      %v725 = vmul.f32 %v692, %v645
      %v726 = vmul.f32 %v692, %v646
      %v727 = vmul.f32 %v697, %v647
      %v728 = vmul.f32 %v697, %v648
      %v729 = vmul.f32 %v697, %v649
      %v730 = vmul.f32 %v697, %v650
      %731 = vset.pattern.permute.xlu0 12
      %732 = vperm.xlu0 %731, %v651
      %v733 = vpop.permute.xlu0 %732
      %735 = vset.pattern.permute.xlu0 12
      %736 = vperm.xlu0 %735, %v652
      %v737 = vpop.permute.xlu0 %736
      %739 = vset.pattern.permute.xlu0 12
      %740 = vperm.xlu0 %739, %v653
      %v741 = vpop.permute.xlu0 %740
      %743 = vset.pattern.permute.xlu0 12
      %744 = vperm.xlu0 %743, %v654
      %v745 = vpop.permute.xlu0 %744
      %747 = vset.pattern.permute.xlu0 12
      %748 = vperm.xlu0 %747, %v655
      %v749 = vpop.permute.xlu0 %748
      %751 = vset.pattern.permute.xlu0 12
      %752 = vperm.xlu0 %751, %v656
      %v753 = vpop.permute.xlu0 %752
      %755 = vset.pattern.permute.xlu0 12
      %756 = vperm.xlu0 %755, %v657
      %v757 = vpop.permute.xlu0 %756
      %759 = vset.pattern.permute.xlu0 12
      %760 = vperm.xlu0 %759, %v658
      %v761 = vpop.permute.xlu0 %760
      %v763 = vadd.f32 %v699, %v733
      %v764 = vadd.f32 %v700, %v733
      %v765 = vadd.f32 %v701, %v733
      %v766 = vadd.f32 %v702, %v733
      %v767 = vadd.f32 %v703, %v737
      %v768 = vadd.f32 %v704, %v737
      %v769 = vadd.f32 %v705, %v737
      %v770 = vadd.f32 %v706, %v737
      %v771 = vadd.f32 %v707, %v741
      %v772 = vadd.f32 %v708, %v741
      %v773 = vadd.f32 %v709, %v741
      %v774 = vadd.f32 %v710, %v741
      %v775 = vadd.f32 %v711, %v745
      %v776 = vadd.f32 %v712, %v745
      %v777 = vadd.f32 %v713, %v745
      %v778 = vadd.f32 %v714, %v745
      %v779 = vadd.f32 %v715, %v749
      %v780 = vadd.f32 %v716, %v749
      %v781 = vadd.f32 %v717, %v749
      %v782 = vadd.f32 %v718, %v749
      %v783 = vadd.f32 %v719, %v753
      %v784 = vadd.f32 %v720, %v753
      %v785 = vadd.f32 %v721, %v753
      %v786 = vadd.f32 %v722, %v753
      %v787 = vadd.f32 %v723, %v757
      %v788 = vadd.f32 %v724, %v757
      %v789 = vadd.f32 %v725, %v757
      %v790 = vadd.f32 %v726, %v757
      %v791 = vadd.f32 %v727, %v761
      %v792 = vadd.f32 %v728, %v761
      %v793 = vadd.f32 %v729, %v761
      %v794 = vadd.f32 %v730, %v761
      %v795 = vmax.f32 %v763, 0.0
      %v796 = vmax.f32 %v764, 0.0
      %v797 = vmax.f32 %v765, 0.0
      %v798 = vmax.f32 %v766, 0.0
      %v799 = vmax.f32 %v767, 0.0
      %v800 = vmax.f32 %v768, 0.0
      %v801 = vmax.f32 %v769, 0.0
      %v802 = vmax.f32 %v770, 0.0
      %v803 = vmax.f32 %v771, 0.0
      %v804 = vmax.f32 %v772, 0.0
      %v805 = vmax.f32 %v773, 0.0
      %v806 = vmax.f32 %v774, 0.0
      %v807 = vmax.f32 %v775, 0.0
      %v808 = vmax.f32 %v776, 0.0
      %v809 = vmax.f32 %v777, 0.0
      %v810 = vmax.f32 %v778, 0.0
      %v811 = vmax.f32 %v779, 0.0
      %v812 = vmax.f32 %v780, 0.0
      %v813 = vmax.f32 %v781, 0.0
      %v814 = vmax.f32 %v782, 0.0
      %v815 = vmax.f32 %v783, 0.0
      %v816 = vmax.f32 %v784, 0.0
      %v817 = vmax.f32 %v785, 0.0
      %v818 = vmax.f32 %v786, 0.0
      %v819 = vmax.f32 %v787, 0.0
      %v820 = vmax.f32 %v788, 0.0
      %v821 = vmax.f32 %v789, 0.0
      %v822 = vmax.f32 %v790, 0.0
      %v823 = vmax.f32 %v791, 0.0
      %v824 = vmax.f32 %v792, 0.0
      %v825 = vmax.f32 %v793, 0.0
      %v826 = vmax.f32 %v794, 0.0
      %v827 = vld [vmem:[%s3] sm:$0xf]
      %v828 = vld [vmem:[%s3 + $0x4] sm:$0xf]
      %v829 = vld [vmem:[%s3 + $0x8] sm:$0xf]
      %v830 = vld [vmem:[%s3 + $0xc] sm:$0xf]
      %v831 = vld [vmem:[%s3 + $0x10] sm:$0xf]
      %v832 = vld [vmem:[%s3 + $0x14] sm:$0xf]
      %v833 = vld [vmem:[%s3 + $0x18] sm:$0xf]
      %v834 = vld [vmem:[%s3 + $0x1c] sm:$0xf]
      %v835 = vpack.c.bf16 %v799, %v795
      %v836 = vpack.c.bf16 %v800, %v796
      %v837 = vpack.c.bf16 %v801, %v797
      %v838 = vpack.c.bf16 %v802, %v798
      %v839 = vpack.c.bf16 %v807, %v803
      %v840 = vpack.c.bf16 %v808, %v804
      %v841 = vpack.c.bf16 %v809, %v805
      %v842 = vpack.c.bf16 %v810, %v806
      %v843 = vpack.c.bf16 %v815, %v811
      %v844 = vpack.c.bf16 %v816, %v812
      %v845 = vpack.c.bf16 %v817, %v813
      %v846 = vpack.c.bf16 %v818, %v814
      %v847 = vpack.c.bf16 %v823, %v819
      %v848 = vpack.c.bf16 %v824, %v820
      %v849 = vpack.c.bf16 %v825, %v821
      %v850 = vpack.c.bf16 %v826, %v822
      %v859 = vunpack.c.l.b16 %v827
      %v860 = vunpack.c.l.b16 %v828
      %v861 = vunpack.c.l.b16 %v829
      %v862 = vunpack.c.l.b16 %v830
      %v863 = vunpack.c.l.b16 %v831
      %v864 = vunpack.c.l.b16 %v832
      %v865 = vunpack.c.l.b16 %v833
      %v866 = vunpack.c.l.b16 %v834
      %v867 = vpack.c.b16 %v860, %v859
      %v868 = vpack.c.b16 %v862, %v861
      %v869 = vpack.c.b16 %v864, %v863
      %v870 = vpack.c.b16 %v866, %v865
      %vm871 = vcmask 523264
      %v873 = vsel %vm871, %v867, 0
      %v876 = vsel %vm871, %v868, 0
      %v879 = vsel %vm871, %v869, 0
      %v882 = vsel %vm871, %v870, 0
      %884 = vmatpush.bf16.msra.mxu0 0
      %885 = vmatpush.bf16.msra.mxu0 0
      %886 = vmatpush.bf16.msra.mxu0 0
      %887 = vmatpush.bf16.msra.mxu0 0
      %888 = vmatpush.bf16.msra.mxu0 %v847
      %889 = vmatpush.bf16.msra.mxu0 %v843
      %890 = vmatpush.bf16.msra.mxu0 %v839
      %891 = vmatpush.bf16.msra.mxu0 %v835
      %892 = vmatmul.bf16.gmra.mxu0 %v873
      %v893 = vpop.f32.mrf.mxu0
      %v894 = vadd.f32 0.0, %v893
      %v895 = vpop.f32.mrf.mxu0
      %v896 = vadd.f32 0.0, %v895
      %897 = vmatmul.bf16.gmra.mxu0 %v876
      %v898 = vpop.f32.mrf.mxu0
      %v899 = vadd.f32 0.0, %v898
      %v900 = vpop.f32.mrf.mxu0
      %v901 = vadd.f32 0.0, %v900
      %902 = vmatmul.bf16.gmra.mxu0 %v879
      %v903 = vpop.f32.mrf.mxu0
      %v904 = vadd.f32 0.0, %v903
      %v905 = vpop.f32.mrf.mxu0
      %v906 = vadd.f32 0.0, %v905
      %907 = vmatmul.bf16.gmra.mxu0 %v882
      %v908 = vpop.f32.mrf.mxu0
      %v909 = vadd.f32 0.0, %v908
      %v910 = vpop.f32.mrf.mxu0
      %v911 = vadd.f32 0.0, %v910
      %912 = vdwg.mxu0
      %913 = vmatpush.bf16.msra.mxu0 0
      %914 = vmatpush.bf16.msra.mxu0 0
      %915 = vmatpush.bf16.msra.mxu0 0
      %916 = vmatpush.bf16.msra.mxu0 0
      %917 = vmatpush.bf16.msra.mxu0 %v848
      %918 = vmatpush.bf16.msra.mxu0 %v844
      %919 = vmatpush.bf16.msra.mxu0 %v840
      %920 = vmatpush.bf16.msra.mxu0 %v836
      %921 = vmatmul.bf16.gmra.mxu0 %v873
      %v922 = vpop.f32.mrf.mxu0
      %v923 = vadd.f32 0.0, %v922
      %v924 = vpop.f32.mrf.mxu0
      %v925 = vadd.f32 0.0, %v924
      %926 = vmatmul.bf16.gmra.mxu0 %v876
      %v927 = vpop.f32.mrf.mxu0
      %v928 = vadd.f32 0.0, %v927
      %v929 = vpop.f32.mrf.mxu0
      %v930 = vadd.f32 0.0, %v929
      %931 = vmatmul.bf16.gmra.mxu0 %v879
      %v932 = vpop.f32.mrf.mxu0
      %v933 = vadd.f32 0.0, %v932
      %v934 = vpop.f32.mrf.mxu0
      %v935 = vadd.f32 0.0, %v934
      %936 = vmatmul.bf16.gmra.mxu0 %v882
      %v937 = vpop.f32.mrf.mxu0
      %v938 = vadd.f32 0.0, %v937
      %v939 = vpop.f32.mrf.mxu0
      %v940 = vadd.f32 0.0, %v939
      %941 = vdwg.mxu0
      %942 = vmatpush.bf16.msra.mxu0 0
      %943 = vmatpush.bf16.msra.mxu0 0
      %944 = vmatpush.bf16.msra.mxu0 0
      %945 = vmatpush.bf16.msra.mxu0 0
      %946 = vmatpush.bf16.msra.mxu0 %v849
      %947 = vmatpush.bf16.msra.mxu0 %v845
      %948 = vmatpush.bf16.msra.mxu0 %v841
      %949 = vmatpush.bf16.msra.mxu0 %v837
      %950 = vmatmul.bf16.gmra.mxu0 %v873
      %v951 = vpop.f32.mrf.mxu0
      %v952 = vadd.f32 0.0, %v951
      %v953 = vpop.f32.mrf.mxu0
      %v954 = vadd.f32 0.0, %v953
      %955 = vmatmul.bf16.gmra.mxu0 %v876
      %v956 = vpop.f32.mrf.mxu0
      %v957 = vadd.f32 0.0, %v956
      %v958 = vpop.f32.mrf.mxu0
      %v959 = vadd.f32 0.0, %v958
      %960 = vmatmul.bf16.gmra.mxu0 %v879
      %v961 = vpop.f32.mrf.mxu0
      %v962 = vadd.f32 0.0, %v961
      %v963 = vpop.f32.mrf.mxu0
      %v964 = vadd.f32 0.0, %v963
      %965 = vmatmul.bf16.gmra.mxu0 %v882
      %v966 = vpop.f32.mrf.mxu0
      %v967 = vadd.f32 0.0, %v966
      %v968 = vpop.f32.mrf.mxu0
      %v969 = vadd.f32 0.0, %v968
      %970 = vdwg.mxu0
      %971 = vmatpush.bf16.msra.mxu0 0
      %972 = vmatpush.bf16.msra.mxu0 0
      %973 = vmatpush.bf16.msra.mxu0 0
      %974 = vmatpush.bf16.msra.mxu0 0
      %975 = vmatpush.bf16.msra.mxu0 %v850
      %976 = vmatpush.bf16.msra.mxu0 %v846
      %977 = vmatpush.bf16.msra.mxu0 %v842
      %978 = vmatpush.bf16.msra.mxu0 %v838
      %979 = vmatmul.bf16.gmra.mxu0 %v873
      %v980 = vpop.f32.mrf.mxu0
      %v981 = vadd.f32 0.0, %v980
      %v982 = vpop.f32.mrf.mxu0
      %v983 = vadd.f32 0.0, %v982
      %984 = vmatmul.bf16.gmra.mxu0 %v876
      %v985 = vpop.f32.mrf.mxu0
      %v986 = vadd.f32 0.0, %v985
      %v987 = vpop.f32.mrf.mxu0
      %v988 = vadd.f32 0.0, %v987
      %989 = vmatmul.bf16.gmra.mxu0 %v879
      %v990 = vpop.f32.mrf.mxu0
      %v991 = vadd.f32 0.0, %v990
      %v992 = vpop.f32.mrf.mxu0
      %v993 = vadd.f32 0.0, %v992
      %994 = vmatmul.bf16.gmra.mxu0 %v882
      %v995 = vpop.f32.mrf.mxu0
      %v996 = vadd.f32 0.0, %v995
      %v997 = vpop.f32.mrf.mxu0
      %v998 = vadd.f32 0.0, %v997
      %999 = vdwg.mxu0
      %1000 = vset.pattern.permute.xlu0 1
      %1001 = vperm.xlu0 %1000, %v651
      %v1002 = vpop.permute.xlu0 %1001
      %1004 = vset.pattern.permute.xlu0 1
      %1005 = vperm.xlu0 %1004, %v652
      %v1006 = vpop.permute.xlu0 %1005
      %1008 = vset.pattern.permute.xlu0 1
      %1009 = vperm.xlu0 %1008, %v653
      %v1010 = vpop.permute.xlu0 %1009
      %1012 = vset.pattern.permute.xlu0 1
      %1013 = vperm.xlu0 %1012, %v654
      %v1014 = vpop.permute.xlu0 %1013
      %1016 = vset.pattern.permute.xlu0 1
      %1017 = vperm.xlu0 %1016, %v655
      %v1018 = vpop.permute.xlu0 %1017
      %1020 = vset.pattern.permute.xlu0 1
      %1021 = vperm.xlu0 %1020, %v656
      %v1022 = vpop.permute.xlu0 %1021
      %1024 = vset.pattern.permute.xlu0 1
      %1025 = vperm.xlu0 %1024, %v657
      %v1026 = vpop.permute.xlu0 %1025
      %1028 = vset.pattern.permute.xlu0 1
      %1029 = vperm.xlu0 %1028, %v658
      %v1030 = vpop.permute.xlu0 %1029
      %v1032 = vmul.f32 %v1002, %v894
      %v1033 = vmul.f32 %v1002, %v923
      %v1034 = vmul.f32 %v1002, %v952
      %v1035 = vmul.f32 %v1002, %v981
      %v1036 = vmul.f32 %v1006, %v896
      %v1037 = vmul.f32 %v1006, %v925
      %v1038 = vmul.f32 %v1006, %v954
      %v1039 = vmul.f32 %v1006, %v983
      %v1040 = vmul.f32 %v1010, %v899
      %v1041 = vmul.f32 %v1010, %v928
      %v1042 = vmul.f32 %v1010, %v957
      %v1043 = vmul.f32 %v1010, %v986
      %v1044 = vmul.f32 %v1014, %v901
      %v1045 = vmul.f32 %v1014, %v930
      %v1046 = vmul.f32 %v1014, %v959
      %v1047 = vmul.f32 %v1014, %v988
      %v1048 = vmul.f32 %v1018, %v904
      %v1049 = vmul.f32 %v1018, %v933
      %v1050 = vmul.f32 %v1018, %v962
      %v1051 = vmul.f32 %v1018, %v991
      %v1052 = vmul.f32 %v1022, %v906
      %v1053 = vmul.f32 %v1022, %v935
      %v1054 = vmul.f32 %v1022, %v964
      %v1055 = vmul.f32 %v1022, %v993
      %v1056 = vmul.f32 %v1026, %v909
      %v1057 = vmul.f32 %v1026, %v938
      %v1058 = vmul.f32 %v1026, %v967
      %v1059 = vmul.f32 %v1026, %v996
      %v1060 = vmul.f32 %v1030, %v911
      %v1061 = vmul.f32 %v1030, %v940
      %v1062 = vmul.f32 %v1030, %v969
      %v1063 = vmul.f32 %v1030, %v998
      %1064 = vset.pattern.permute.xlu0 13
      %1065 = vperm.xlu0 %1064, %v651
      %v1066 = vpop.permute.xlu0 %1065
      %1068 = vset.pattern.permute.xlu0 13
      %1069 = vperm.xlu0 %1068, %v652
      %v1070 = vpop.permute.xlu0 %1069
      %1072 = vset.pattern.permute.xlu0 13
      %1073 = vperm.xlu0 %1072, %v653
      %v1074 = vpop.permute.xlu0 %1073
      %1076 = vset.pattern.permute.xlu0 13
      %1077 = vperm.xlu0 %1076, %v654
      %v1078 = vpop.permute.xlu0 %1077
      %1080 = vset.pattern.permute.xlu0 13
      %1081 = vperm.xlu0 %1080, %v655
      %v1082 = vpop.permute.xlu0 %1081
      %1084 = vset.pattern.permute.xlu0 13
      %1085 = vperm.xlu0 %1084, %v656
      %v1086 = vpop.permute.xlu0 %1085
      %1088 = vset.pattern.permute.xlu0 13
      %1089 = vperm.xlu0 %1088, %v657
      %v1090 = vpop.permute.xlu0 %1089
      %1092 = vset.pattern.permute.xlu0 13
      %1093 = vperm.xlu0 %1092, %v658
      %v1094 = vpop.permute.xlu0 %1093
      %v1096 = vadd.f32 %v1032, %v1066
      %v1097 = vadd.f32 %v1033, %v1066
      %v1098 = vadd.f32 %v1034, %v1066
      %v1099 = vadd.f32 %v1035, %v1066
      %v1100 = vadd.f32 %v1036, %v1070
      %v1101 = vadd.f32 %v1037, %v1070
      %v1102 = vadd.f32 %v1038, %v1070
      %v1103 = vadd.f32 %v1039, %v1070
      %v1104 = vadd.f32 %v1040, %v1074
      %v1105 = vadd.f32 %v1041, %v1074
      %v1106 = vadd.f32 %v1042, %v1074
      %v1107 = vadd.f32 %v1043, %v1074
      %v1108 = vadd.f32 %v1044, %v1078
      %v1109 = vadd.f32 %v1045, %v1078
      %v1110 = vadd.f32 %v1046, %v1078
      %v1111 = vadd.f32 %v1047, %v1078
      %v1112 = vadd.f32 %v1048, %v1082
      %v1113 = vadd.f32 %v1049, %v1082
      %v1114 = vadd.f32 %v1050, %v1082
      %v1115 = vadd.f32 %v1051, %v1082
      %v1116 = vadd.f32 %v1052, %v1086
      %v1117 = vadd.f32 %v1053, %v1086
      %v1118 = vadd.f32 %v1054, %v1086
      %v1119 = vadd.f32 %v1055, %v1086
      %v1120 = vadd.f32 %v1056, %v1090
      %v1121 = vadd.f32 %v1057, %v1090
      %v1122 = vadd.f32 %v1058, %v1090
      %v1123 = vadd.f32 %v1059, %v1090
      %v1124 = vadd.f32 %v1060, %v1094
      %v1125 = vadd.f32 %v1061, %v1094
      %v1126 = vadd.f32 %v1062, %v1094
      %v1127 = vadd.f32 %v1063, %v1094
      %v1128 = vmax.f32 %v1096, 0.0
      %v1129 = vmax.f32 %v1097, 0.0
      %v1130 = vmax.f32 %v1098, 0.0
      %v1131 = vmax.f32 %v1099, 0.0
      %v1132 = vmax.f32 %v1100, 0.0
      %v1133 = vmax.f32 %v1101, 0.0
      %v1134 = vmax.f32 %v1102, 0.0
      %v1135 = vmax.f32 %v1103, 0.0
      %v1136 = vmax.f32 %v1104, 0.0
      %v1137 = vmax.f32 %v1105, 0.0
      %v1138 = vmax.f32 %v1106, 0.0
      %v1139 = vmax.f32 %v1107, 0.0
      %v1140 = vmax.f32 %v1108, 0.0
      %v1141 = vmax.f32 %v1109, 0.0
      %v1142 = vmax.f32 %v1110, 0.0
      %v1143 = vmax.f32 %v1111, 0.0
      %v1144 = vmax.f32 %v1112, 0.0
      %v1145 = vmax.f32 %v1113, 0.0
      %v1146 = vmax.f32 %v1114, 0.0
      %v1147 = vmax.f32 %v1115, 0.0
      %v1148 = vmax.f32 %v1116, 0.0
      %v1149 = vmax.f32 %v1117, 0.0
      %v1150 = vmax.f32 %v1118, 0.0
      %v1151 = vmax.f32 %v1119, 0.0
      %v1152 = vmax.f32 %v1120, 0.0
      %v1153 = vmax.f32 %v1121, 0.0
      %v1154 = vmax.f32 %v1122, 0.0
      %v1155 = vmax.f32 %v1123, 0.0
      %v1156 = vmax.f32 %v1124, 0.0
      %v1157 = vmax.f32 %v1125, 0.0
      %v1158 = vmax.f32 %v1126, 0.0
      %v1159 = vmax.f32 %v1127, 0.0
      %v1160 = vld [vmem:[%s4] sm:$0xf]
      %v1161 = vld [vmem:[%s4 + $0x4] sm:$0xf]
      %v1162 = vld [vmem:[%s4 + $0x8] sm:$0xf]
      %v1163 = vld [vmem:[%s4 + $0xc] sm:$0xf]
      %v1164 = vld [vmem:[%s4 + $0x10] sm:$0xf]
      %v1165 = vld [vmem:[%s4 + $0x14] sm:$0xf]
      %v1166 = vld [vmem:[%s4 + $0x18] sm:$0xf]
      %v1167 = vld [vmem:[%s4 + $0x1c] sm:$0xf]
      %v1168 = vpack.c.bf16 %v1132, %v1128
      %v1169 = vpack.c.bf16 %v1133, %v1129
      %v1170 = vpack.c.bf16 %v1134, %v1130
      %v1171 = vpack.c.bf16 %v1135, %v1131
      %v1172 = vpack.c.bf16 %v1140, %v1136
      %v1173 = vpack.c.bf16 %v1141, %v1137
      %v1174 = vpack.c.bf16 %v1142, %v1138
      %v1175 = vpack.c.bf16 %v1143, %v1139
      %v1176 = vpack.c.bf16 %v1148, %v1144
      %v1177 = vpack.c.bf16 %v1149, %v1145
      %v1178 = vpack.c.bf16 %v1150, %v1146
      %v1179 = vpack.c.bf16 %v1151, %v1147
      %v1180 = vpack.c.bf16 %v1156, %v1152
      %v1181 = vpack.c.bf16 %v1157, %v1153
      %v1182 = vpack.c.bf16 %v1158, %v1154
      %v1183 = vpack.c.bf16 %v1159, %v1155
      %v1192 = vunpack.c.l.b16 %v1160
      %v1193 = vunpack.c.l.b16 %v1161
      %v1194 = vunpack.c.l.b16 %v1162
      %v1195 = vunpack.c.l.b16 %v1163
      %v1196 = vunpack.c.l.b16 %v1164
      %v1197 = vunpack.c.l.b16 %v1165
      %v1198 = vunpack.c.l.b16 %v1166
      %v1199 = vunpack.c.l.b16 %v1167
      %v1200 = vpack.c.b16 %v1193, %v1192
      %v1201 = vpack.c.b16 %v1195, %v1194
      %v1202 = vpack.c.b16 %v1197, %v1196
      %v1203 = vpack.c.b16 %v1199, %v1198
      %v1205 = vsel %vm871, %v1200, 0
      %v1208 = vsel %vm871, %v1201, 0
      %v1211 = vsel %vm871, %v1202, 0
      %v1214 = vsel %vm871, %v1203, 0
      %1216 = vmatpush.bf16.msra.mxu0 0
      %1217 = vmatpush.bf16.msra.mxu0 0
      %1218 = vmatpush.bf16.msra.mxu0 0
      %1219 = vmatpush.bf16.msra.mxu0 0
      %1220 = vmatpush.bf16.msra.mxu0 %v1180
      %1221 = vmatpush.bf16.msra.mxu0 %v1176
      %1222 = vmatpush.bf16.msra.mxu0 %v1172
      %1223 = vmatpush.bf16.msra.mxu0 %v1168
      %1224 = vmatmul.bf16.gmra.mxu0 %v1205
      %v1225 = vpop.f32.mrf.mxu0
      %v1226 = vadd.f32 0.0, %v1225
      %v1227 = vpop.f32.mrf.mxu0
      %v1228 = vadd.f32 0.0, %v1227
      %1229 = vmatmul.bf16.gmra.mxu0 %v1208
      %v1230 = vpop.f32.mrf.mxu0
      %v1231 = vadd.f32 0.0, %v1230
      %v1232 = vpop.f32.mrf.mxu0
      %v1233 = vadd.f32 0.0, %v1232
      %1234 = vmatmul.bf16.gmra.mxu0 %v1211
      %v1235 = vpop.f32.mrf.mxu0
      %v1236 = vadd.f32 0.0, %v1235
      %v1237 = vpop.f32.mrf.mxu0
      %v1238 = vadd.f32 0.0, %v1237
      %1239 = vmatmul.bf16.gmra.mxu0 %v1214
      %v1240 = vpop.f32.mrf.mxu0
      %v1241 = vadd.f32 0.0, %v1240
      %v1242 = vpop.f32.mrf.mxu0
      %v1243 = vadd.f32 0.0, %v1242
      %1244 = vdwg.mxu0
      %1245 = vmatpush.bf16.msra.mxu0 0
      %1246 = vmatpush.bf16.msra.mxu0 0
      %1247 = vmatpush.bf16.msra.mxu0 0
      %1248 = vmatpush.bf16.msra.mxu0 0
      %1249 = vmatpush.bf16.msra.mxu0 %v1181
      %1250 = vmatpush.bf16.msra.mxu0 %v1177
      %1251 = vmatpush.bf16.msra.mxu0 %v1173
      %1252 = vmatpush.bf16.msra.mxu0 %v1169
      %1253 = vmatmul.bf16.gmra.mxu0 %v1205
      %v1254 = vpop.f32.mrf.mxu0
      %v1255 = vadd.f32 0.0, %v1254
      %v1256 = vpop.f32.mrf.mxu0
      %v1257 = vadd.f32 0.0, %v1256
      %1258 = vmatmul.bf16.gmra.mxu0 %v1208
      %v1259 = vpop.f32.mrf.mxu0
      %v1260 = vadd.f32 0.0, %v1259
      %v1261 = vpop.f32.mrf.mxu0
      %v1262 = vadd.f32 0.0, %v1261
      %1263 = vmatmul.bf16.gmra.mxu0 %v1211
      %v1264 = vpop.f32.mrf.mxu0
      %v1265 = vadd.f32 0.0, %v1264
      %v1266 = vpop.f32.mrf.mxu0
      %v1267 = vadd.f32 0.0, %v1266
      %1268 = vmatmul.bf16.gmra.mxu0 %v1214
      %v1269 = vpop.f32.mrf.mxu0
      %v1270 = vadd.f32 0.0, %v1269
      %v1271 = vpop.f32.mrf.mxu0
      %v1272 = vadd.f32 0.0, %v1271
      %1273 = vdwg.mxu0
      %1274 = vmatpush.bf16.msra.mxu0 0
      %1275 = vmatpush.bf16.msra.mxu0 0
      %1276 = vmatpush.bf16.msra.mxu0 0
      %1277 = vmatpush.bf16.msra.mxu0 0
      %1278 = vmatpush.bf16.msra.mxu0 %v1182
      %1279 = vmatpush.bf16.msra.mxu0 %v1178
      %1280 = vmatpush.bf16.msra.mxu0 %v1174
      %1281 = vmatpush.bf16.msra.mxu0 %v1170
      %1282 = vmatmul.bf16.gmra.mxu0 %v1205
      %v1283 = vpop.f32.mrf.mxu0
      %v1284 = vadd.f32 0.0, %v1283
      %v1285 = vpop.f32.mrf.mxu0
      %v1286 = vadd.f32 0.0, %v1285
      %1287 = vmatmul.bf16.gmra.mxu0 %v1208
      %v1288 = vpop.f32.mrf.mxu0
      %v1289 = vadd.f32 0.0, %v1288
      %v1290 = vpop.f32.mrf.mxu0
      %v1291 = vadd.f32 0.0, %v1290
      %1292 = vmatmul.bf16.gmra.mxu0 %v1211
      %v1293 = vpop.f32.mrf.mxu0
      %v1294 = vadd.f32 0.0, %v1293
      %v1295 = vpop.f32.mrf.mxu0
      %v1296 = vadd.f32 0.0, %v1295
      %1297 = vmatmul.bf16.gmra.mxu0 %v1214
      %v1298 = vpop.f32.mrf.mxu0
      %v1299 = vadd.f32 0.0, %v1298
      %v1300 = vpop.f32.mrf.mxu0
      %v1301 = vadd.f32 0.0, %v1300
      %1302 = vdwg.mxu0
      %1303 = vmatpush.bf16.msra.mxu0 0
      %1304 = vmatpush.bf16.msra.mxu0 0
      %1305 = vmatpush.bf16.msra.mxu0 0
      %1306 = vmatpush.bf16.msra.mxu0 0
      %1307 = vmatpush.bf16.msra.mxu0 %v1183
      %1308 = vmatpush.bf16.msra.mxu0 %v1179
      %1309 = vmatpush.bf16.msra.mxu0 %v1175
      %1310 = vmatpush.bf16.msra.mxu0 %v1171
      %1311 = vmatmul.bf16.gmra.mxu0 %v1205
      %v1312 = vpop.f32.mrf.mxu0
      %v1313 = vadd.f32 0.0, %v1312
      %v1314 = vpop.f32.mrf.mxu0
      %v1315 = vadd.f32 0.0, %v1314
      %1316 = vmatmul.bf16.gmra.mxu0 %v1208
      %v1317 = vpop.f32.mrf.mxu0
      %v1318 = vadd.f32 0.0, %v1317
      %v1319 = vpop.f32.mrf.mxu0
      %v1320 = vadd.f32 0.0, %v1319
      %1321 = vmatmul.bf16.gmra.mxu0 %v1211
      %v1322 = vpop.f32.mrf.mxu0
      %v1323 = vadd.f32 0.0, %v1322
      %v1324 = vpop.f32.mrf.mxu0
      %v1325 = vadd.f32 0.0, %v1324
      %1326 = vmatmul.bf16.gmra.mxu0 %v1214
      %v1327 = vpop.f32.mrf.mxu0
      %v1328 = vadd.f32 0.0, %v1327
      %v1329 = vpop.f32.mrf.mxu0
      %v1330 = vadd.f32 0.0, %v1329
      %1331 = vdwg.mxu0
      %v1332 = vadd.f32 %v619, %v1226
      %v1333 = vadd.f32 %v620, %v1255
      %v1334 = vadd.f32 %v621, %v1284
      %v1335 = vadd.f32 %v622, %v1313
      %v1336 = vadd.f32 %v623, %v1228
      %v1337 = vadd.f32 %v624, %v1257
      %v1338 = vadd.f32 %v625, %v1286
      %v1339 = vadd.f32 %v626, %v1315
      %v1340 = vadd.f32 %v627, %v1231
      %v1341 = vadd.f32 %v628, %v1260
      %v1342 = vadd.f32 %v629, %v1289
      %v1343 = vadd.f32 %v630, %v1318
      %v1344 = vadd.f32 %v631, %v1233
      %v1345 = vadd.f32 %v632, %v1262
      %v1346 = vadd.f32 %v633, %v1291
      %v1347 = vadd.f32 %v634, %v1320
      %v1348 = vadd.f32 %v635, %v1236
      %v1349 = vadd.f32 %v636, %v1265
      %v1350 = vadd.f32 %v637, %v1294
      %v1351 = vadd.f32 %v638, %v1323
      %v1352 = vadd.f32 %v639, %v1238
      %v1353 = vadd.f32 %v640, %v1267
      %v1354 = vadd.f32 %v641, %v1296
      %v1355 = vadd.f32 %v642, %v1325
      %v1356 = vadd.f32 %v643, %v1241
      %v1357 = vadd.f32 %v644, %v1270
      %v1358 = vadd.f32 %v645, %v1299
      %v1359 = vadd.f32 %v646, %v1328
      %v1360 = vadd.f32 %v647, %v1243
      %v1361 = vadd.f32 %v648, %v1272
      %v1362 = vadd.f32 %v649, %v1301
      %v1363 = vadd.f32 %v650, %v1330
      %1364 = vset.pattern.permute.xlu0 2
      %1365 = vperm.xlu0 %1364, %v651
      %v1366 = vpop.permute.xlu0 %1365
      %1368 = vset.pattern.permute.xlu0 2
      %1369 = vperm.xlu0 %1368, %v652
      %v1370 = vpop.permute.xlu0 %1369
      %1372 = vset.pattern.permute.xlu0 2
      %1373 = vperm.xlu0 %1372, %v653
      %v1374 = vpop.permute.xlu0 %1373
      %1376 = vset.pattern.permute.xlu0 2
      %1377 = vperm.xlu0 %1376, %v654
      %v1378 = vpop.permute.xlu0 %1377
      %1380 = vset.pattern.permute.xlu0 2
      %1381 = vperm.xlu0 %1380, %v655
      %v1382 = vpop.permute.xlu0 %1381
      %1384 = vset.pattern.permute.xlu0 2
      %1385 = vperm.xlu0 %1384, %v656
      %v1386 = vpop.permute.xlu0 %1385
      %1388 = vset.pattern.permute.xlu0 2
      %1389 = vperm.xlu0 %1388, %v657
      %v1390 = vpop.permute.xlu0 %1389
      %1392 = vset.pattern.permute.xlu0 2
      %1393 = vperm.xlu0 %1392, %v658
      %v1394 = vpop.permute.xlu0 %1393
      %v1396 = vmul.f32 %v1366, %v1332
      %v1397 = vmul.f32 %v1366, %v1333
      %v1398 = vmul.f32 %v1366, %v1334
      %v1399 = vmul.f32 %v1366, %v1335
      %v1400 = vmul.f32 %v1370, %v1336
      %v1401 = vmul.f32 %v1370, %v1337
      %v1402 = vmul.f32 %v1370, %v1338
      %v1403 = vmul.f32 %v1370, %v1339
      %v1404 = vmul.f32 %v1374, %v1340
      %v1405 = vmul.f32 %v1374, %v1341
      %v1406 = vmul.f32 %v1374, %v1342
      %v1407 = vmul.f32 %v1374, %v1343
      %v1408 = vmul.f32 %v1378, %v1344
      %v1409 = vmul.f32 %v1378, %v1345
      %v1410 = vmul.f32 %v1378, %v1346
      %v1411 = vmul.f32 %v1378, %v1347
      %v1412 = vmul.f32 %v1382, %v1348
      %v1413 = vmul.f32 %v1382, %v1349
      %v1414 = vmul.f32 %v1382, %v1350
      %v1415 = vmul.f32 %v1382, %v1351
      %v1416 = vmul.f32 %v1386, %v1352
      %v1417 = vmul.f32 %v1386, %v1353
      %v1418 = vmul.f32 %v1386, %v1354
      %v1419 = vmul.f32 %v1386, %v1355
      %v1420 = vmul.f32 %v1390, %v1356
      %v1421 = vmul.f32 %v1390, %v1357
      %v1422 = vmul.f32 %v1390, %v1358
      %v1423 = vmul.f32 %v1390, %v1359
      %v1424 = vmul.f32 %v1394, %v1360
      %v1425 = vmul.f32 %v1394, %v1361
      %v1426 = vmul.f32 %v1394, %v1362
      %v1427 = vmul.f32 %v1394, %v1363
      %1428 = vset.pattern.permute.xlu0 14
      %1429 = vperm.xlu0 %1428, %v651
      %v1430 = vpop.permute.xlu0 %1429
      %1432 = vset.pattern.permute.xlu0 14
      %1433 = vperm.xlu0 %1432, %v652
      %v1434 = vpop.permute.xlu0 %1433
      %1436 = vset.pattern.permute.xlu0 14
      %1437 = vperm.xlu0 %1436, %v653
      %v1438 = vpop.permute.xlu0 %1437
      %1440 = vset.pattern.permute.xlu0 14
      %1441 = vperm.xlu0 %1440, %v654
      %v1442 = vpop.permute.xlu0 %1441
      %1444 = vset.pattern.permute.xlu0 14
      %1445 = vperm.xlu0 %1444, %v655
      %v1446 = vpop.permute.xlu0 %1445
      %1448 = vset.pattern.permute.xlu0 14
      %1449 = vperm.xlu0 %1448, %v656
      %v1450 = vpop.permute.xlu0 %1449
      %1452 = vset.pattern.permute.xlu0 14
      %1453 = vperm.xlu0 %1452, %v657
      %v1454 = vpop.permute.xlu0 %1453
      %1456 = vset.pattern.permute.xlu0 14
      %1457 = vperm.xlu0 %1456, %v658
      %v1458 = vpop.permute.xlu0 %1457
      %v1460 = vadd.f32 %v1396, %v1430
      %v1461 = vadd.f32 %v1397, %v1430
      %v1462 = vadd.f32 %v1398, %v1430
      %v1463 = vadd.f32 %v1399, %v1430
      %v1464 = vadd.f32 %v1400, %v1434
      %v1465 = vadd.f32 %v1401, %v1434
      %v1466 = vadd.f32 %v1402, %v1434
      %v1467 = vadd.f32 %v1403, %v1434
      %v1468 = vadd.f32 %v1404, %v1438
      %v1469 = vadd.f32 %v1405, %v1438
      %v1470 = vadd.f32 %v1406, %v1438
      %v1471 = vadd.f32 %v1407, %v1438
      %v1472 = vadd.f32 %v1408, %v1442
      %v1473 = vadd.f32 %v1409, %v1442
      %v1474 = vadd.f32 %v1410, %v1442
      %v1475 = vadd.f32 %v1411, %v1442
      %v1476 = vadd.f32 %v1412, %v1446
      %v1477 = vadd.f32 %v1413, %v1446
      %v1478 = vadd.f32 %v1414, %v1446
      %v1479 = vadd.f32 %v1415, %v1446
      %v1480 = vadd.f32 %v1416, %v1450
      %v1481 = vadd.f32 %v1417, %v1450
      %v1482 = vadd.f32 %v1418, %v1450
      %v1483 = vadd.f32 %v1419, %v1450
      %v1484 = vadd.f32 %v1420, %v1454
      %v1485 = vadd.f32 %v1421, %v1454
      %v1486 = vadd.f32 %v1422, %v1454
      %v1487 = vadd.f32 %v1423, %v1454
      %v1488 = vadd.f32 %v1424, %v1458
      %v1489 = vadd.f32 %v1425, %v1458
      %v1490 = vadd.f32 %v1426, %v1458
      %v1491 = vadd.f32 %v1427, %v1458
      %v1492 = vmax.f32 %v1460, 0.0
      %v1493 = vmax.f32 %v1461, 0.0
      %v1494 = vmax.f32 %v1462, 0.0
      %v1495 = vmax.f32 %v1463, 0.0
      %v1496 = vmax.f32 %v1464, 0.0
      %v1497 = vmax.f32 %v1465, 0.0
      %v1498 = vmax.f32 %v1466, 0.0
      %v1499 = vmax.f32 %v1467, 0.0
      %v1500 = vmax.f32 %v1468, 0.0
      %v1501 = vmax.f32 %v1469, 0.0
      %v1502 = vmax.f32 %v1470, 0.0
      %v1503 = vmax.f32 %v1471, 0.0
      %v1504 = vmax.f32 %v1472, 0.0
      %v1505 = vmax.f32 %v1473, 0.0
      %v1506 = vmax.f32 %v1474, 0.0
      %v1507 = vmax.f32 %v1475, 0.0
      %v1508 = vmax.f32 %v1476, 0.0
      %v1509 = vmax.f32 %v1477, 0.0
      %v1510 = vmax.f32 %v1478, 0.0
      %v1511 = vmax.f32 %v1479, 0.0
      %v1512 = vmax.f32 %v1480, 0.0
      %v1513 = vmax.f32 %v1481, 0.0
      %v1514 = vmax.f32 %v1482, 0.0
      %v1515 = vmax.f32 %v1483, 0.0
      %v1516 = vmax.f32 %v1484, 0.0
      %v1517 = vmax.f32 %v1485, 0.0
      %v1518 = vmax.f32 %v1486, 0.0
      %v1519 = vmax.f32 %v1487, 0.0
      %v1520 = vmax.f32 %v1488, 0.0
      %v1521 = vmax.f32 %v1489, 0.0
      %v1522 = vmax.f32 %v1490, 0.0
      %v1523 = vmax.f32 %v1491, 0.0
      %s1524 = scalar_lea.vmem %s3, 32
      %v1525 = vld [vmem:[%s1524] sm:$0xf]
      %v1526 = vld [vmem:[%s1524 + $0x4] sm:$0xf]
      %v1527 = vld [vmem:[%s1524 + $0x8] sm:$0xf]
      %v1528 = vld [vmem:[%s1524 + $0xc] sm:$0xf]
      %v1529 = vld [vmem:[%s1524 + $0x10] sm:$0xf]
      %v1530 = vld [vmem:[%s1524 + $0x14] sm:$0xf]
      %v1531 = vld [vmem:[%s1524 + $0x18] sm:$0xf]
      %v1532 = vld [vmem:[%s1524 + $0x1c] sm:$0xf]
      %v1533 = vpack.c.bf16 %v1496, %v1492
      %v1534 = vpack.c.bf16 %v1497, %v1493
      %v1535 = vpack.c.bf16 %v1498, %v1494
      %v1536 = vpack.c.bf16 %v1499, %v1495
      %v1537 = vpack.c.bf16 %v1504, %v1500
      %v1538 = vpack.c.bf16 %v1505, %v1501
      %v1539 = vpack.c.bf16 %v1506, %v1502
      %v1540 = vpack.c.bf16 %v1507, %v1503
      %v1541 = vpack.c.bf16 %v1512, %v1508
      %v1542 = vpack.c.bf16 %v1513, %v1509
      %v1543 = vpack.c.bf16 %v1514, %v1510
      %v1544 = vpack.c.bf16 %v1515, %v1511
      %v1545 = vpack.c.bf16 %v1520, %v1516
      %v1546 = vpack.c.bf16 %v1521, %v1517
      %v1547 = vpack.c.bf16 %v1522, %v1518
      %v1548 = vpack.c.bf16 %v1523, %v1519
      %v1557 = vunpack.c.l.b16 %v1525
      %v1558 = vunpack.c.l.b16 %v1526
      %v1559 = vunpack.c.l.b16 %v1527
      %v1560 = vunpack.c.l.b16 %v1528
      %v1561 = vunpack.c.l.b16 %v1529
      %v1562 = vunpack.c.l.b16 %v1530
      %v1563 = vunpack.c.l.b16 %v1531
      %v1564 = vunpack.c.l.b16 %v1532
      %v1565 = vpack.c.b16 %v1558, %v1557
      %v1566 = vpack.c.b16 %v1560, %v1559
      %v1567 = vpack.c.b16 %v1562, %v1561
      %v1568 = vpack.c.b16 %v1564, %v1563
      %v1570 = vsel %vm871, %v1565, 0
      %v1573 = vsel %vm871, %v1566, 0
      %v1576 = vsel %vm871, %v1567, 0
      %v1579 = vsel %vm871, %v1568, 0
      %1581 = vmatpush.bf16.msra.mxu0 0
      %1582 = vmatpush.bf16.msra.mxu0 0
      %1583 = vmatpush.bf16.msra.mxu0 0
      %1584 = vmatpush.bf16.msra.mxu0 0
      %1585 = vmatpush.bf16.msra.mxu0 %v1545
      %1586 = vmatpush.bf16.msra.mxu0 %v1541
      %1587 = vmatpush.bf16.msra.mxu0 %v1537
      %1588 = vmatpush.bf16.msra.mxu0 %v1533
      %1589 = vmatmul.bf16.gmra.mxu0 %v1570
      %v1590 = vpop.f32.mrf.mxu0
      %v1591 = vadd.f32 0.0, %v1590
      %v1592 = vpop.f32.mrf.mxu0
      %v1593 = vadd.f32 0.0, %v1592
      %1594 = vmatmul.bf16.gmra.mxu0 %v1573
      %v1595 = vpop.f32.mrf.mxu0
      %v1596 = vadd.f32 0.0, %v1595
      %v1597 = vpop.f32.mrf.mxu0
      %v1598 = vadd.f32 0.0, %v1597
      %1599 = vmatmul.bf16.gmra.mxu0 %v1576
      %v1600 = vpop.f32.mrf.mxu0
      %v1601 = vadd.f32 0.0, %v1600
      %v1602 = vpop.f32.mrf.mxu0
      %v1603 = vadd.f32 0.0, %v1602
      %1604 = vmatmul.bf16.gmra.mxu0 %v1579
      %v1605 = vpop.f32.mrf.mxu0
      %v1606 = vadd.f32 0.0, %v1605
      %v1607 = vpop.f32.mrf.mxu0
      %v1608 = vadd.f32 0.0, %v1607
      %1609 = vdwg.mxu0
      %1610 = vmatpush.bf16.msra.mxu0 0
      %1611 = vmatpush.bf16.msra.mxu0 0
      %1612 = vmatpush.bf16.msra.mxu0 0
      %1613 = vmatpush.bf16.msra.mxu0 0
      %1614 = vmatpush.bf16.msra.mxu0 %v1546
      %1615 = vmatpush.bf16.msra.mxu0 %v1542
      %1616 = vmatpush.bf16.msra.mxu0 %v1538
      %1617 = vmatpush.bf16.msra.mxu0 %v1534
      %1618 = vmatmul.bf16.gmra.mxu0 %v1570
      %v1619 = vpop.f32.mrf.mxu0
      %v1620 = vadd.f32 0.0, %v1619
      %v1621 = vpop.f32.mrf.mxu0
      %v1622 = vadd.f32 0.0, %v1621
      %1623 = vmatmul.bf16.gmra.mxu0 %v1573
      %v1624 = vpop.f32.mrf.mxu0
      %v1625 = vadd.f32 0.0, %v1624
      %v1626 = vpop.f32.mrf.mxu0
      %v1627 = vadd.f32 0.0, %v1626
      %1628 = vmatmul.bf16.gmra.mxu0 %v1576
      %v1629 = vpop.f32.mrf.mxu0
      %v1630 = vadd.f32 0.0, %v1629
      %v1631 = vpop.f32.mrf.mxu0
      %v1632 = vadd.f32 0.0, %v1631
      %1633 = vmatmul.bf16.gmra.mxu0 %v1579
      %v1634 = vpop.f32.mrf.mxu0
      %v1635 = vadd.f32 0.0, %v1634
      %v1636 = vpop.f32.mrf.mxu0
      %v1637 = vadd.f32 0.0, %v1636
      %1638 = vdwg.mxu0
      %1639 = vmatpush.bf16.msra.mxu0 0
      %1640 = vmatpush.bf16.msra.mxu0 0
      %1641 = vmatpush.bf16.msra.mxu0 0
      %1642 = vmatpush.bf16.msra.mxu0 0
      %1643 = vmatpush.bf16.msra.mxu0 %v1547
      %1644 = vmatpush.bf16.msra.mxu0 %v1543
      %1645 = vmatpush.bf16.msra.mxu0 %v1539
      %1646 = vmatpush.bf16.msra.mxu0 %v1535
      %1647 = vmatmul.bf16.gmra.mxu0 %v1570
      %v1648 = vpop.f32.mrf.mxu0
      %v1649 = vadd.f32 0.0, %v1648
      %v1650 = vpop.f32.mrf.mxu0
      %v1651 = vadd.f32 0.0, %v1650
      %1652 = vmatmul.bf16.gmra.mxu0 %v1573
      %v1653 = vpop.f32.mrf.mxu0
      %v1654 = vadd.f32 0.0, %v1653
      %v1655 = vpop.f32.mrf.mxu0
      %v1656 = vadd.f32 0.0, %v1655
      %1657 = vmatmul.bf16.gmra.mxu0 %v1576
      %v1658 = vpop.f32.mrf.mxu0
      %v1659 = vadd.f32 0.0, %v1658
      %v1660 = vpop.f32.mrf.mxu0
      %v1661 = vadd.f32 0.0, %v1660
      %1662 = vmatmul.bf16.gmra.mxu0 %v1579
      %v1663 = vpop.f32.mrf.mxu0
      %v1664 = vadd.f32 0.0, %v1663
      %v1665 = vpop.f32.mrf.mxu0
      %v1666 = vadd.f32 0.0, %v1665
      %1667 = vdwg.mxu0
      %1668 = vmatpush.bf16.msra.mxu0 0
      %1669 = vmatpush.bf16.msra.mxu0 0
      %1670 = vmatpush.bf16.msra.mxu0 0
      %1671 = vmatpush.bf16.msra.mxu0 0
      %1672 = vmatpush.bf16.msra.mxu0 %v1548
      %1673 = vmatpush.bf16.msra.mxu0 %v1544
      %1674 = vmatpush.bf16.msra.mxu0 %v1540
      %1675 = vmatpush.bf16.msra.mxu0 %v1536
      %1676 = vmatmul.bf16.gmra.mxu0 %v1570
      %v1677 = vpop.f32.mrf.mxu0
      %v1678 = vadd.f32 0.0, %v1677
      %v1679 = vpop.f32.mrf.mxu0
      %v1680 = vadd.f32 0.0, %v1679
      %1681 = vmatmul.bf16.gmra.mxu0 %v1573
      %v1682 = vpop.f32.mrf.mxu0
      %v1683 = vadd.f32 0.0, %v1682
      %v1684 = vpop.f32.mrf.mxu0
      %v1685 = vadd.f32 0.0, %v1684
      %1686 = vmatmul.bf16.gmra.mxu0 %v1576
      %v1687 = vpop.f32.mrf.mxu0
      %v1688 = vadd.f32 0.0, %v1687
      %v1689 = vpop.f32.mrf.mxu0
      %v1690 = vadd.f32 0.0, %v1689
      %1691 = vmatmul.bf16.gmra.mxu0 %v1579
      %v1692 = vpop.f32.mrf.mxu0
      %v1693 = vadd.f32 0.0, %v1692
      %v1694 = vpop.f32.mrf.mxu0
      %v1695 = vadd.f32 0.0, %v1694
      %1696 = vdwg.mxu0
      %1697 = vset.pattern.permute.xlu0 3
      %1698 = vperm.xlu0 %1697, %v651
      %v1699 = vpop.permute.xlu0 %1698
      %1701 = vset.pattern.permute.xlu0 3
      %1702 = vperm.xlu0 %1701, %v652
      %v1703 = vpop.permute.xlu0 %1702
      %1705 = vset.pattern.permute.xlu0 3
      %1706 = vperm.xlu0 %1705, %v653
      %v1707 = vpop.permute.xlu0 %1706
      %1709 = vset.pattern.permute.xlu0 3
      %1710 = vperm.xlu0 %1709, %v654
      %v1711 = vpop.permute.xlu0 %1710
      %1713 = vset.pattern.permute.xlu0 3
      %1714 = vperm.xlu0 %1713, %v655
      %v1715 = vpop.permute.xlu0 %1714
      %1717 = vset.pattern.permute.xlu0 3
      %1718 = vperm.xlu0 %1717, %v656
      %v1719 = vpop.permute.xlu0 %1718
      %1721 = vset.pattern.permute.xlu0 3
      %1722 = vperm.xlu0 %1721, %v657
      %v1723 = vpop.permute.xlu0 %1722
      %1725 = vset.pattern.permute.xlu0 3
      %1726 = vperm.xlu0 %1725, %v658
      %v1727 = vpop.permute.xlu0 %1726
      %v1729 = vmul.f32 %v1699, %v1591
      %v1730 = vmul.f32 %v1699, %v1620
      %v1731 = vmul.f32 %v1699, %v1649
      %v1732 = vmul.f32 %v1699, %v1678
      %v1733 = vmul.f32 %v1703, %v1593
      %v1734 = vmul.f32 %v1703, %v1622
      %v1735 = vmul.f32 %v1703, %v1651
      %v1736 = vmul.f32 %v1703, %v1680
      %v1737 = vmul.f32 %v1707, %v1596
      %v1738 = vmul.f32 %v1707, %v1625
      %v1739 = vmul.f32 %v1707, %v1654
      %v1740 = vmul.f32 %v1707, %v1683
      %v1741 = vmul.f32 %v1711, %v1598
      %v1742 = vmul.f32 %v1711, %v1627
      %v1743 = vmul.f32 %v1711, %v1656
      %v1744 = vmul.f32 %v1711, %v1685
      %v1745 = vmul.f32 %v1715, %v1601
      %v1746 = vmul.f32 %v1715, %v1630
      %v1747 = vmul.f32 %v1715, %v1659
      %v1748 = vmul.f32 %v1715, %v1688
      %v1749 = vmul.f32 %v1719, %v1603
      %v1750 = vmul.f32 %v1719, %v1632
      %v1751 = vmul.f32 %v1719, %v1661
      %v1752 = vmul.f32 %v1719, %v1690
      %v1753 = vmul.f32 %v1723, %v1606
      %v1754 = vmul.f32 %v1723, %v1635
      %v1755 = vmul.f32 %v1723, %v1664
      %v1756 = vmul.f32 %v1723, %v1693
      %v1757 = vmul.f32 %v1727, %v1608
      %v1758 = vmul.f32 %v1727, %v1637
      %v1759 = vmul.f32 %v1727, %v1666
      %v1760 = vmul.f32 %v1727, %v1695
      %1761 = vset.pattern.permute.xlu0 15
      %1762 = vperm.xlu0 %1761, %v651
      %v1763 = vpop.permute.xlu0 %1762
      %1765 = vset.pattern.permute.xlu0 15
      %1766 = vperm.xlu0 %1765, %v652
      %v1767 = vpop.permute.xlu0 %1766
      %1769 = vset.pattern.permute.xlu0 15
      %1770 = vperm.xlu0 %1769, %v653
      %v1771 = vpop.permute.xlu0 %1770
      %1773 = vset.pattern.permute.xlu0 15
      %1774 = vperm.xlu0 %1773, %v654
      %v1775 = vpop.permute.xlu0 %1774
      %1777 = vset.pattern.permute.xlu0 15
      %1778 = vperm.xlu0 %1777, %v655
      %v1779 = vpop.permute.xlu0 %1778
      %1781 = vset.pattern.permute.xlu0 15
      %1782 = vperm.xlu0 %1781, %v656
      %v1783 = vpop.permute.xlu0 %1782
      %1785 = vset.pattern.permute.xlu0 15
      %1786 = vperm.xlu0 %1785, %v657
      %v1787 = vpop.permute.xlu0 %1786
      %1789 = vset.pattern.permute.xlu0 15
      %1790 = vperm.xlu0 %1789, %v658
      %v1791 = vpop.permute.xlu0 %1790
      %v1793 = vadd.f32 %v1729, %v1763
      %v1794 = vadd.f32 %v1730, %v1763
      %v1795 = vadd.f32 %v1731, %v1763
      %v1796 = vadd.f32 %v1732, %v1763
      %v1797 = vadd.f32 %v1733, %v1767
      %v1798 = vadd.f32 %v1734, %v1767
      %v1799 = vadd.f32 %v1735, %v1767
      %v1800 = vadd.f32 %v1736, %v1767
      %v1801 = vadd.f32 %v1737, %v1771
      %v1802 = vadd.f32 %v1738, %v1771
      %v1803 = vadd.f32 %v1739, %v1771
      %v1804 = vadd.f32 %v1740, %v1771
      %v1805 = vadd.f32 %v1741, %v1775
      %v1806 = vadd.f32 %v1742, %v1775
      %v1807 = vadd.f32 %v1743, %v1775
      %v1808 = vadd.f32 %v1744, %v1775
      %v1809 = vadd.f32 %v1745, %v1779
      %v1810 = vadd.f32 %v1746, %v1779
      %v1811 = vadd.f32 %v1747, %v1779
      %v1812 = vadd.f32 %v1748, %v1779
      %v1813 = vadd.f32 %v1749, %v1783
      %v1814 = vadd.f32 %v1750, %v1783
      %v1815 = vadd.f32 %v1751, %v1783
      %v1816 = vadd.f32 %v1752, %v1783
      %v1817 = vadd.f32 %v1753, %v1787
      %v1818 = vadd.f32 %v1754, %v1787
      %v1819 = vadd.f32 %v1755, %v1787
      %v1820 = vadd.f32 %v1756, %v1787
      %v1821 = vadd.f32 %v1757, %v1791
      %v1822 = vadd.f32 %v1758, %v1791
      %v1823 = vadd.f32 %v1759, %v1791
      %v1824 = vadd.f32 %v1760, %v1791
      %v1825 = vmax.f32 %v1793, 0.0
      %v1826 = vmax.f32 %v1794, 0.0
      %v1827 = vmax.f32 %v1795, 0.0
      %v1828 = vmax.f32 %v1796, 0.0
      %v1829 = vmax.f32 %v1797, 0.0
      %v1830 = vmax.f32 %v1798, 0.0
      %v1831 = vmax.f32 %v1799, 0.0
      %v1832 = vmax.f32 %v1800, 0.0
      %v1833 = vmax.f32 %v1801, 0.0
      %v1834 = vmax.f32 %v1802, 0.0
      %v1835 = vmax.f32 %v1803, 0.0
      %v1836 = vmax.f32 %v1804, 0.0
      %v1837 = vmax.f32 %v1805, 0.0
      %v1838 = vmax.f32 %v1806, 0.0
      %v1839 = vmax.f32 %v1807, 0.0
      %v1840 = vmax.f32 %v1808, 0.0
      %v1841 = vmax.f32 %v1809, 0.0
      %v1842 = vmax.f32 %v1810, 0.0
      %v1843 = vmax.f32 %v1811, 0.0
      %v1844 = vmax.f32 %v1812, 0.0
      %v1845 = vmax.f32 %v1813, 0.0
      %v1846 = vmax.f32 %v1814, 0.0
      %v1847 = vmax.f32 %v1815, 0.0
      %v1848 = vmax.f32 %v1816, 0.0
      %v1849 = vmax.f32 %v1817, 0.0
      %v1850 = vmax.f32 %v1818, 0.0
      %v1851 = vmax.f32 %v1819, 0.0
      %v1852 = vmax.f32 %v1820, 0.0
      %v1853 = vmax.f32 %v1821, 0.0
      %v1854 = vmax.f32 %v1822, 0.0
      %v1855 = vmax.f32 %v1823, 0.0
      %v1856 = vmax.f32 %v1824, 0.0
      %s1857 = scalar_lea.vmem %s4, 32
      %v1858 = vld [vmem:[%s1857] sm:$0xf]
      %v1859 = vld [vmem:[%s1857 + $0x4] sm:$0xf]
      %v1860 = vld [vmem:[%s1857 + $0x8] sm:$0xf]
      %v1861 = vld [vmem:[%s1857 + $0xc] sm:$0xf]
      %v1862 = vld [vmem:[%s1857 + $0x10] sm:$0xf]
      %v1863 = vld [vmem:[%s1857 + $0x14] sm:$0xf]
      %v1864 = vld [vmem:[%s1857 + $0x18] sm:$0xf]
      %v1865 = vld [vmem:[%s1857 + $0x1c] sm:$0xf]
      %v1866 = vpack.c.bf16 %v1829, %v1825
      %v1867 = vpack.c.bf16 %v1830, %v1826
      %v1868 = vpack.c.bf16 %v1831, %v1827
      %v1869 = vpack.c.bf16 %v1832, %v1828
      %v1870 = vpack.c.bf16 %v1837, %v1833
      %v1871 = vpack.c.bf16 %v1838, %v1834
      %v1872 = vpack.c.bf16 %v1839, %v1835
      %v1873 = vpack.c.bf16 %v1840, %v1836
      %v1874 = vpack.c.bf16 %v1845, %v1841
      %v1875 = vpack.c.bf16 %v1846, %v1842
      %v1876 = vpack.c.bf16 %v1847, %v1843
      %v1877 = vpack.c.bf16 %v1848, %v1844
      %v1878 = vpack.c.bf16 %v1853, %v1849
      %v1879 = vpack.c.bf16 %v1854, %v1850
      %v1880 = vpack.c.bf16 %v1855, %v1851
      %v1881 = vpack.c.bf16 %v1856, %v1852
      %v1890 = vunpack.c.l.b16 %v1858
      %v1891 = vunpack.c.l.b16 %v1859
      %v1892 = vunpack.c.l.b16 %v1860
      %v1893 = vunpack.c.l.b16 %v1861
      %v1894 = vunpack.c.l.b16 %v1862
      %v1895 = vunpack.c.l.b16 %v1863
      %v1896 = vunpack.c.l.b16 %v1864
      %v1897 = vunpack.c.l.b16 %v1865
      %v1898 = vpack.c.b16 %v1891, %v1890
      %v1899 = vpack.c.b16 %v1893, %v1892
      %v1900 = vpack.c.b16 %v1895, %v1894
      %v1901 = vpack.c.b16 %v1897, %v1896
      %v1903 = vsel %vm871, %v1898, 0
      %v1906 = vsel %vm871, %v1899, 0
      %v1909 = vsel %vm871, %v1900, 0
      %v1912 = vsel %vm871, %v1901, 0
      %1914 = vmatpush.bf16.msra.mxu0 0
      %1915 = vmatpush.bf16.msra.mxu0 0
      %1916 = vmatpush.bf16.msra.mxu0 0
      %1917 = vmatpush.bf16.msra.mxu0 0
      %1918 = vmatpush.bf16.msra.mxu0 %v1878
      %1919 = vmatpush.bf16.msra.mxu0 %v1874
      %1920 = vmatpush.bf16.msra.mxu0 %v1870
      %1921 = vmatpush.bf16.msra.mxu0 %v1866
      %1922 = vmatmul.bf16.gmra.mxu0 %v1903
      %v1923 = vpop.f32.mrf.mxu0
      %v1924 = vadd.f32 0.0, %v1923
      %v1925 = vpop.f32.mrf.mxu0
      %v1926 = vadd.f32 0.0, %v1925
      %1927 = vmatmul.bf16.gmra.mxu0 %v1906
      %v1928 = vpop.f32.mrf.mxu0
      %v1929 = vadd.f32 0.0, %v1928
      %v1930 = vpop.f32.mrf.mxu0
      %v1931 = vadd.f32 0.0, %v1930
      %1932 = vmatmul.bf16.gmra.mxu0 %v1909
      %v1933 = vpop.f32.mrf.mxu0
      %v1934 = vadd.f32 0.0, %v1933
      %v1935 = vpop.f32.mrf.mxu0
      %v1936 = vadd.f32 0.0, %v1935
      %1937 = vmatmul.bf16.gmra.mxu0 %v1912
      %v1938 = vpop.f32.mrf.mxu0
      %v1939 = vadd.f32 0.0, %v1938
      %v1940 = vpop.f32.mrf.mxu0
      %v1941 = vadd.f32 0.0, %v1940
      %1942 = vdwg.mxu0
      %1943 = vmatpush.bf16.msra.mxu0 0
      %1944 = vmatpush.bf16.msra.mxu0 0
      %1945 = vmatpush.bf16.msra.mxu0 0
      %1946 = vmatpush.bf16.msra.mxu0 0
      %1947 = vmatpush.bf16.msra.mxu0 %v1879
      %1948 = vmatpush.bf16.msra.mxu0 %v1875
      %1949 = vmatpush.bf16.msra.mxu0 %v1871
      %1950 = vmatpush.bf16.msra.mxu0 %v1867
      %1951 = vmatmul.bf16.gmra.mxu0 %v1903
      %v1952 = vpop.f32.mrf.mxu0
      %v1953 = vadd.f32 0.0, %v1952
      %v1954 = vpop.f32.mrf.mxu0
      %v1955 = vadd.f32 0.0, %v1954
      %1956 = vmatmul.bf16.gmra.mxu0 %v1906
      %v1957 = vpop.f32.mrf.mxu0
      %v1958 = vadd.f32 0.0, %v1957
      %v1959 = vpop.f32.mrf.mxu0
      %v1960 = vadd.f32 0.0, %v1959
      %1961 = vmatmul.bf16.gmra.mxu0 %v1909
      %v1962 = vpop.f32.mrf.mxu0
      %v1963 = vadd.f32 0.0, %v1962
      %v1964 = vpop.f32.mrf.mxu0
      %v1965 = vadd.f32 0.0, %v1964
      %1966 = vmatmul.bf16.gmra.mxu0 %v1912
      %v1967 = vpop.f32.mrf.mxu0
      %v1968 = vadd.f32 0.0, %v1967
      %v1969 = vpop.f32.mrf.mxu0
      %v1970 = vadd.f32 0.0, %v1969
      %1971 = vdwg.mxu0
      %1972 = vmatpush.bf16.msra.mxu0 0
      %1973 = vmatpush.bf16.msra.mxu0 0
      %1974 = vmatpush.bf16.msra.mxu0 0
      %1975 = vmatpush.bf16.msra.mxu0 0
      %1976 = vmatpush.bf16.msra.mxu0 %v1880
      %1977 = vmatpush.bf16.msra.mxu0 %v1876
      %1978 = vmatpush.bf16.msra.mxu0 %v1872
      %1979 = vmatpush.bf16.msra.mxu0 %v1868
      %1980 = vmatmul.bf16.gmra.mxu0 %v1903
      %v1981 = vpop.f32.mrf.mxu0
      %v1982 = vadd.f32 0.0, %v1981
      %v1983 = vpop.f32.mrf.mxu0
      %v1984 = vadd.f32 0.0, %v1983
      %1985 = vmatmul.bf16.gmra.mxu0 %v1906
      %v1986 = vpop.f32.mrf.mxu0
      %v1987 = vadd.f32 0.0, %v1986
      %v1988 = vpop.f32.mrf.mxu0
      %v1989 = vadd.f32 0.0, %v1988
      %1990 = vmatmul.bf16.gmra.mxu0 %v1909
      %v1991 = vpop.f32.mrf.mxu0
      %v1992 = vadd.f32 0.0, %v1991
      %v1993 = vpop.f32.mrf.mxu0
      %v1994 = vadd.f32 0.0, %v1993
      %1995 = vmatmul.bf16.gmra.mxu0 %v1912
      %v1996 = vpop.f32.mrf.mxu0
      %v1997 = vadd.f32 0.0, %v1996
      %v1998 = vpop.f32.mrf.mxu0
      %v1999 = vadd.f32 0.0, %v1998
      %2000 = vdwg.mxu0
      %2001 = vmatpush.bf16.msra.mxu0 0
      %2002 = vmatpush.bf16.msra.mxu0 0
      %2003 = vmatpush.bf16.msra.mxu0 0
      %2004 = vmatpush.bf16.msra.mxu0 0
      %2005 = vmatpush.bf16.msra.mxu0 %v1881
      %2006 = vmatpush.bf16.msra.mxu0 %v1877
      %2007 = vmatpush.bf16.msra.mxu0 %v1873
      %2008 = vmatpush.bf16.msra.mxu0 %v1869
      %2009 = vmatmul.bf16.gmra.mxu0 %v1903
      %v2010 = vpop.f32.mrf.mxu0
      %v2011 = vadd.f32 0.0, %v2010
      %v2012 = vpop.f32.mrf.mxu0
      %v2013 = vadd.f32 0.0, %v2012
      %2014 = vmatmul.bf16.gmra.mxu0 %v1906
      %v2015 = vpop.f32.mrf.mxu0
      %v2016 = vadd.f32 0.0, %v2015
      %v2017 = vpop.f32.mrf.mxu0
      %v2018 = vadd.f32 0.0, %v2017
      %2019 = vmatmul.bf16.gmra.mxu0 %v1909
      %v2020 = vpop.f32.mrf.mxu0
      %v2021 = vadd.f32 0.0, %v2020
      %v2022 = vpop.f32.mrf.mxu0
      %v2023 = vadd.f32 0.0, %v2022
      %2024 = vmatmul.bf16.gmra.mxu0 %v1912
      %v2025 = vpop.f32.mrf.mxu0
      %v2026 = vadd.f32 0.0, %v2025
      %v2027 = vpop.f32.mrf.mxu0
      %v2028 = vadd.f32 0.0, %v2027
      %2029 = vdwg.mxu0
      %v2030 = vadd.f32 %v1332, %v1924
      %v2031 = vadd.f32 %v1333, %v1953
      %v2032 = vadd.f32 %v1334, %v1982
      %v2033 = vadd.f32 %v1335, %v2011
      %v2034 = vadd.f32 %v1336, %v1926
      %v2035 = vadd.f32 %v1337, %v1955
      %v2036 = vadd.f32 %v1338, %v1984
      %v2037 = vadd.f32 %v1339, %v2013
      %v2038 = vadd.f32 %v1340, %v1929
      %v2039 = vadd.f32 %v1341, %v1958
      %v2040 = vadd.f32 %v1342, %v1987
      %v2041 = vadd.f32 %v1343, %v2016
      %v2042 = vadd.f32 %v1344, %v1931
      %v2043 = vadd.f32 %v1345, %v1960
      %v2044 = vadd.f32 %v1346, %v1989
      %v2045 = vadd.f32 %v1347, %v2018
      %v2046 = vadd.f32 %v1348, %v1934
      %v2047 = vadd.f32 %v1349, %v1963
      %v2048 = vadd.f32 %v1350, %v1992
      %v2049 = vadd.f32 %v1351, %v2021
      %v2050 = vadd.f32 %v1352, %v1936
      %v2051 = vadd.f32 %v1353, %v1965
      %v2052 = vadd.f32 %v1354, %v1994
      %v2053 = vadd.f32 %v1355, %v2023
      %v2054 = vadd.f32 %v1356, %v1939
      %v2055 = vadd.f32 %v1357, %v1968
      %v2056 = vadd.f32 %v1358, %v1997
      %v2057 = vadd.f32 %v1359, %v2026
      %v2058 = vadd.f32 %v1360, %v1941
      %v2059 = vadd.f32 %v1361, %v1970
      %v2060 = vadd.f32 %v1362, %v1999
      %v2061 = vadd.f32 %v1363, %v2028
      %2062 = vset.pattern.permute.xlu0 4
      %2063 = vperm.xlu0 %2062, %v651
      %v2064 = vpop.permute.xlu0 %2063
      %2066 = vset.pattern.permute.xlu0 4
      %2067 = vperm.xlu0 %2066, %v652
      %v2068 = vpop.permute.xlu0 %2067
      %2070 = vset.pattern.permute.xlu0 4
      %2071 = vperm.xlu0 %2070, %v653
      %v2072 = vpop.permute.xlu0 %2071
      %2074 = vset.pattern.permute.xlu0 4
      %2075 = vperm.xlu0 %2074, %v654
      %v2076 = vpop.permute.xlu0 %2075
      %2078 = vset.pattern.permute.xlu0 4
      %2079 = vperm.xlu0 %2078, %v655
      %v2080 = vpop.permute.xlu0 %2079
      %2082 = vset.pattern.permute.xlu0 4
      %2083 = vperm.xlu0 %2082, %v656
      %v2084 = vpop.permute.xlu0 %2083
      %2086 = vset.pattern.permute.xlu0 4
      %2087 = vperm.xlu0 %2086, %v657
      %v2088 = vpop.permute.xlu0 %2087
      %2090 = vset.pattern.permute.xlu0 4
      %2091 = vperm.xlu0 %2090, %v658
      %v2092 = vpop.permute.xlu0 %2091
      %v2094 = vmul.f32 %v2064, %v2030
      %v2095 = vmul.f32 %v2064, %v2031
      %v2096 = vmul.f32 %v2064, %v2032
      %v2097 = vmul.f32 %v2064, %v2033
      %v2098 = vmul.f32 %v2068, %v2034
      %v2099 = vmul.f32 %v2068, %v2035
      %v2100 = vmul.f32 %v2068, %v2036
      %v2101 = vmul.f32 %v2068, %v2037
      %v2102 = vmul.f32 %v2072, %v2038
      %v2103 = vmul.f32 %v2072, %v2039
      %v2104 = vmul.f32 %v2072, %v2040
      %v2105 = vmul.f32 %v2072, %v2041
      %v2106 = vmul.f32 %v2076, %v2042
      %v2107 = vmul.f32 %v2076, %v2043
      %v2108 = vmul.f32 %v2076, %v2044
      %v2109 = vmul.f32 %v2076, %v2045
      %v2110 = vmul.f32 %v2080, %v2046
      %v2111 = vmul.f32 %v2080, %v2047
      %v2112 = vmul.f32 %v2080, %v2048
      %v2113 = vmul.f32 %v2080, %v2049
      %v2114 = vmul.f32 %v2084, %v2050
      %v2115 = vmul.f32 %v2084, %v2051
      %v2116 = vmul.f32 %v2084, %v2052
      %v2117 = vmul.f32 %v2084, %v2053
      %v2118 = vmul.f32 %v2088, %v2054
      %v2119 = vmul.f32 %v2088, %v2055
      %v2120 = vmul.f32 %v2088, %v2056
      %v2121 = vmul.f32 %v2088, %v2057
      %v2122 = vmul.f32 %v2092, %v2058
      %v2123 = vmul.f32 %v2092, %v2059
      %v2124 = vmul.f32 %v2092, %v2060
      %v2125 = vmul.f32 %v2092, %v2061
      %2126 = vset.pattern.permute.xlu0 16
      %2127 = vperm.xlu0 %2126, %v651
      %v2128 = vpop.permute.xlu0 %2127
      %2130 = vset.pattern.permute.xlu0 16
      %2131 = vperm.xlu0 %2130, %v652
      %v2132 = vpop.permute.xlu0 %2131
      %2134 = vset.pattern.permute.xlu0 16
      %2135 = vperm.xlu0 %2134, %v653
      %v2136 = vpop.permute.xlu0 %2135
      %2138 = vset.pattern.permute.xlu0 16
      %2139 = vperm.xlu0 %2138, %v654
      %v2140 = vpop.permute.xlu0 %2139
      %2142 = vset.pattern.permute.xlu0 16
      %2143 = vperm.xlu0 %2142, %v655
      %v2144 = vpop.permute.xlu0 %2143
      %2146 = vset.pattern.permute.xlu0 16
      %2147 = vperm.xlu0 %2146, %v656
      %v2148 = vpop.permute.xlu0 %2147
      %2150 = vset.pattern.permute.xlu0 16
      %2151 = vperm.xlu0 %2150, %v657
      %v2152 = vpop.permute.xlu0 %2151
      %2154 = vset.pattern.permute.xlu0 16
      %2155 = vperm.xlu0 %2154, %v658
      %v2156 = vpop.permute.xlu0 %2155
      %v2158 = vadd.f32 %v2094, %v2128
      %v2159 = vadd.f32 %v2095, %v2128
      %v2160 = vadd.f32 %v2096, %v2128
      %v2161 = vadd.f32 %v2097, %v2128
      %v2162 = vadd.f32 %v2098, %v2132
      %v2163 = vadd.f32 %v2099, %v2132
      %v2164 = vadd.f32 %v2100, %v2132
      %v2165 = vadd.f32 %v2101, %v2132
      %v2166 = vadd.f32 %v2102, %v2136
      %v2167 = vadd.f32 %v2103, %v2136
      %v2168 = vadd.f32 %v2104, %v2136
      %v2169 = vadd.f32 %v2105, %v2136
      %v2170 = vadd.f32 %v2106, %v2140
      %v2171 = vadd.f32 %v2107, %v2140
      %v2172 = vadd.f32 %v2108, %v2140
      %v2173 = vadd.f32 %v2109, %v2140
      %v2174 = vadd.f32 %v2110, %v2144
      %v2175 = vadd.f32 %v2111, %v2144
      %v2176 = vadd.f32 %v2112, %v2144
      %v2177 = vadd.f32 %v2113, %v2144
      %v2178 = vadd.f32 %v2114, %v2148
      %v2179 = vadd.f32 %v2115, %v2148
      %v2180 = vadd.f32 %v2116, %v2148
      %v2181 = vadd.f32 %v2117, %v2148
      %v2182 = vadd.f32 %v2118, %v2152
      %v2183 = vadd.f32 %v2119, %v2152
      %v2184 = vadd.f32 %v2120, %v2152
      %v2185 = vadd.f32 %v2121, %v2152
      %v2186 = vadd.f32 %v2122, %v2156
      %v2187 = vadd.f32 %v2123, %v2156
      %v2188 = vadd.f32 %v2124, %v2156
      %v2189 = vadd.f32 %v2125, %v2156
      %v2190 = vmax.f32 %v2158, 0.0
      %v2191 = vmax.f32 %v2159, 0.0
      %v2192 = vmax.f32 %v2160, 0.0
      %v2193 = vmax.f32 %v2161, 0.0
      %v2194 = vmax.f32 %v2162, 0.0
      %v2195 = vmax.f32 %v2163, 0.0
      %v2196 = vmax.f32 %v2164, 0.0
      %v2197 = vmax.f32 %v2165, 0.0
      %v2198 = vmax.f32 %v2166, 0.0
      %v2199 = vmax.f32 %v2167, 0.0
      %v2200 = vmax.f32 %v2168, 0.0
      %v2201 = vmax.f32 %v2169, 0.0
      %v2202 = vmax.f32 %v2170, 0.0
      %v2203 = vmax.f32 %v2171, 0.0
      %v2204 = vmax.f32 %v2172, 0.0
      %v2205 = vmax.f32 %v2173, 0.0
      %v2206 = vmax.f32 %v2174, 0.0
      %v2207 = vmax.f32 %v2175, 0.0
      %v2208 = vmax.f32 %v2176, 0.0
      %v2209 = vmax.f32 %v2177, 0.0
      %v2210 = vmax.f32 %v2178, 0.0
      %v2211 = vmax.f32 %v2179, 0.0
      %v2212 = vmax.f32 %v2180, 0.0
      %v2213 = vmax.f32 %v2181, 0.0
      %v2214 = vmax.f32 %v2182, 0.0
      %v2215 = vmax.f32 %v2183, 0.0
      %v2216 = vmax.f32 %v2184, 0.0
      %v2217 = vmax.f32 %v2185, 0.0
      %v2218 = vmax.f32 %v2186, 0.0
      %v2219 = vmax.f32 %v2187, 0.0
      %v2220 = vmax.f32 %v2188, 0.0
      %v2221 = vmax.f32 %v2189, 0.0
      %s2222 = scalar_lea.vmem %s3, 64
      %v2223 = vld [vmem:[%s2222] sm:$0xf]
      %v2224 = vld [vmem:[%s2222 + $0x4] sm:$0xf]
      %v2225 = vld [vmem:[%s2222 + $0x8] sm:$0xf]
      %v2226 = vld [vmem:[%s2222 + $0xc] sm:$0xf]
      %v2227 = vld [vmem:[%s2222 + $0x10] sm:$0xf]
      %v2228 = vld [vmem:[%s2222 + $0x14] sm:$0xf]
      %v2229 = vld [vmem:[%s2222 + $0x18] sm:$0xf]
      %v2230 = vld [vmem:[%s2222 + $0x1c] sm:$0xf]
      %v2231 = vpack.c.bf16 %v2194, %v2190
      %v2232 = vpack.c.bf16 %v2195, %v2191
      %v2233 = vpack.c.bf16 %v2196, %v2192
      %v2234 = vpack.c.bf16 %v2197, %v2193
      %v2235 = vpack.c.bf16 %v2202, %v2198
      %v2236 = vpack.c.bf16 %v2203, %v2199
      %v2237 = vpack.c.bf16 %v2204, %v2200
      %v2238 = vpack.c.bf16 %v2205, %v2201
      %v2239 = vpack.c.bf16 %v2210, %v2206
      %v2240 = vpack.c.bf16 %v2211, %v2207
      %v2241 = vpack.c.bf16 %v2212, %v2208
      %v2242 = vpack.c.bf16 %v2213, %v2209
      %v2243 = vpack.c.bf16 %v2218, %v2214
      %v2244 = vpack.c.bf16 %v2219, %v2215
      %v2245 = vpack.c.bf16 %v2220, %v2216
      %v2246 = vpack.c.bf16 %v2221, %v2217
      %v2255 = vunpack.c.l.b16 %v2223
      %v2256 = vunpack.c.l.b16 %v2224
      %v2257 = vunpack.c.l.b16 %v2225
      %v2258 = vunpack.c.l.b16 %v2226
      %v2259 = vunpack.c.l.b16 %v2227
      %v2260 = vunpack.c.l.b16 %v2228
      %v2261 = vunpack.c.l.b16 %v2229
      %v2262 = vunpack.c.l.b16 %v2230
      %v2263 = vpack.c.b16 %v2256, %v2255
      %v2264 = vpack.c.b16 %v2258, %v2257
      %v2265 = vpack.c.b16 %v2260, %v2259
      %v2266 = vpack.c.b16 %v2262, %v2261
      %v2268 = vsel %vm871, %v2263, 0
      %v2271 = vsel %vm871, %v2264, 0
      %v2274 = vsel %vm871, %v2265, 0
      %v2277 = vsel %vm871, %v2266, 0
      %2279 = vmatpush.bf16.msra.mxu0 0
      %2280 = vmatpush.bf16.msra.mxu0 0
      %2281 = vmatpush.bf16.msra.mxu0 0
      %2282 = vmatpush.bf16.msra.mxu0 0
      %2283 = vmatpush.bf16.msra.mxu0 %v2243
      %2284 = vmatpush.bf16.msra.mxu0 %v2239
      %2285 = vmatpush.bf16.msra.mxu0 %v2235
      %2286 = vmatpush.bf16.msra.mxu0 %v2231
      %2287 = vmatmul.bf16.gmra.mxu0 %v2268
      %v2288 = vpop.f32.mrf.mxu0
      %v2289 = vadd.f32 0.0, %v2288
      %v2290 = vpop.f32.mrf.mxu0
      %v2291 = vadd.f32 0.0, %v2290
      %2292 = vmatmul.bf16.gmra.mxu0 %v2271
      %v2293 = vpop.f32.mrf.mxu0
      %v2294 = vadd.f32 0.0, %v2293
      %v2295 = vpop.f32.mrf.mxu0
      %v2296 = vadd.f32 0.0, %v2295
      %2297 = vmatmul.bf16.gmra.mxu0 %v2274
      %v2298 = vpop.f32.mrf.mxu0
      %v2299 = vadd.f32 0.0, %v2298
      %v2300 = vpop.f32.mrf.mxu0
      %v2301 = vadd.f32 0.0, %v2300
      %2302 = vmatmul.bf16.gmra.mxu0 %v2277
      %v2303 = vpop.f32.mrf.mxu0
      %v2304 = vadd.f32 0.0, %v2303
      %v2305 = vpop.f32.mrf.mxu0
      %v2306 = vadd.f32 0.0, %v2305
      %2307 = vdwg.mxu0
      %2308 = vmatpush.bf16.msra.mxu0 0
      %2309 = vmatpush.bf16.msra.mxu0 0
      %2310 = vmatpush.bf16.msra.mxu0 0
      %2311 = vmatpush.bf16.msra.mxu0 0
      %2312 = vmatpush.bf16.msra.mxu0 %v2244
      %2313 = vmatpush.bf16.msra.mxu0 %v2240
      %2314 = vmatpush.bf16.msra.mxu0 %v2236
      %2315 = vmatpush.bf16.msra.mxu0 %v2232
      %2316 = vmatmul.bf16.gmra.mxu0 %v2268
      %v2317 = vpop.f32.mrf.mxu0
      %v2318 = vadd.f32 0.0, %v2317
      %v2319 = vpop.f32.mrf.mxu0
      %v2320 = vadd.f32 0.0, %v2319
      %2321 = vmatmul.bf16.gmra.mxu0 %v2271
      %v2322 = vpop.f32.mrf.mxu0
      %v2323 = vadd.f32 0.0, %v2322
      %v2324 = vpop.f32.mrf.mxu0
      %v2325 = vadd.f32 0.0, %v2324
      %2326 = vmatmul.bf16.gmra.mxu0 %v2274
      %v2327 = vpop.f32.mrf.mxu0
      %v2328 = vadd.f32 0.0, %v2327
      %v2329 = vpop.f32.mrf.mxu0
      %v2330 = vadd.f32 0.0, %v2329
      %2331 = vmatmul.bf16.gmra.mxu0 %v2277
      %v2332 = vpop.f32.mrf.mxu0
      %v2333 = vadd.f32 0.0, %v2332
      %v2334 = vpop.f32.mrf.mxu0
      %v2335 = vadd.f32 0.0, %v2334
      %2336 = vdwg.mxu0
      %2337 = vmatpush.bf16.msra.mxu0 0
      %2338 = vmatpush.bf16.msra.mxu0 0
      %2339 = vmatpush.bf16.msra.mxu0 0
      %2340 = vmatpush.bf16.msra.mxu0 0
      %2341 = vmatpush.bf16.msra.mxu0 %v2245
      %2342 = vmatpush.bf16.msra.mxu0 %v2241
      %2343 = vmatpush.bf16.msra.mxu0 %v2237
      %2344 = vmatpush.bf16.msra.mxu0 %v2233
      %2345 = vmatmul.bf16.gmra.mxu0 %v2268
      %v2346 = vpop.f32.mrf.mxu0
      %v2347 = vadd.f32 0.0, %v2346
      %v2348 = vpop.f32.mrf.mxu0
      %v2349 = vadd.f32 0.0, %v2348
      %2350 = vmatmul.bf16.gmra.mxu0 %v2271
      %v2351 = vpop.f32.mrf.mxu0
      %v2352 = vadd.f32 0.0, %v2351
      %v2353 = vpop.f32.mrf.mxu0
      %v2354 = vadd.f32 0.0, %v2353
      %2355 = vmatmul.bf16.gmra.mxu0 %v2274
      %v2356 = vpop.f32.mrf.mxu0
      %v2357 = vadd.f32 0.0, %v2356
      %v2358 = vpop.f32.mrf.mxu0
      %v2359 = vadd.f32 0.0, %v2358
      %2360 = vmatmul.bf16.gmra.mxu0 %v2277
      %v2361 = vpop.f32.mrf.mxu0
      %v2362 = vadd.f32 0.0, %v2361
      %v2363 = vpop.f32.mrf.mxu0
      %v2364 = vadd.f32 0.0, %v2363
      %2365 = vdwg.mxu0
      %2366 = vmatpush.bf16.msra.mxu0 0
      %2367 = vmatpush.bf16.msra.mxu0 0
      %2368 = vmatpush.bf16.msra.mxu0 0
      %2369 = vmatpush.bf16.msra.mxu0 0
      %2370 = vmatpush.bf16.msra.mxu0 %v2246
      %2371 = vmatpush.bf16.msra.mxu0 %v2242
      %2372 = vmatpush.bf16.msra.mxu0 %v2238
      %2373 = vmatpush.bf16.msra.mxu0 %v2234
      %2374 = vmatmul.bf16.gmra.mxu0 %v2268
      %v2375 = vpop.f32.mrf.mxu0
      %v2376 = vadd.f32 0.0, %v2375
      %v2377 = vpop.f32.mrf.mxu0
      %v2378 = vadd.f32 0.0, %v2377
      %2379 = vmatmul.bf16.gmra.mxu0 %v2271
      %v2380 = vpop.f32.mrf.mxu0
      %v2381 = vadd.f32 0.0, %v2380
      %v2382 = vpop.f32.mrf.mxu0
      %v2383 = vadd.f32 0.0, %v2382
      %2384 = vmatmul.bf16.gmra.mxu0 %v2274
      %v2385 = vpop.f32.mrf.mxu0
      %v2386 = vadd.f32 0.0, %v2385
      %v2387 = vpop.f32.mrf.mxu0
      %v2388 = vadd.f32 0.0, %v2387
      %2389 = vmatmul.bf16.gmra.mxu0 %v2277
      %v2390 = vpop.f32.mrf.mxu0
      %v2391 = vadd.f32 0.0, %v2390
      %v2392 = vpop.f32.mrf.mxu0
      %v2393 = vadd.f32 0.0, %v2392
      %2394 = vdwg.mxu0
      %2395 = vset.pattern.permute.xlu0 5
      %2396 = vperm.xlu0 %2395, %v651
      %v2397 = vpop.permute.xlu0 %2396
      %2399 = vset.pattern.permute.xlu0 5
      %2400 = vperm.xlu0 %2399, %v652
      %v2401 = vpop.permute.xlu0 %2400
      %2403 = vset.pattern.permute.xlu0 5
      %2404 = vperm.xlu0 %2403, %v653
      %v2405 = vpop.permute.xlu0 %2404
      %2407 = vset.pattern.permute.xlu0 5
      %2408 = vperm.xlu0 %2407, %v654
      %v2409 = vpop.permute.xlu0 %2408
      %2411 = vset.pattern.permute.xlu0 5
      %2412 = vperm.xlu0 %2411, %v655
      %v2413 = vpop.permute.xlu0 %2412
      %2415 = vset.pattern.permute.xlu0 5
      %2416 = vperm.xlu0 %2415, %v656
      %v2417 = vpop.permute.xlu0 %2416
      %2419 = vset.pattern.permute.xlu0 5
      %2420 = vperm.xlu0 %2419, %v657
      %v2421 = vpop.permute.xlu0 %2420
      %2423 = vset.pattern.permute.xlu0 5
      %2424 = vperm.xlu0 %2423, %v658
      %v2425 = vpop.permute.xlu0 %2424
      %v2427 = vmul.f32 %v2397, %v2289
      %v2428 = vmul.f32 %v2397, %v2318
      %v2429 = vmul.f32 %v2397, %v2347
      %v2430 = vmul.f32 %v2397, %v2376
      %v2431 = vmul.f32 %v2401, %v2291
      %v2432 = vmul.f32 %v2401, %v2320
      %v2433 = vmul.f32 %v2401, %v2349
      %v2434 = vmul.f32 %v2401, %v2378
      %v2435 = vmul.f32 %v2405, %v2294
      %v2436 = vmul.f32 %v2405, %v2323
      %v2437 = vmul.f32 %v2405, %v2352
      %v2438 = vmul.f32 %v2405, %v2381
      %v2439 = vmul.f32 %v2409, %v2296
      %v2440 = vmul.f32 %v2409, %v2325
      %v2441 = vmul.f32 %v2409, %v2354
      %v2442 = vmul.f32 %v2409, %v2383
      %v2443 = vmul.f32 %v2413, %v2299
      %v2444 = vmul.f32 %v2413, %v2328
      %v2445 = vmul.f32 %v2413, %v2357
      %v2446 = vmul.f32 %v2413, %v2386
      %v2447 = vmul.f32 %v2417, %v2301
      %v2448 = vmul.f32 %v2417, %v2330
      %v2449 = vmul.f32 %v2417, %v2359
      %v2450 = vmul.f32 %v2417, %v2388
      %v2451 = vmul.f32 %v2421, %v2304
      %v2452 = vmul.f32 %v2421, %v2333
      %v2453 = vmul.f32 %v2421, %v2362
      %v2454 = vmul.f32 %v2421, %v2391
      %v2455 = vmul.f32 %v2425, %v2306
      %v2456 = vmul.f32 %v2425, %v2335
      %v2457 = vmul.f32 %v2425, %v2364
      %v2458 = vmul.f32 %v2425, %v2393
      %2459 = vset.pattern.permute.xlu0 17
      %2460 = vperm.xlu0 %2459, %v651
      %v2461 = vpop.permute.xlu0 %2460
      %2463 = vset.pattern.permute.xlu0 17
      %2464 = vperm.xlu0 %2463, %v652
      %v2465 = vpop.permute.xlu0 %2464
      %2467 = vset.pattern.permute.xlu0 17
      %2468 = vperm.xlu0 %2467, %v653
      %v2469 = vpop.permute.xlu0 %2468
      %2471 = vset.pattern.permute.xlu0 17
      %2472 = vperm.xlu0 %2471, %v654
      %v2473 = vpop.permute.xlu0 %2472
      %2475 = vset.pattern.permute.xlu0 17
      %2476 = vperm.xlu0 %2475, %v655
      %v2477 = vpop.permute.xlu0 %2476
      %2479 = vset.pattern.permute.xlu0 17
      %2480 = vperm.xlu0 %2479, %v656
      %v2481 = vpop.permute.xlu0 %2480
      %2483 = vset.pattern.permute.xlu0 17
      %2484 = vperm.xlu0 %2483, %v657
      %v2485 = vpop.permute.xlu0 %2484
      %2487 = vset.pattern.permute.xlu0 17
      %2488 = vperm.xlu0 %2487, %v658
      %v2489 = vpop.permute.xlu0 %2488
      %v2491 = vadd.f32 %v2427, %v2461
      %v2492 = vadd.f32 %v2428, %v2461
      %v2493 = vadd.f32 %v2429, %v2461
      %v2494 = vadd.f32 %v2430, %v2461
      %v2495 = vadd.f32 %v2431, %v2465
      %v2496 = vadd.f32 %v2432, %v2465
      %v2497 = vadd.f32 %v2433, %v2465
      %v2498 = vadd.f32 %v2434, %v2465
      %v2499 = vadd.f32 %v2435, %v2469
      %v2500 = vadd.f32 %v2436, %v2469
      %v2501 = vadd.f32 %v2437, %v2469
      %v2502 = vadd.f32 %v2438, %v2469
      %v2503 = vadd.f32 %v2439, %v2473
      %v2504 = vadd.f32 %v2440, %v2473
      %v2505 = vadd.f32 %v2441, %v2473
      %v2506 = vadd.f32 %v2442, %v2473
      %v2507 = vadd.f32 %v2443, %v2477
      %v2508 = vadd.f32 %v2444, %v2477
      %v2509 = vadd.f32 %v2445, %v2477
      %v2510 = vadd.f32 %v2446, %v2477
      %v2511 = vadd.f32 %v2447, %v2481
      %v2512 = vadd.f32 %v2448, %v2481
      %v2513 = vadd.f32 %v2449, %v2481
      %v2514 = vadd.f32 %v2450, %v2481
      %v2515 = vadd.f32 %v2451, %v2485
      %v2516 = vadd.f32 %v2452, %v2485
      %v2517 = vadd.f32 %v2453, %v2485
      %v2518 = vadd.f32 %v2454, %v2485
      %v2519 = vadd.f32 %v2455, %v2489
      %v2520 = vadd.f32 %v2456, %v2489
      %v2521 = vadd.f32 %v2457, %v2489
      %v2522 = vadd.f32 %v2458, %v2489
      %v2523 = vmax.f32 %v2491, 0.0
      %v2524 = vmax.f32 %v2492, 0.0
      %v2525 = vmax.f32 %v2493, 0.0
      %v2526 = vmax.f32 %v2494, 0.0
      %v2527 = vmax.f32 %v2495, 0.0
      %v2528 = vmax.f32 %v2496, 0.0
      %v2529 = vmax.f32 %v2497, 0.0
      %v2530 = vmax.f32 %v2498, 0.0
      %v2531 = vmax.f32 %v2499, 0.0
      %v2532 = vmax.f32 %v2500, 0.0
      %v2533 = vmax.f32 %v2501, 0.0
      %v2534 = vmax.f32 %v2502, 0.0
      %v2535 = vmax.f32 %v2503, 0.0
      %v2536 = vmax.f32 %v2504, 0.0
      %v2537 = vmax.f32 %v2505, 0.0
      %v2538 = vmax.f32 %v2506, 0.0
      %v2539 = vmax.f32 %v2507, 0.0
      %v2540 = vmax.f32 %v2508, 0.0
      %v2541 = vmax.f32 %v2509, 0.0
      %v2542 = vmax.f32 %v2510, 0.0
      %v2543 = vmax.f32 %v2511, 0.0
      %v2544 = vmax.f32 %v2512, 0.0
      %v2545 = vmax.f32 %v2513, 0.0
      %v2546 = vmax.f32 %v2514, 0.0
      %v2547 = vmax.f32 %v2515, 0.0
      %v2548 = vmax.f32 %v2516, 0.0
      %v2549 = vmax.f32 %v2517, 0.0
      %v2550 = vmax.f32 %v2518, 0.0
      %v2551 = vmax.f32 %v2519, 0.0
      %v2552 = vmax.f32 %v2520, 0.0
      %v2553 = vmax.f32 %v2521, 0.0
      %v2554 = vmax.f32 %v2522, 0.0
      %s2555 = scalar_lea.vmem %s4, 64
      %v2556 = vld [vmem:[%s2555] sm:$0xf]
      %v2557 = vld [vmem:[%s2555 + $0x4] sm:$0xf]
      %v2558 = vld [vmem:[%s2555 + $0x8] sm:$0xf]
      %v2559 = vld [vmem:[%s2555 + $0xc] sm:$0xf]
      %v2560 = vld [vmem:[%s2555 + $0x10] sm:$0xf]
      %v2561 = vld [vmem:[%s2555 + $0x14] sm:$0xf]
      %v2562 = vld [vmem:[%s2555 + $0x18] sm:$0xf]
      %v2563 = vld [vmem:[%s2555 + $0x1c] sm:$0xf]
      %v2564 = vpack.c.bf16 %v2527, %v2523
      %v2565 = vpack.c.bf16 %v2528, %v2524
      %v2566 = vpack.c.bf16 %v2529, %v2525
      %v2567 = vpack.c.bf16 %v2530, %v2526
      %v2568 = vpack.c.bf16 %v2535, %v2531
      %v2569 = vpack.c.bf16 %v2536, %v2532
      %v2570 = vpack.c.bf16 %v2537, %v2533
      %v2571 = vpack.c.bf16 %v2538, %v2534
      %v2572 = vpack.c.bf16 %v2543, %v2539
      %v2573 = vpack.c.bf16 %v2544, %v2540
      %v2574 = vpack.c.bf16 %v2545, %v2541
      %v2575 = vpack.c.bf16 %v2546, %v2542
      %v2576 = vpack.c.bf16 %v2551, %v2547
      %v2577 = vpack.c.bf16 %v2552, %v2548
      %v2578 = vpack.c.bf16 %v2553, %v2549
      %v2579 = vpack.c.bf16 %v2554, %v2550
      %v2588 = vunpack.c.l.b16 %v2556
      %v2589 = vunpack.c.l.b16 %v2557
      %v2590 = vunpack.c.l.b16 %v2558
      %v2591 = vunpack.c.l.b16 %v2559
      %v2592 = vunpack.c.l.b16 %v2560
      %v2593 = vunpack.c.l.b16 %v2561
      %v2594 = vunpack.c.l.b16 %v2562
      %v2595 = vunpack.c.l.b16 %v2563
      %v2596 = vpack.c.b16 %v2589, %v2588
      %v2597 = vpack.c.b16 %v2591, %v2590
      %v2598 = vpack.c.b16 %v2593, %v2592
      %v2599 = vpack.c.b16 %v2595, %v2594
      %v2601 = vsel %vm871, %v2596, 0
      %v2604 = vsel %vm871, %v2597, 0
      %v2607 = vsel %vm871, %v2598, 0
      %v2610 = vsel %vm871, %v2599, 0
      %2612 = vmatpush.bf16.msra.mxu0 0
      %2613 = vmatpush.bf16.msra.mxu0 0
      %2614 = vmatpush.bf16.msra.mxu0 0
      %2615 = vmatpush.bf16.msra.mxu0 0
      %2616 = vmatpush.bf16.msra.mxu0 %v2576
      %2617 = vmatpush.bf16.msra.mxu0 %v2572
      %2618 = vmatpush.bf16.msra.mxu0 %v2568
      %2619 = vmatpush.bf16.msra.mxu0 %v2564
      %2620 = vmatmul.bf16.gmra.mxu0 %v2601
      %v2621 = vpop.f32.mrf.mxu0
      %v2622 = vadd.f32 0.0, %v2621
      %v2623 = vpop.f32.mrf.mxu0
      %v2624 = vadd.f32 0.0, %v2623
      %2625 = vmatmul.bf16.gmra.mxu0 %v2604
      %v2626 = vpop.f32.mrf.mxu0
      %v2627 = vadd.f32 0.0, %v2626
      %v2628 = vpop.f32.mrf.mxu0
      %v2629 = vadd.f32 0.0, %v2628
      %2630 = vmatmul.bf16.gmra.mxu0 %v2607
      %v2631 = vpop.f32.mrf.mxu0
      %v2632 = vadd.f32 0.0, %v2631
      %v2633 = vpop.f32.mrf.mxu0
      %v2634 = vadd.f32 0.0, %v2633
      %2635 = vmatmul.bf16.gmra.mxu0 %v2610
      %v2636 = vpop.f32.mrf.mxu0
      %v2637 = vadd.f32 0.0, %v2636
      %v2638 = vpop.f32.mrf.mxu0
      %v2639 = vadd.f32 0.0, %v2638
      %2640 = vdwg.mxu0
      %2641 = vmatpush.bf16.msra.mxu0 0
      %2642 = vmatpush.bf16.msra.mxu0 0
      %2643 = vmatpush.bf16.msra.mxu0 0
      %2644 = vmatpush.bf16.msra.mxu0 0
      %2645 = vmatpush.bf16.msra.mxu0 %v2577
      %2646 = vmatpush.bf16.msra.mxu0 %v2573
      %2647 = vmatpush.bf16.msra.mxu0 %v2569
      %2648 = vmatpush.bf16.msra.mxu0 %v2565
      %2649 = vmatmul.bf16.gmra.mxu0 %v2601
      %v2650 = vpop.f32.mrf.mxu0
      %v2651 = vadd.f32 0.0, %v2650
      %v2652 = vpop.f32.mrf.mxu0
      %v2653 = vadd.f32 0.0, %v2652
      %2654 = vmatmul.bf16.gmra.mxu0 %v2604
      %v2655 = vpop.f32.mrf.mxu0
      %v2656 = vadd.f32 0.0, %v2655
      %v2657 = vpop.f32.mrf.mxu0
      %v2658 = vadd.f32 0.0, %v2657
      %2659 = vmatmul.bf16.gmra.mxu0 %v2607
      %v2660 = vpop.f32.mrf.mxu0
      %v2661 = vadd.f32 0.0, %v2660
      %v2662 = vpop.f32.mrf.mxu0
      %v2663 = vadd.f32 0.0, %v2662
      %2664 = vmatmul.bf16.gmra.mxu0 %v2610
      %v2665 = vpop.f32.mrf.mxu0
      %v2666 = vadd.f32 0.0, %v2665
      %v2667 = vpop.f32.mrf.mxu0
      %v2668 = vadd.f32 0.0, %v2667
      %2669 = vdwg.mxu0
      %2670 = vmatpush.bf16.msra.mxu0 0
      %2671 = vmatpush.bf16.msra.mxu0 0
      %2672 = vmatpush.bf16.msra.mxu0 0
      %2673 = vmatpush.bf16.msra.mxu0 0
      %2674 = vmatpush.bf16.msra.mxu0 %v2578
      %2675 = vmatpush.bf16.msra.mxu0 %v2574
      %2676 = vmatpush.bf16.msra.mxu0 %v2570
      %2677 = vmatpush.bf16.msra.mxu0 %v2566
      %2678 = vmatmul.bf16.gmra.mxu0 %v2601
      %v2679 = vpop.f32.mrf.mxu0
      %v2680 = vadd.f32 0.0, %v2679
      %v2681 = vpop.f32.mrf.mxu0
      %v2682 = vadd.f32 0.0, %v2681
      %2683 = vmatmul.bf16.gmra.mxu0 %v2604
      %v2684 = vpop.f32.mrf.mxu0
      %v2685 = vadd.f32 0.0, %v2684
      %v2686 = vpop.f32.mrf.mxu0
      %v2687 = vadd.f32 0.0, %v2686
      %2688 = vmatmul.bf16.gmra.mxu0 %v2607
      %v2689 = vpop.f32.mrf.mxu0
      %v2690 = vadd.f32 0.0, %v2689
      %v2691 = vpop.f32.mrf.mxu0
      %v2692 = vadd.f32 0.0, %v2691
      %2693 = vmatmul.bf16.gmra.mxu0 %v2610
      %v2694 = vpop.f32.mrf.mxu0
      %v2695 = vadd.f32 0.0, %v2694
      %v2696 = vpop.f32.mrf.mxu0
      %v2697 = vadd.f32 0.0, %v2696
      %2698 = vdwg.mxu0
      %2699 = vmatpush.bf16.msra.mxu0 0
      %2700 = vmatpush.bf16.msra.mxu0 0
      %2701 = vmatpush.bf16.msra.mxu0 0
      %2702 = vmatpush.bf16.msra.mxu0 0
      %2703 = vmatpush.bf16.msra.mxu0 %v2579
      %2704 = vmatpush.bf16.msra.mxu0 %v2575
      %2705 = vmatpush.bf16.msra.mxu0 %v2571
      %2706 = vmatpush.bf16.msra.mxu0 %v2567
      %2707 = vmatmul.bf16.gmra.mxu0 %v2601
      %v2708 = vpop.f32.mrf.mxu0
      %v2709 = vadd.f32 0.0, %v2708
      %v2710 = vpop.f32.mrf.mxu0
      %v2711 = vadd.f32 0.0, %v2710
      %2712 = vmatmul.bf16.gmra.mxu0 %v2604
      %v2713 = vpop.f32.mrf.mxu0
      %v2714 = vadd.f32 0.0, %v2713
      %v2715 = vpop.f32.mrf.mxu0
      %v2716 = vadd.f32 0.0, %v2715
      %2717 = vmatmul.bf16.gmra.mxu0 %v2607
      %v2718 = vpop.f32.mrf.mxu0
      %v2719 = vadd.f32 0.0, %v2718
      %v2720 = vpop.f32.mrf.mxu0
      %v2721 = vadd.f32 0.0, %v2720
      %2722 = vmatmul.bf16.gmra.mxu0 %v2610
      %v2723 = vpop.f32.mrf.mxu0
      %v2724 = vadd.f32 0.0, %v2723
      %v2725 = vpop.f32.mrf.mxu0
      %v2726 = vadd.f32 0.0, %v2725
      %2727 = vdwg.mxu0
      %v2728 = vadd.f32 %v2030, %v2622
      %v2729 = vadd.f32 %v2031, %v2651
      %v2730 = vadd.f32 %v2032, %v2680
      %v2731 = vadd.f32 %v2033, %v2709
      %v2732 = vadd.f32 %v2034, %v2624
      %v2733 = vadd.f32 %v2035, %v2653
      %v2734 = vadd.f32 %v2036, %v2682
      %v2735 = vadd.f32 %v2037, %v2711
      %v2736 = vadd.f32 %v2038, %v2627
      %v2737 = vadd.f32 %v2039, %v2656
      %v2738 = vadd.f32 %v2040, %v2685
      %v2739 = vadd.f32 %v2041, %v2714
      %v2740 = vadd.f32 %v2042, %v2629
      %v2741 = vadd.f32 %v2043, %v2658
      %v2742 = vadd.f32 %v2044, %v2687
      %v2743 = vadd.f32 %v2045, %v2716
      %v2744 = vadd.f32 %v2046, %v2632
      %v2745 = vadd.f32 %v2047, %v2661
      %v2746 = vadd.f32 %v2048, %v2690
      %v2747 = vadd.f32 %v2049, %v2719
      %v2748 = vadd.f32 %v2050, %v2634
      %v2749 = vadd.f32 %v2051, %v2663
      %v2750 = vadd.f32 %v2052, %v2692
      %v2751 = vadd.f32 %v2053, %v2721
      %v2752 = vadd.f32 %v2054, %v2637
      %v2753 = vadd.f32 %v2055, %v2666
      %v2754 = vadd.f32 %v2056, %v2695
      %v2755 = vadd.f32 %v2057, %v2724
      %v2756 = vadd.f32 %v2058, %v2639
      %v2757 = vadd.f32 %v2059, %v2668
      %v2758 = vadd.f32 %v2060, %v2697
      %v2759 = vadd.f32 %v2061, %v2726
      %2760 = vset.pattern.permute.xlu0 6
      %2761 = vperm.xlu0 %2760, %v651
      %v2762 = vpop.permute.xlu0 %2761
      %2764 = vset.pattern.permute.xlu0 6
      %2765 = vperm.xlu0 %2764, %v652
      %v2766 = vpop.permute.xlu0 %2765
      %2768 = vset.pattern.permute.xlu0 6
      %2769 = vperm.xlu0 %2768, %v653
      %v2770 = vpop.permute.xlu0 %2769
      %2772 = vset.pattern.permute.xlu0 6
      %2773 = vperm.xlu0 %2772, %v654
      %v2774 = vpop.permute.xlu0 %2773
      %2776 = vset.pattern.permute.xlu0 6
      %2777 = vperm.xlu0 %2776, %v655
      %v2778 = vpop.permute.xlu0 %2777
      %2780 = vset.pattern.permute.xlu0 6
      %2781 = vperm.xlu0 %2780, %v656
      %v2782 = vpop.permute.xlu0 %2781
      %2784 = vset.pattern.permute.xlu0 6
      %2785 = vperm.xlu0 %2784, %v657
      %v2786 = vpop.permute.xlu0 %2785
      %2788 = vset.pattern.permute.xlu0 6
      %2789 = vperm.xlu0 %2788, %v658
      %v2790 = vpop.permute.xlu0 %2789
      %v2792 = vmul.f32 %v2762, %v2728
      %v2793 = vmul.f32 %v2762, %v2729
      %v2794 = vmul.f32 %v2762, %v2730
      %v2795 = vmul.f32 %v2762, %v2731
      %v2796 = vmul.f32 %v2766, %v2732
      %v2797 = vmul.f32 %v2766, %v2733
      %v2798 = vmul.f32 %v2766, %v2734
      %v2799 = vmul.f32 %v2766, %v2735
      %v2800 = vmul.f32 %v2770, %v2736
      %v2801 = vmul.f32 %v2770, %v2737
      %v2802 = vmul.f32 %v2770, %v2738
      %v2803 = vmul.f32 %v2770, %v2739
      %v2804 = vmul.f32 %v2774, %v2740
      %v2805 = vmul.f32 %v2774, %v2741
      %v2806 = vmul.f32 %v2774, %v2742
      %v2807 = vmul.f32 %v2774, %v2743
      %v2808 = vmul.f32 %v2778, %v2744
      %v2809 = vmul.f32 %v2778, %v2745
      %v2810 = vmul.f32 %v2778, %v2746
      %v2811 = vmul.f32 %v2778, %v2747
      %v2812 = vmul.f32 %v2782, %v2748
      %v2813 = vmul.f32 %v2782, %v2749
      %v2814 = vmul.f32 %v2782, %v2750
      %v2815 = vmul.f32 %v2782, %v2751
      %v2816 = vmul.f32 %v2786, %v2752
      %v2817 = vmul.f32 %v2786, %v2753
      %v2818 = vmul.f32 %v2786, %v2754
      %v2819 = vmul.f32 %v2786, %v2755
      %v2820 = vmul.f32 %v2790, %v2756
      %v2821 = vmul.f32 %v2790, %v2757
      %v2822 = vmul.f32 %v2790, %v2758
      %v2823 = vmul.f32 %v2790, %v2759
      %2824 = vset.pattern.permute.xlu0 18
      %2825 = vperm.xlu0 %2824, %v651
      %v2826 = vpop.permute.xlu0 %2825
      %2828 = vset.pattern.permute.xlu0 18
      %2829 = vperm.xlu0 %2828, %v652
      %v2830 = vpop.permute.xlu0 %2829
      %2832 = vset.pattern.permute.xlu0 18
      %2833 = vperm.xlu0 %2832, %v653
      %v2834 = vpop.permute.xlu0 %2833
      %2836 = vset.pattern.permute.xlu0 18
      %2837 = vperm.xlu0 %2836, %v654
      %v2838 = vpop.permute.xlu0 %2837
      %2840 = vset.pattern.permute.xlu0 18
      %2841 = vperm.xlu0 %2840, %v655
      %v2842 = vpop.permute.xlu0 %2841
      %2844 = vset.pattern.permute.xlu0 18
      %2845 = vperm.xlu0 %2844, %v656
      %v2846 = vpop.permute.xlu0 %2845
      %2848 = vset.pattern.permute.xlu0 18
      %2849 = vperm.xlu0 %2848, %v657
      %v2850 = vpop.permute.xlu0 %2849
      %2852 = vset.pattern.permute.xlu0 18
      %2853 = vperm.xlu0 %2852, %v658
      %v2854 = vpop.permute.xlu0 %2853
      %v2856 = vadd.f32 %v2792, %v2826
      %v2857 = vadd.f32 %v2793, %v2826
      %v2858 = vadd.f32 %v2794, %v2826
      %v2859 = vadd.f32 %v2795, %v2826
      %v2860 = vadd.f32 %v2796, %v2830
      %v2861 = vadd.f32 %v2797, %v2830
      %v2862 = vadd.f32 %v2798, %v2830
      %v2863 = vadd.f32 %v2799, %v2830
      %v2864 = vadd.f32 %v2800, %v2834
      %v2865 = vadd.f32 %v2801, %v2834
      %v2866 = vadd.f32 %v2802, %v2834
      %v2867 = vadd.f32 %v2803, %v2834
      %v2868 = vadd.f32 %v2804, %v2838
      %v2869 = vadd.f32 %v2805, %v2838
      %v2870 = vadd.f32 %v2806, %v2838
      %v2871 = vadd.f32 %v2807, %v2838
      %v2872 = vadd.f32 %v2808, %v2842
      %v2873 = vadd.f32 %v2809, %v2842
      %v2874 = vadd.f32 %v2810, %v2842
      %v2875 = vadd.f32 %v2811, %v2842
      %v2876 = vadd.f32 %v2812, %v2846
      %v2877 = vadd.f32 %v2813, %v2846
      %v2878 = vadd.f32 %v2814, %v2846
      %v2879 = vadd.f32 %v2815, %v2846
      %v2880 = vadd.f32 %v2816, %v2850
      %v2881 = vadd.f32 %v2817, %v2850
      %v2882 = vadd.f32 %v2818, %v2850
      %v2883 = vadd.f32 %v2819, %v2850
      %v2884 = vadd.f32 %v2820, %v2854
      %v2885 = vadd.f32 %v2821, %v2854
      %v2886 = vadd.f32 %v2822, %v2854
      %v2887 = vadd.f32 %v2823, %v2854
      %v2888 = vmax.f32 %v2856, 0.0
      %v2889 = vmax.f32 %v2857, 0.0
      %v2890 = vmax.f32 %v2858, 0.0
      %v2891 = vmax.f32 %v2859, 0.0
      %v2892 = vmax.f32 %v2860, 0.0
      %v2893 = vmax.f32 %v2861, 0.0
      %v2894 = vmax.f32 %v2862, 0.0
      %v2895 = vmax.f32 %v2863, 0.0
      %v2896 = vmax.f32 %v2864, 0.0
      %v2897 = vmax.f32 %v2865, 0.0
      %v2898 = vmax.f32 %v2866, 0.0
      %v2899 = vmax.f32 %v2867, 0.0
      %v2900 = vmax.f32 %v2868, 0.0
      %v2901 = vmax.f32 %v2869, 0.0
      %v2902 = vmax.f32 %v2870, 0.0
      %v2903 = vmax.f32 %v2871, 0.0
      %v2904 = vmax.f32 %v2872, 0.0
      %v2905 = vmax.f32 %v2873, 0.0
      %v2906 = vmax.f32 %v2874, 0.0
      %v2907 = vmax.f32 %v2875, 0.0
      %v2908 = vmax.f32 %v2876, 0.0
      %v2909 = vmax.f32 %v2877, 0.0
      %v2910 = vmax.f32 %v2878, 0.0
      %v2911 = vmax.f32 %v2879, 0.0
      %v2912 = vmax.f32 %v2880, 0.0
      %v2913 = vmax.f32 %v2881, 0.0
      %v2914 = vmax.f32 %v2882, 0.0
      %v2915 = vmax.f32 %v2883, 0.0
      %v2916 = vmax.f32 %v2884, 0.0
      %v2917 = vmax.f32 %v2885, 0.0
      %v2918 = vmax.f32 %v2886, 0.0
      %v2919 = vmax.f32 %v2887, 0.0
      %s2920 = scalar_lea.vmem %s3, 96
      %v2921 = vld [vmem:[%s2920] sm:$0xf]
      %v2922 = vld [vmem:[%s2920 + $0x4] sm:$0xf]
      %v2923 = vld [vmem:[%s2920 + $0x8] sm:$0xf]
      %v2924 = vld [vmem:[%s2920 + $0xc] sm:$0xf]
      %v2925 = vld [vmem:[%s2920 + $0x10] sm:$0xf]
      %v2926 = vld [vmem:[%s2920 + $0x14] sm:$0xf]
      %v2927 = vld [vmem:[%s2920 + $0x18] sm:$0xf]
      %v2928 = vld [vmem:[%s2920 + $0x1c] sm:$0xf]
      %v2929 = vpack.c.bf16 %v2892, %v2888
      %v2930 = vpack.c.bf16 %v2893, %v2889
      %v2931 = vpack.c.bf16 %v2894, %v2890
      %v2932 = vpack.c.bf16 %v2895, %v2891
      %v2933 = vpack.c.bf16 %v2900, %v2896
      %v2934 = vpack.c.bf16 %v2901, %v2897
      %v2935 = vpack.c.bf16 %v2902, %v2898
      %v2936 = vpack.c.bf16 %v2903, %v2899
      %v2937 = vpack.c.bf16 %v2908, %v2904
      %v2938 = vpack.c.bf16 %v2909, %v2905
      %v2939 = vpack.c.bf16 %v2910, %v2906
      %v2940 = vpack.c.bf16 %v2911, %v2907
      %v2941 = vpack.c.bf16 %v2916, %v2912
      %v2942 = vpack.c.bf16 %v2917, %v2913
      %v2943 = vpack.c.bf16 %v2918, %v2914
      %v2944 = vpack.c.bf16 %v2919, %v2915
      %v2953 = vunpack.c.l.b16 %v2921
      %v2954 = vunpack.c.l.b16 %v2922
      %v2955 = vunpack.c.l.b16 %v2923
      %v2956 = vunpack.c.l.b16 %v2924
      %v2957 = vunpack.c.l.b16 %v2925
      %v2958 = vunpack.c.l.b16 %v2926
      %v2959 = vunpack.c.l.b16 %v2927
      %v2960 = vunpack.c.l.b16 %v2928
      %v2961 = vpack.c.b16 %v2954, %v2953
      %v2962 = vpack.c.b16 %v2956, %v2955
      %v2963 = vpack.c.b16 %v2958, %v2957
      %v2964 = vpack.c.b16 %v2960, %v2959
      %v2966 = vsel %vm871, %v2961, 0
      %v2969 = vsel %vm871, %v2962, 0
      %v2972 = vsel %vm871, %v2963, 0
      %v2975 = vsel %vm871, %v2964, 0
      %2977 = vmatpush.bf16.msra.mxu0 0
      %2978 = vmatpush.bf16.msra.mxu0 0
      %2979 = vmatpush.bf16.msra.mxu0 0
      %2980 = vmatpush.bf16.msra.mxu0 0
      %2981 = vmatpush.bf16.msra.mxu0 %v2941
      %2982 = vmatpush.bf16.msra.mxu0 %v2937
      %2983 = vmatpush.bf16.msra.mxu0 %v2933
      %2984 = vmatpush.bf16.msra.mxu0 %v2929
      %2985 = vmatmul.bf16.gmra.mxu0 %v2966
      %v2986 = vpop.f32.mrf.mxu0
      %v2987 = vadd.f32 0.0, %v2986
      %v2988 = vpop.f32.mrf.mxu0
      %v2989 = vadd.f32 0.0, %v2988
      %2990 = vmatmul.bf16.gmra.mxu0 %v2969
      %v2991 = vpop.f32.mrf.mxu0
      %v2992 = vadd.f32 0.0, %v2991
      %v2993 = vpop.f32.mrf.mxu0
      %v2994 = vadd.f32 0.0, %v2993
      %2995 = vmatmul.bf16.gmra.mxu0 %v2972
      %v2996 = vpop.f32.mrf.mxu0
      %v2997 = vadd.f32 0.0, %v2996
      %v2998 = vpop.f32.mrf.mxu0
      %v2999 = vadd.f32 0.0, %v2998
      %3000 = vmatmul.bf16.gmra.mxu0 %v2975
      %v3001 = vpop.f32.mrf.mxu0
      %v3002 = vadd.f32 0.0, %v3001
      %v3003 = vpop.f32.mrf.mxu0
      %v3004 = vadd.f32 0.0, %v3003
      %3005 = vdwg.mxu0
      %3006 = vmatpush.bf16.msra.mxu0 0
      %3007 = vmatpush.bf16.msra.mxu0 0
      %3008 = vmatpush.bf16.msra.mxu0 0
      %3009 = vmatpush.bf16.msra.mxu0 0
      %3010 = vmatpush.bf16.msra.mxu0 %v2942
      %3011 = vmatpush.bf16.msra.mxu0 %v2938
      %3012 = vmatpush.bf16.msra.mxu0 %v2934
      %3013 = vmatpush.bf16.msra.mxu0 %v2930
      %3014 = vmatmul.bf16.gmra.mxu0 %v2966
      %v3015 = vpop.f32.mrf.mxu0
      %v3016 = vadd.f32 0.0, %v3015
      %v3017 = vpop.f32.mrf.mxu0
      %v3018 = vadd.f32 0.0, %v3017
      %3019 = vmatmul.bf16.gmra.mxu0 %v2969
      %v3020 = vpop.f32.mrf.mxu0
      %v3021 = vadd.f32 0.0, %v3020
      %v3022 = vpop.f32.mrf.mxu0
      %v3023 = vadd.f32 0.0, %v3022
      %3024 = vmatmul.bf16.gmra.mxu0 %v2972
      %v3025 = vpop.f32.mrf.mxu0
      %v3026 = vadd.f32 0.0, %v3025
      %v3027 = vpop.f32.mrf.mxu0
      %v3028 = vadd.f32 0.0, %v3027
      %3029 = vmatmul.bf16.gmra.mxu0 %v2975
      %v3030 = vpop.f32.mrf.mxu0
      %v3031 = vadd.f32 0.0, %v3030
      %v3032 = vpop.f32.mrf.mxu0
      %v3033 = vadd.f32 0.0, %v3032
      %3034 = vdwg.mxu0
      %3035 = vmatpush.bf16.msra.mxu0 0
      %3036 = vmatpush.bf16.msra.mxu0 0
      %3037 = vmatpush.bf16.msra.mxu0 0
      %3038 = vmatpush.bf16.msra.mxu0 0
      %3039 = vmatpush.bf16.msra.mxu0 %v2943
      %3040 = vmatpush.bf16.msra.mxu0 %v2939
      %3041 = vmatpush.bf16.msra.mxu0 %v2935
      %3042 = vmatpush.bf16.msra.mxu0 %v2931
      %3043 = vmatmul.bf16.gmra.mxu0 %v2966
      %v3044 = vpop.f32.mrf.mxu0
      %v3045 = vadd.f32 0.0, %v3044
      %v3046 = vpop.f32.mrf.mxu0
      %v3047 = vadd.f32 0.0, %v3046
      %3048 = vmatmul.bf16.gmra.mxu0 %v2969
      %v3049 = vpop.f32.mrf.mxu0
      %v3050 = vadd.f32 0.0, %v3049
      %v3051 = vpop.f32.mrf.mxu0
      %v3052 = vadd.f32 0.0, %v3051
      %3053 = vmatmul.bf16.gmra.mxu0 %v2972
      %v3054 = vpop.f32.mrf.mxu0
      %v3055 = vadd.f32 0.0, %v3054
      %v3056 = vpop.f32.mrf.mxu0
      %v3057 = vadd.f32 0.0, %v3056
      %3058 = vmatmul.bf16.gmra.mxu0 %v2975
      %v3059 = vpop.f32.mrf.mxu0
      %v3060 = vadd.f32 0.0, %v3059
      %v3061 = vpop.f32.mrf.mxu0
      %v3062 = vadd.f32 0.0, %v3061
      %3063 = vdwg.mxu0
      %3064 = vmatpush.bf16.msra.mxu0 0
      %3065 = vmatpush.bf16.msra.mxu0 0
      %3066 = vmatpush.bf16.msra.mxu0 0
      %3067 = vmatpush.bf16.msra.mxu0 0
      %3068 = vmatpush.bf16.msra.mxu0 %v2944
      %3069 = vmatpush.bf16.msra.mxu0 %v2940
      %3070 = vmatpush.bf16.msra.mxu0 %v2936
      %3071 = vmatpush.bf16.msra.mxu0 %v2932
      %3072 = vmatmul.bf16.gmra.mxu0 %v2966
      %v3073 = vpop.f32.mrf.mxu0
      %v3074 = vadd.f32 0.0, %v3073
      %v3075 = vpop.f32.mrf.mxu0
      %v3076 = vadd.f32 0.0, %v3075
      %3077 = vmatmul.bf16.gmra.mxu0 %v2969
      %v3078 = vpop.f32.mrf.mxu0
      %v3079 = vadd.f32 0.0, %v3078
      %v3080 = vpop.f32.mrf.mxu0
      %v3081 = vadd.f32 0.0, %v3080
      %3082 = vmatmul.bf16.gmra.mxu0 %v2972
      %v3083 = vpop.f32.mrf.mxu0
      %v3084 = vadd.f32 0.0, %v3083
      %v3085 = vpop.f32.mrf.mxu0
      %v3086 = vadd.f32 0.0, %v3085
      %3087 = vmatmul.bf16.gmra.mxu0 %v2975
      %v3088 = vpop.f32.mrf.mxu0
      %v3089 = vadd.f32 0.0, %v3088
      %v3090 = vpop.f32.mrf.mxu0
      %v3091 = vadd.f32 0.0, %v3090
      %3092 = vdwg.mxu0
      %3093 = vset.pattern.permute.xlu0 7
      %3094 = vperm.xlu0 %3093, %v651
      %v3095 = vpop.permute.xlu0 %3094
      %3097 = vset.pattern.permute.xlu0 7
      %3098 = vperm.xlu0 %3097, %v652
      %v3099 = vpop.permute.xlu0 %3098
      %3101 = vset.pattern.permute.xlu0 7
      %3102 = vperm.xlu0 %3101, %v653
      %v3103 = vpop.permute.xlu0 %3102
      %3105 = vset.pattern.permute.xlu0 7
      %3106 = vperm.xlu0 %3105, %v654
      %v3107 = vpop.permute.xlu0 %3106
      %3109 = vset.pattern.permute.xlu0 7
      %3110 = vperm.xlu0 %3109, %v655
      %v3111 = vpop.permute.xlu0 %3110
      %3113 = vset.pattern.permute.xlu0 7
      %3114 = vperm.xlu0 %3113, %v656
      %v3115 = vpop.permute.xlu0 %3114
      %3117 = vset.pattern.permute.xlu0 7
      %3118 = vperm.xlu0 %3117, %v657
      %v3119 = vpop.permute.xlu0 %3118
      %3121 = vset.pattern.permute.xlu0 7
      %3122 = vperm.xlu0 %3121, %v658
      %v3123 = vpop.permute.xlu0 %3122
      %v3125 = vmul.f32 %v3095, %v2987
      %v3126 = vmul.f32 %v3095, %v3016
      %v3127 = vmul.f32 %v3095, %v3045
      %v3128 = vmul.f32 %v3095, %v3074
      %v3129 = vmul.f32 %v3099, %v2989
      %v3130 = vmul.f32 %v3099, %v3018
      %v3131 = vmul.f32 %v3099, %v3047
      %v3132 = vmul.f32 %v3099, %v3076
      %v3133 = vmul.f32 %v3103, %v2992
      %v3134 = vmul.f32 %v3103, %v3021
      %v3135 = vmul.f32 %v3103, %v3050
      %v3136 = vmul.f32 %v3103, %v3079
      %v3137 = vmul.f32 %v3107, %v2994
      %v3138 = vmul.f32 %v3107, %v3023
      %v3139 = vmul.f32 %v3107, %v3052
      %v3140 = vmul.f32 %v3107, %v3081
      %v3141 = vmul.f32 %v3111, %v2997
      %v3142 = vmul.f32 %v3111, %v3026
      %v3143 = vmul.f32 %v3111, %v3055
      %v3144 = vmul.f32 %v3111, %v3084
      %v3145 = vmul.f32 %v3115, %v2999
      %v3146 = vmul.f32 %v3115, %v3028
      %v3147 = vmul.f32 %v3115, %v3057
      %v3148 = vmul.f32 %v3115, %v3086
      %v3149 = vmul.f32 %v3119, %v3002
      %v3150 = vmul.f32 %v3119, %v3031
      %v3151 = vmul.f32 %v3119, %v3060
      %v3152 = vmul.f32 %v3119, %v3089
      %v3153 = vmul.f32 %v3123, %v3004
      %v3154 = vmul.f32 %v3123, %v3033
      %v3155 = vmul.f32 %v3123, %v3062
      %v3156 = vmul.f32 %v3123, %v3091
      %3157 = vset.pattern.permute.xlu0 19
      %3158 = vperm.xlu0 %3157, %v651
      %v3159 = vpop.permute.xlu0 %3158
      %3161 = vset.pattern.permute.xlu0 19
      %3162 = vperm.xlu0 %3161, %v652
      %v3163 = vpop.permute.xlu0 %3162
      %3165 = vset.pattern.permute.xlu0 19
      %3166 = vperm.xlu0 %3165, %v653
      %v3167 = vpop.permute.xlu0 %3166
      %3169 = vset.pattern.permute.xlu0 19
      %3170 = vperm.xlu0 %3169, %v654
      %v3171 = vpop.permute.xlu0 %3170
      %3173 = vset.pattern.permute.xlu0 19
      %3174 = vperm.xlu0 %3173, %v655
      %v3175 = vpop.permute.xlu0 %3174
      %3177 = vset.pattern.permute.xlu0 19
      %3178 = vperm.xlu0 %3177, %v656
      %v3179 = vpop.permute.xlu0 %3178
      %3181 = vset.pattern.permute.xlu0 19
      %3182 = vperm.xlu0 %3181, %v657
      %v3183 = vpop.permute.xlu0 %3182
      %3185 = vset.pattern.permute.xlu0 19
      %3186 = vperm.xlu0 %3185, %v658
      %v3187 = vpop.permute.xlu0 %3186
      %v3189 = vadd.f32 %v3125, %v3159
      %v3190 = vadd.f32 %v3126, %v3159
      %v3191 = vadd.f32 %v3127, %v3159
      %v3192 = vadd.f32 %v3128, %v3159
      %v3193 = vadd.f32 %v3129, %v3163
      %v3194 = vadd.f32 %v3130, %v3163
      %v3195 = vadd.f32 %v3131, %v3163
      %v3196 = vadd.f32 %v3132, %v3163
      %v3197 = vadd.f32 %v3133, %v3167
      %v3198 = vadd.f32 %v3134, %v3167
      %v3199 = vadd.f32 %v3135, %v3167
      %v3200 = vadd.f32 %v3136, %v3167
      %v3201 = vadd.f32 %v3137, %v3171
      %v3202 = vadd.f32 %v3138, %v3171
      %v3203 = vadd.f32 %v3139, %v3171
      %v3204 = vadd.f32 %v3140, %v3171
      %v3205 = vadd.f32 %v3141, %v3175
      %v3206 = vadd.f32 %v3142, %v3175
      %v3207 = vadd.f32 %v3143, %v3175
      %v3208 = vadd.f32 %v3144, %v3175
      %v3209 = vadd.f32 %v3145, %v3179
      %v3210 = vadd.f32 %v3146, %v3179
      %v3211 = vadd.f32 %v3147, %v3179
      %v3212 = vadd.f32 %v3148, %v3179
      %v3213 = vadd.f32 %v3149, %v3183
      %v3214 = vadd.f32 %v3150, %v3183
      %v3215 = vadd.f32 %v3151, %v3183
      %v3216 = vadd.f32 %v3152, %v3183
      %v3217 = vadd.f32 %v3153, %v3187
      %v3218 = vadd.f32 %v3154, %v3187
      %v3219 = vadd.f32 %v3155, %v3187
      %v3220 = vadd.f32 %v3156, %v3187
      %v3221 = vmax.f32 %v3189, 0.0
      %v3222 = vmax.f32 %v3190, 0.0
      %v3223 = vmax.f32 %v3191, 0.0
      %v3224 = vmax.f32 %v3192, 0.0
      %v3225 = vmax.f32 %v3193, 0.0
      %v3226 = vmax.f32 %v3194, 0.0
      %v3227 = vmax.f32 %v3195, 0.0
      %v3228 = vmax.f32 %v3196, 0.0
      %v3229 = vmax.f32 %v3197, 0.0
      %v3230 = vmax.f32 %v3198, 0.0
      %v3231 = vmax.f32 %v3199, 0.0
      %v3232 = vmax.f32 %v3200, 0.0
      %v3233 = vmax.f32 %v3201, 0.0
      %v3234 = vmax.f32 %v3202, 0.0
      %v3235 = vmax.f32 %v3203, 0.0
      %v3236 = vmax.f32 %v3204, 0.0
      %v3237 = vmax.f32 %v3205, 0.0
      %v3238 = vmax.f32 %v3206, 0.0
      %v3239 = vmax.f32 %v3207, 0.0
      %v3240 = vmax.f32 %v3208, 0.0
      %v3241 = vmax.f32 %v3209, 0.0
      %v3242 = vmax.f32 %v3210, 0.0
      %v3243 = vmax.f32 %v3211, 0.0
      %v3244 = vmax.f32 %v3212, 0.0
      %v3245 = vmax.f32 %v3213, 0.0
      %v3246 = vmax.f32 %v3214, 0.0
      %v3247 = vmax.f32 %v3215, 0.0
      %v3248 = vmax.f32 %v3216, 0.0
      %v3249 = vmax.f32 %v3217, 0.0
      %v3250 = vmax.f32 %v3218, 0.0
      %v3251 = vmax.f32 %v3219, 0.0
      %v3252 = vmax.f32 %v3220, 0.0
      %s3253 = scalar_lea.vmem %s4, 96
      %v3254 = vld [vmem:[%s3253] sm:$0xf]
      %v3255 = vld [vmem:[%s3253 + $0x4] sm:$0xf]
      %v3256 = vld [vmem:[%s3253 + $0x8] sm:$0xf]
      %v3257 = vld [vmem:[%s3253 + $0xc] sm:$0xf]
      %v3258 = vld [vmem:[%s3253 + $0x10] sm:$0xf]
      %v3259 = vld [vmem:[%s3253 + $0x14] sm:$0xf]
      %v3260 = vld [vmem:[%s3253 + $0x18] sm:$0xf]
      %v3261 = vld [vmem:[%s3253 + $0x1c] sm:$0xf]
      %v3262 = vpack.c.bf16 %v3225, %v3221
      %v3263 = vpack.c.bf16 %v3226, %v3222
      %v3264 = vpack.c.bf16 %v3227, %v3223
      %v3265 = vpack.c.bf16 %v3228, %v3224
      %v3266 = vpack.c.bf16 %v3233, %v3229
      %v3267 = vpack.c.bf16 %v3234, %v3230
      %v3268 = vpack.c.bf16 %v3235, %v3231
      %v3269 = vpack.c.bf16 %v3236, %v3232
      %v3270 = vpack.c.bf16 %v3241, %v3237
      %v3271 = vpack.c.bf16 %v3242, %v3238
      %v3272 = vpack.c.bf16 %v3243, %v3239
      %v3273 = vpack.c.bf16 %v3244, %v3240
      %v3274 = vpack.c.bf16 %v3249, %v3245
      %v3275 = vpack.c.bf16 %v3250, %v3246
      %v3276 = vpack.c.bf16 %v3251, %v3247
      %v3277 = vpack.c.bf16 %v3252, %v3248
      %v3286 = vunpack.c.l.b16 %v3254
      %v3287 = vunpack.c.l.b16 %v3255
      %v3288 = vunpack.c.l.b16 %v3256
      %v3289 = vunpack.c.l.b16 %v3257
      %v3290 = vunpack.c.l.b16 %v3258
      %v3291 = vunpack.c.l.b16 %v3259
      %v3292 = vunpack.c.l.b16 %v3260
      %v3293 = vunpack.c.l.b16 %v3261
      %v3294 = vpack.c.b16 %v3287, %v3286
      %v3295 = vpack.c.b16 %v3289, %v3288
      %v3296 = vpack.c.b16 %v3291, %v3290
      %v3297 = vpack.c.b16 %v3293, %v3292
      %v3299 = vsel %vm871, %v3294, 0
      %v3302 = vsel %vm871, %v3295, 0
      %v3305 = vsel %vm871, %v3296, 0
      %v3308 = vsel %vm871, %v3297, 0
      %3310 = vmatpush.bf16.msra.mxu0 0
      %3311 = vmatpush.bf16.msra.mxu0 0
      %3312 = vmatpush.bf16.msra.mxu0 0
      %3313 = vmatpush.bf16.msra.mxu0 0
      %3314 = vmatpush.bf16.msra.mxu0 %v3274
      %3315 = vmatpush.bf16.msra.mxu0 %v3270
      %3316 = vmatpush.bf16.msra.mxu0 %v3266
      %3317 = vmatpush.bf16.msra.mxu0 %v3262
      %3318 = vmatmul.bf16.gmra.mxu0 %v3299
      %v3319 = vpop.f32.mrf.mxu0
      %v3320 = vadd.f32 0.0, %v3319
      %v3321 = vpop.f32.mrf.mxu0
      %v3322 = vadd.f32 0.0, %v3321
      %3323 = vmatmul.bf16.gmra.mxu0 %v3302
      %v3324 = vpop.f32.mrf.mxu0
      %v3325 = vadd.f32 0.0, %v3324
      %v3326 = vpop.f32.mrf.mxu0
      %v3327 = vadd.f32 0.0, %v3326
      %3328 = vmatmul.bf16.gmra.mxu0 %v3305
      %v3329 = vpop.f32.mrf.mxu0
      %v3330 = vadd.f32 0.0, %v3329
      %v3331 = vpop.f32.mrf.mxu0
      %v3332 = vadd.f32 0.0, %v3331
      %3333 = vmatmul.bf16.gmra.mxu0 %v3308
      %v3334 = vpop.f32.mrf.mxu0
      %v3335 = vadd.f32 0.0, %v3334
      %v3336 = vpop.f32.mrf.mxu0
      %v3337 = vadd.f32 0.0, %v3336
      %3338 = vdwg.mxu0
      %3339 = vmatpush.bf16.msra.mxu0 0
      %3340 = vmatpush.bf16.msra.mxu0 0
      %3341 = vmatpush.bf16.msra.mxu0 0
      %3342 = vmatpush.bf16.msra.mxu0 0
      %3343 = vmatpush.bf16.msra.mxu0 %v3275
      %3344 = vmatpush.bf16.msra.mxu0 %v3271
      %3345 = vmatpush.bf16.msra.mxu0 %v3267
      %3346 = vmatpush.bf16.msra.mxu0 %v3263
      %3347 = vmatmul.bf16.gmra.mxu0 %v3299
      %v3348 = vpop.f32.mrf.mxu0
      %v3349 = vadd.f32 0.0, %v3348
      %v3350 = vpop.f32.mrf.mxu0
      %v3351 = vadd.f32 0.0, %v3350
      %3352 = vmatmul.bf16.gmra.mxu0 %v3302
      %v3353 = vpop.f32.mrf.mxu0
      %v3354 = vadd.f32 0.0, %v3353
      %v3355 = vpop.f32.mrf.mxu0
      %v3356 = vadd.f32 0.0, %v3355
      %3357 = vmatmul.bf16.gmra.mxu0 %v3305
      %v3358 = vpop.f32.mrf.mxu0
      %v3359 = vadd.f32 0.0, %v3358
      %v3360 = vpop.f32.mrf.mxu0
      %v3361 = vadd.f32 0.0, %v3360
      %3362 = vmatmul.bf16.gmra.mxu0 %v3308
      %v3363 = vpop.f32.mrf.mxu0
      %v3364 = vadd.f32 0.0, %v3363
      %v3365 = vpop.f32.mrf.mxu0
      %v3366 = vadd.f32 0.0, %v3365
      %3367 = vdwg.mxu0
      %3368 = vmatpush.bf16.msra.mxu0 0
      %3369 = vmatpush.bf16.msra.mxu0 0
      %3370 = vmatpush.bf16.msra.mxu0 0
      %3371 = vmatpush.bf16.msra.mxu0 0
      %3372 = vmatpush.bf16.msra.mxu0 %v3276
      %3373 = vmatpush.bf16.msra.mxu0 %v3272
      %3374 = vmatpush.bf16.msra.mxu0 %v3268
      %3375 = vmatpush.bf16.msra.mxu0 %v3264
      %3376 = vmatmul.bf16.gmra.mxu0 %v3299
      %v3377 = vpop.f32.mrf.mxu0
      %v3378 = vadd.f32 0.0, %v3377
      %v3379 = vpop.f32.mrf.mxu0
      %v3380 = vadd.f32 0.0, %v3379
      %3381 = vmatmul.bf16.gmra.mxu0 %v3302
      %v3382 = vpop.f32.mrf.mxu0
      %v3383 = vadd.f32 0.0, %v3382
      %v3384 = vpop.f32.mrf.mxu0
      %v3385 = vadd.f32 0.0, %v3384
      %3386 = vmatmul.bf16.gmra.mxu0 %v3305
      %v3387 = vpop.f32.mrf.mxu0
      %v3388 = vadd.f32 0.0, %v3387
      %v3389 = vpop.f32.mrf.mxu0
      %v3390 = vadd.f32 0.0, %v3389
      %3391 = vmatmul.bf16.gmra.mxu0 %v3308
      %v3392 = vpop.f32.mrf.mxu0
      %v3393 = vadd.f32 0.0, %v3392
      %v3394 = vpop.f32.mrf.mxu0
      %v3395 = vadd.f32 0.0, %v3394
      %3396 = vdwg.mxu0
      %3397 = vmatpush.bf16.msra.mxu0 0
      %3398 = vmatpush.bf16.msra.mxu0 0
      %3399 = vmatpush.bf16.msra.mxu0 0
      %3400 = vmatpush.bf16.msra.mxu0 0
      %3401 = vmatpush.bf16.msra.mxu0 %v3277
      %3402 = vmatpush.bf16.msra.mxu0 %v3273
      %3403 = vmatpush.bf16.msra.mxu0 %v3269
      %3404 = vmatpush.bf16.msra.mxu0 %v3265
      %3405 = vmatmul.bf16.gmra.mxu0 %v3299
      %v3406 = vpop.f32.mrf.mxu0
      %v3407 = vadd.f32 0.0, %v3406
      %v3408 = vpop.f32.mrf.mxu0
      %v3409 = vadd.f32 0.0, %v3408
      %3410 = vmatmul.bf16.gmra.mxu0 %v3302
      %v3411 = vpop.f32.mrf.mxu0
      %v3412 = vadd.f32 0.0, %v3411
      %v3413 = vpop.f32.mrf.mxu0
      %v3414 = vadd.f32 0.0, %v3413
      %3415 = vmatmul.bf16.gmra.mxu0 %v3305
      %v3416 = vpop.f32.mrf.mxu0
      %v3417 = vadd.f32 0.0, %v3416
      %v3418 = vpop.f32.mrf.mxu0
      %v3419 = vadd.f32 0.0, %v3418
      %3420 = vmatmul.bf16.gmra.mxu0 %v3308
      %v3421 = vpop.f32.mrf.mxu0
      %v3422 = vadd.f32 0.0, %v3421
      %v3423 = vpop.f32.mrf.mxu0
      %v3424 = vadd.f32 0.0, %v3423
      %3425 = vdwg.mxu0
      %v3426 = vadd.f32 %v2728, %v3320
      %v3427 = vadd.f32 %v2729, %v3349
      %v3428 = vadd.f32 %v2730, %v3378
      %v3429 = vadd.f32 %v2731, %v3407
      %v3430 = vadd.f32 %v2732, %v3322
      %v3431 = vadd.f32 %v2733, %v3351
      %v3432 = vadd.f32 %v2734, %v3380
      %v3433 = vadd.f32 %v2735, %v3409
      %v3434 = vadd.f32 %v2736, %v3325
      %v3435 = vadd.f32 %v2737, %v3354
      %v3436 = vadd.f32 %v2738, %v3383
      %v3437 = vadd.f32 %v2739, %v3412
      %v3438 = vadd.f32 %v2740, %v3327
      %v3439 = vadd.f32 %v2741, %v3356
      %v3440 = vadd.f32 %v2742, %v3385
      %v3441 = vadd.f32 %v2743, %v3414
      %v3442 = vadd.f32 %v2744, %v3330
      %v3443 = vadd.f32 %v2745, %v3359
      %v3444 = vadd.f32 %v2746, %v3388
      %v3445 = vadd.f32 %v2747, %v3417
      %v3446 = vadd.f32 %v2748, %v3332
      %v3447 = vadd.f32 %v2749, %v3361
      %v3448 = vadd.f32 %v2750, %v3390
      %v3449 = vadd.f32 %v2751, %v3419
      %v3450 = vadd.f32 %v2752, %v3335
      %v3451 = vadd.f32 %v2753, %v3364
      %v3452 = vadd.f32 %v2754, %v3393
      %v3453 = vadd.f32 %v2755, %v3422
      %v3454 = vadd.f32 %v2756, %v3337
      %v3455 = vadd.f32 %v2757, %v3366
      %v3456 = vadd.f32 %v2758, %v3395
      %v3457 = vadd.f32 %v2759, %v3424
      %3458 = vset.pattern.permute.xlu0 8
      %3459 = vperm.xlu0 %3458, %v651
      %v3460 = vpop.permute.xlu0 %3459
      %3462 = vset.pattern.permute.xlu0 8
      %3463 = vperm.xlu0 %3462, %v652
      %v3464 = vpop.permute.xlu0 %3463
      %3466 = vset.pattern.permute.xlu0 8
      %3467 = vperm.xlu0 %3466, %v653
      %v3468 = vpop.permute.xlu0 %3467
      %3470 = vset.pattern.permute.xlu0 8
      %3471 = vperm.xlu0 %3470, %v654
      %v3472 = vpop.permute.xlu0 %3471
      %3474 = vset.pattern.permute.xlu0 8
      %3475 = vperm.xlu0 %3474, %v655
      %v3476 = vpop.permute.xlu0 %3475
      %3478 = vset.pattern.permute.xlu0 8
      %3479 = vperm.xlu0 %3478, %v656
      %v3480 = vpop.permute.xlu0 %3479
      %3482 = vset.pattern.permute.xlu0 8
      %3483 = vperm.xlu0 %3482, %v657
      %v3484 = vpop.permute.xlu0 %3483
      %3486 = vset.pattern.permute.xlu0 8
      %3487 = vperm.xlu0 %3486, %v658
      %v3488 = vpop.permute.xlu0 %3487
      %v3490 = vmul.f32 %v3460, %v3426
      %v3491 = vmul.f32 %v3460, %v3427
      %v3492 = vmul.f32 %v3460, %v3428
      %v3493 = vmul.f32 %v3460, %v3429
      %v3494 = vmul.f32 %v3464, %v3430
      %v3495 = vmul.f32 %v3464, %v3431
      %v3496 = vmul.f32 %v3464, %v3432
      %v3497 = vmul.f32 %v3464, %v3433
      %v3498 = vmul.f32 %v3468, %v3434
      %v3499 = vmul.f32 %v3468, %v3435
      %v3500 = vmul.f32 %v3468, %v3436
      %v3501 = vmul.f32 %v3468, %v3437
      %v3502 = vmul.f32 %v3472, %v3438
      %v3503 = vmul.f32 %v3472, %v3439
      %v3504 = vmul.f32 %v3472, %v3440
      %v3505 = vmul.f32 %v3472, %v3441
      %v3506 = vmul.f32 %v3476, %v3442
      %v3507 = vmul.f32 %v3476, %v3443
      %v3508 = vmul.f32 %v3476, %v3444
      %v3509 = vmul.f32 %v3476, %v3445
      %v3510 = vmul.f32 %v3480, %v3446
      %v3511 = vmul.f32 %v3480, %v3447
      %v3512 = vmul.f32 %v3480, %v3448
      %v3513 = vmul.f32 %v3480, %v3449
      %v3514 = vmul.f32 %v3484, %v3450
      %v3515 = vmul.f32 %v3484, %v3451
      %v3516 = vmul.f32 %v3484, %v3452
      %v3517 = vmul.f32 %v3484, %v3453
      %v3518 = vmul.f32 %v3488, %v3454
      %v3519 = vmul.f32 %v3488, %v3455
      %v3520 = vmul.f32 %v3488, %v3456
      %v3521 = vmul.f32 %v3488, %v3457
      %3522 = vset.pattern.permute.xlu0 20
      %3523 = vperm.xlu0 %3522, %v651
      %v3524 = vpop.permute.xlu0 %3523
      %3526 = vset.pattern.permute.xlu0 20
      %3527 = vperm.xlu0 %3526, %v652
      %v3528 = vpop.permute.xlu0 %3527
      %3530 = vset.pattern.permute.xlu0 20
      %3531 = vperm.xlu0 %3530, %v653
      %v3532 = vpop.permute.xlu0 %3531
      %3534 = vset.pattern.permute.xlu0 20
      %3535 = vperm.xlu0 %3534, %v654
      %v3536 = vpop.permute.xlu0 %3535
      %3538 = vset.pattern.permute.xlu0 20
      %3539 = vperm.xlu0 %3538, %v655
      %v3540 = vpop.permute.xlu0 %3539
      %3542 = vset.pattern.permute.xlu0 20
      %3543 = vperm.xlu0 %3542, %v656
      %v3544 = vpop.permute.xlu0 %3543
      %3546 = vset.pattern.permute.xlu0 20
      %3547 = vperm.xlu0 %3546, %v657
      %v3548 = vpop.permute.xlu0 %3547
      %3550 = vset.pattern.permute.xlu0 20
      %3551 = vperm.xlu0 %3550, %v658
      %v3552 = vpop.permute.xlu0 %3551
      %v3554 = vadd.f32 %v3490, %v3524
      %v3555 = vadd.f32 %v3491, %v3524
      %v3556 = vadd.f32 %v3492, %v3524
      %v3557 = vadd.f32 %v3493, %v3524
      %v3558 = vadd.f32 %v3494, %v3528
      %v3559 = vadd.f32 %v3495, %v3528
      %v3560 = vadd.f32 %v3496, %v3528
      %v3561 = vadd.f32 %v3497, %v3528
      %v3562 = vadd.f32 %v3498, %v3532
      %v3563 = vadd.f32 %v3499, %v3532
      %v3564 = vadd.f32 %v3500, %v3532
      %v3565 = vadd.f32 %v3501, %v3532
      %v3566 = vadd.f32 %v3502, %v3536
      %v3567 = vadd.f32 %v3503, %v3536
      %v3568 = vadd.f32 %v3504, %v3536
      %v3569 = vadd.f32 %v3505, %v3536
      %v3570 = vadd.f32 %v3506, %v3540
      %v3571 = vadd.f32 %v3507, %v3540
      %v3572 = vadd.f32 %v3508, %v3540
      %v3573 = vadd.f32 %v3509, %v3540
      %v3574 = vadd.f32 %v3510, %v3544
      %v3575 = vadd.f32 %v3511, %v3544
      %v3576 = vadd.f32 %v3512, %v3544
      %v3577 = vadd.f32 %v3513, %v3544
      %v3578 = vadd.f32 %v3514, %v3548
      %v3579 = vadd.f32 %v3515, %v3548
      %v3580 = vadd.f32 %v3516, %v3548
      %v3581 = vadd.f32 %v3517, %v3548
      %v3582 = vadd.f32 %v3518, %v3552
      %v3583 = vadd.f32 %v3519, %v3552
      %v3584 = vadd.f32 %v3520, %v3552
      %v3585 = vadd.f32 %v3521, %v3552
      %v3586 = vmax.f32 %v3554, 0.0
      %v3587 = vmax.f32 %v3555, 0.0
      %v3588 = vmax.f32 %v3556, 0.0
      %v3589 = vmax.f32 %v3557, 0.0
      %v3590 = vmax.f32 %v3558, 0.0
      %v3591 = vmax.f32 %v3559, 0.0
      %v3592 = vmax.f32 %v3560, 0.0
      %v3593 = vmax.f32 %v3561, 0.0
      %v3594 = vmax.f32 %v3562, 0.0
      %v3595 = vmax.f32 %v3563, 0.0
      %v3596 = vmax.f32 %v3564, 0.0
      %v3597 = vmax.f32 %v3565, 0.0
      %v3598 = vmax.f32 %v3566, 0.0
      %v3599 = vmax.f32 %v3567, 0.0
      %v3600 = vmax.f32 %v3568, 0.0
      %v3601 = vmax.f32 %v3569, 0.0
      %v3602 = vmax.f32 %v3570, 0.0
      %v3603 = vmax.f32 %v3571, 0.0
      %v3604 = vmax.f32 %v3572, 0.0
      %v3605 = vmax.f32 %v3573, 0.0
      %v3606 = vmax.f32 %v3574, 0.0
      %v3607 = vmax.f32 %v3575, 0.0
      %v3608 = vmax.f32 %v3576, 0.0
      %v3609 = vmax.f32 %v3577, 0.0
      %v3610 = vmax.f32 %v3578, 0.0
      %v3611 = vmax.f32 %v3579, 0.0
      %v3612 = vmax.f32 %v3580, 0.0
      %v3613 = vmax.f32 %v3581, 0.0
      %v3614 = vmax.f32 %v3582, 0.0
      %v3615 = vmax.f32 %v3583, 0.0
      %v3616 = vmax.f32 %v3584, 0.0
      %v3617 = vmax.f32 %v3585, 0.0
      %s3618 = scalar_lea.vmem %s3, 128
      %v3619 = vld [vmem:[%s3618] sm:$0xf]
      %v3620 = vld [vmem:[%s3618 + $0x4] sm:$0xf]
      %v3621 = vld [vmem:[%s3618 + $0x8] sm:$0xf]
      %v3622 = vld [vmem:[%s3618 + $0xc] sm:$0xf]
      %v3623 = vld [vmem:[%s3618 + $0x10] sm:$0xf]
      %v3624 = vld [vmem:[%s3618 + $0x14] sm:$0xf]
      %v3625 = vld [vmem:[%s3618 + $0x18] sm:$0xf]
      %v3626 = vld [vmem:[%s3618 + $0x1c] sm:$0xf]
      %v3627 = vpack.c.bf16 %v3590, %v3586
      %v3628 = vpack.c.bf16 %v3591, %v3587
      %v3629 = vpack.c.bf16 %v3592, %v3588
      %v3630 = vpack.c.bf16 %v3593, %v3589
      %v3631 = vpack.c.bf16 %v3598, %v3594
      %v3632 = vpack.c.bf16 %v3599, %v3595
      %v3633 = vpack.c.bf16 %v3600, %v3596
      %v3634 = vpack.c.bf16 %v3601, %v3597
      %v3635 = vpack.c.bf16 %v3606, %v3602
      %v3636 = vpack.c.bf16 %v3607, %v3603
      %v3637 = vpack.c.bf16 %v3608, %v3604
      %v3638 = vpack.c.bf16 %v3609, %v3605
      %v3639 = vpack.c.bf16 %v3614, %v3610
      %v3640 = vpack.c.bf16 %v3615, %v3611
      %v3641 = vpack.c.bf16 %v3616, %v3612
      %v3642 = vpack.c.bf16 %v3617, %v3613
      %v3651 = vunpack.c.l.b16 %v3619
      %v3652 = vunpack.c.l.b16 %v3620
      %v3653 = vunpack.c.l.b16 %v3621
      %v3654 = vunpack.c.l.b16 %v3622
      %v3655 = vunpack.c.l.b16 %v3623
      %v3656 = vunpack.c.l.b16 %v3624
      %v3657 = vunpack.c.l.b16 %v3625
      %v3658 = vunpack.c.l.b16 %v3626
      %v3659 = vpack.c.b16 %v3652, %v3651
      %v3660 = vpack.c.b16 %v3654, %v3653
      %v3661 = vpack.c.b16 %v3656, %v3655
      %v3662 = vpack.c.b16 %v3658, %v3657
      %v3664 = vsel %vm871, %v3659, 0
      %v3667 = vsel %vm871, %v3660, 0
      %v3670 = vsel %vm871, %v3661, 0
      %v3673 = vsel %vm871, %v3662, 0
      %3675 = vmatpush.bf16.msra.mxu0 0
      %3676 = vmatpush.bf16.msra.mxu0 0
      %3677 = vmatpush.bf16.msra.mxu0 0
      %3678 = vmatpush.bf16.msra.mxu0 0
      %3679 = vmatpush.bf16.msra.mxu0 %v3639
      %3680 = vmatpush.bf16.msra.mxu0 %v3635
      %3681 = vmatpush.bf16.msra.mxu0 %v3631
      %3682 = vmatpush.bf16.msra.mxu0 %v3627
      %3683 = vmatmul.bf16.gmra.mxu0 %v3664
      %v3684 = vpop.f32.mrf.mxu0
      %v3685 = vadd.f32 0.0, %v3684
      %v3686 = vpop.f32.mrf.mxu0
      %v3687 = vadd.f32 0.0, %v3686
      %3688 = vmatmul.bf16.gmra.mxu0 %v3667
      %v3689 = vpop.f32.mrf.mxu0
      %v3690 = vadd.f32 0.0, %v3689
      %v3691 = vpop.f32.mrf.mxu0
      %v3692 = vadd.f32 0.0, %v3691
      %3693 = vmatmul.bf16.gmra.mxu0 %v3670
      %v3694 = vpop.f32.mrf.mxu0
      %v3695 = vadd.f32 0.0, %v3694
      %v3696 = vpop.f32.mrf.mxu0
      %v3697 = vadd.f32 0.0, %v3696
      %3698 = vmatmul.bf16.gmra.mxu0 %v3673
      %v3699 = vpop.f32.mrf.mxu0
      %v3700 = vadd.f32 0.0, %v3699
      %v3701 = vpop.f32.mrf.mxu0
      %v3702 = vadd.f32 0.0, %v3701
      %3703 = vdwg.mxu0
      %3704 = vmatpush.bf16.msra.mxu0 0
      %3705 = vmatpush.bf16.msra.mxu0 0
      %3706 = vmatpush.bf16.msra.mxu0 0
      %3707 = vmatpush.bf16.msra.mxu0 0
      %3708 = vmatpush.bf16.msra.mxu0 %v3640
      %3709 = vmatpush.bf16.msra.mxu0 %v3636
      %3710 = vmatpush.bf16.msra.mxu0 %v3632
      %3711 = vmatpush.bf16.msra.mxu0 %v3628
      %3712 = vmatmul.bf16.gmra.mxu0 %v3664
      %v3713 = vpop.f32.mrf.mxu0
      %v3714 = vadd.f32 0.0, %v3713
      %v3715 = vpop.f32.mrf.mxu0
      %v3716 = vadd.f32 0.0, %v3715
      %3717 = vmatmul.bf16.gmra.mxu0 %v3667
      %v3718 = vpop.f32.mrf.mxu0
      %v3719 = vadd.f32 0.0, %v3718
      %v3720 = vpop.f32.mrf.mxu0
      %v3721 = vadd.f32 0.0, %v3720
      %3722 = vmatmul.bf16.gmra.mxu0 %v3670
      %v3723 = vpop.f32.mrf.mxu0
      %v3724 = vadd.f32 0.0, %v3723
      %v3725 = vpop.f32.mrf.mxu0
      %v3726 = vadd.f32 0.0, %v3725
      %3727 = vmatmul.bf16.gmra.mxu0 %v3673
      %v3728 = vpop.f32.mrf.mxu0
      %v3729 = vadd.f32 0.0, %v3728
      %v3730 = vpop.f32.mrf.mxu0
      %v3731 = vadd.f32 0.0, %v3730
      %3732 = vdwg.mxu0
      %3733 = vmatpush.bf16.msra.mxu0 0
      %3734 = vmatpush.bf16.msra.mxu0 0
      %3735 = vmatpush.bf16.msra.mxu0 0
      %3736 = vmatpush.bf16.msra.mxu0 0
      %3737 = vmatpush.bf16.msra.mxu0 %v3641
      %3738 = vmatpush.bf16.msra.mxu0 %v3637
      %3739 = vmatpush.bf16.msra.mxu0 %v3633
      %3740 = vmatpush.bf16.msra.mxu0 %v3629
      %3741 = vmatmul.bf16.gmra.mxu0 %v3664
      %v3742 = vpop.f32.mrf.mxu0
      %v3743 = vadd.f32 0.0, %v3742
      %v3744 = vpop.f32.mrf.mxu0
      %v3745 = vadd.f32 0.0, %v3744
      %3746 = vmatmul.bf16.gmra.mxu0 %v3667
      %v3747 = vpop.f32.mrf.mxu0
      %v3748 = vadd.f32 0.0, %v3747
      %v3749 = vpop.f32.mrf.mxu0
      %v3750 = vadd.f32 0.0, %v3749
      %3751 = vmatmul.bf16.gmra.mxu0 %v3670
      %v3752 = vpop.f32.mrf.mxu0
      %v3753 = vadd.f32 0.0, %v3752
      %v3754 = vpop.f32.mrf.mxu0
      %v3755 = vadd.f32 0.0, %v3754
      %3756 = vmatmul.bf16.gmra.mxu0 %v3673
      %v3757 = vpop.f32.mrf.mxu0
      %v3758 = vadd.f32 0.0, %v3757
      %v3759 = vpop.f32.mrf.mxu0
      %v3760 = vadd.f32 0.0, %v3759
      %3761 = vdwg.mxu0
      %3762 = vmatpush.bf16.msra.mxu0 0
      %3763 = vmatpush.bf16.msra.mxu0 0
      %3764 = vmatpush.bf16.msra.mxu0 0
      %3765 = vmatpush.bf16.msra.mxu0 0
      %3766 = vmatpush.bf16.msra.mxu0 %v3642
      %3767 = vmatpush.bf16.msra.mxu0 %v3638
      %3768 = vmatpush.bf16.msra.mxu0 %v3634
      %3769 = vmatpush.bf16.msra.mxu0 %v3630
      %3770 = vmatmul.bf16.gmra.mxu0 %v3664
      %v3771 = vpop.f32.mrf.mxu0
      %v3772 = vadd.f32 0.0, %v3771
      %v3773 = vpop.f32.mrf.mxu0
      %v3774 = vadd.f32 0.0, %v3773
      %3775 = vmatmul.bf16.gmra.mxu0 %v3667
      %v3776 = vpop.f32.mrf.mxu0
      %v3777 = vadd.f32 0.0, %v3776
      %v3778 = vpop.f32.mrf.mxu0
      %v3779 = vadd.f32 0.0, %v3778
      %3780 = vmatmul.bf16.gmra.mxu0 %v3670
      %v3781 = vpop.f32.mrf.mxu0
      %v3782 = vadd.f32 0.0, %v3781
      %v3783 = vpop.f32.mrf.mxu0
      %v3784 = vadd.f32 0.0, %v3783
      %3785 = vmatmul.bf16.gmra.mxu0 %v3673
      %v3786 = vpop.f32.mrf.mxu0
      %v3787 = vadd.f32 0.0, %v3786
      %v3788 = vpop.f32.mrf.mxu0
      %v3789 = vadd.f32 0.0, %v3788
      %3790 = vdwg.mxu0
      %3791 = vset.pattern.permute.xlu0 9
      %3792 = vperm.xlu0 %3791, %v651
      %v3793 = vpop.permute.xlu0 %3792
      %3795 = vset.pattern.permute.xlu0 9
      %3796 = vperm.xlu0 %3795, %v652
      %v3797 = vpop.permute.xlu0 %3796
      %3799 = vset.pattern.permute.xlu0 9
      %3800 = vperm.xlu0 %3799, %v653
      %v3801 = vpop.permute.xlu0 %3800
      %3803 = vset.pattern.permute.xlu0 9
      %3804 = vperm.xlu0 %3803, %v654
      %v3805 = vpop.permute.xlu0 %3804
      %3807 = vset.pattern.permute.xlu0 9
      %3808 = vperm.xlu0 %3807, %v655
      %v3809 = vpop.permute.xlu0 %3808
      %3811 = vset.pattern.permute.xlu0 9
      %3812 = vperm.xlu0 %3811, %v656
      %v3813 = vpop.permute.xlu0 %3812
      %3815 = vset.pattern.permute.xlu0 9
      %3816 = vperm.xlu0 %3815, %v657
      %v3817 = vpop.permute.xlu0 %3816
      %3819 = vset.pattern.permute.xlu0 9
      %3820 = vperm.xlu0 %3819, %v658
      %v3821 = vpop.permute.xlu0 %3820
      %v3823 = vmul.f32 %v3793, %v3685
      %v3824 = vmul.f32 %v3793, %v3714
      %v3825 = vmul.f32 %v3793, %v3743
      %v3826 = vmul.f32 %v3793, %v3772
      %v3827 = vmul.f32 %v3797, %v3687
      %v3828 = vmul.f32 %v3797, %v3716
      %v3829 = vmul.f32 %v3797, %v3745
      %v3830 = vmul.f32 %v3797, %v3774
      %v3831 = vmul.f32 %v3801, %v3690
      %v3832 = vmul.f32 %v3801, %v3719
      %v3833 = vmul.f32 %v3801, %v3748
      %v3834 = vmul.f32 %v3801, %v3777
      %v3835 = vmul.f32 %v3805, %v3692
      %v3836 = vmul.f32 %v3805, %v3721
      %v3837 = vmul.f32 %v3805, %v3750
      %v3838 = vmul.f32 %v3805, %v3779
      %v3839 = vmul.f32 %v3809, %v3695
      %v3840 = vmul.f32 %v3809, %v3724
      %v3841 = vmul.f32 %v3809, %v3753
      %v3842 = vmul.f32 %v3809, %v3782
      %v3843 = vmul.f32 %v3813, %v3697
      %v3844 = vmul.f32 %v3813, %v3726
      %v3845 = vmul.f32 %v3813, %v3755
      %v3846 = vmul.f32 %v3813, %v3784
      %v3847 = vmul.f32 %v3817, %v3700
      %v3848 = vmul.f32 %v3817, %v3729
      %v3849 = vmul.f32 %v3817, %v3758
      %v3850 = vmul.f32 %v3817, %v3787
      %v3851 = vmul.f32 %v3821, %v3702
      %v3852 = vmul.f32 %v3821, %v3731
      %v3853 = vmul.f32 %v3821, %v3760
      %v3854 = vmul.f32 %v3821, %v3789
      %3855 = vset.pattern.permute.xlu0 21
      %3856 = vperm.xlu0 %3855, %v651
      %v3857 = vpop.permute.xlu0 %3856
      %3859 = vset.pattern.permute.xlu0 21
      %3860 = vperm.xlu0 %3859, %v652
      %v3861 = vpop.permute.xlu0 %3860
      %3863 = vset.pattern.permute.xlu0 21
      %3864 = vperm.xlu0 %3863, %v653
      %v3865 = vpop.permute.xlu0 %3864
      %3867 = vset.pattern.permute.xlu0 21
      %3868 = vperm.xlu0 %3867, %v654
      %v3869 = vpop.permute.xlu0 %3868
      %3871 = vset.pattern.permute.xlu0 21
      %3872 = vperm.xlu0 %3871, %v655
      %v3873 = vpop.permute.xlu0 %3872
      %3875 = vset.pattern.permute.xlu0 21
      %3876 = vperm.xlu0 %3875, %v656
      %v3877 = vpop.permute.xlu0 %3876
      %3879 = vset.pattern.permute.xlu0 21
      %3880 = vperm.xlu0 %3879, %v657
      %v3881 = vpop.permute.xlu0 %3880
      %3883 = vset.pattern.permute.xlu0 21
      %3884 = vperm.xlu0 %3883, %v658
      %v3885 = vpop.permute.xlu0 %3884
      %v3887 = vadd.f32 %v3823, %v3857
      %v3888 = vadd.f32 %v3824, %v3857
      %v3889 = vadd.f32 %v3825, %v3857
      %v3890 = vadd.f32 %v3826, %v3857
      %v3891 = vadd.f32 %v3827, %v3861
      %v3892 = vadd.f32 %v3828, %v3861
      %v3893 = vadd.f32 %v3829, %v3861
      %v3894 = vadd.f32 %v3830, %v3861
      %v3895 = vadd.f32 %v3831, %v3865
      %v3896 = vadd.f32 %v3832, %v3865
      %v3897 = vadd.f32 %v3833, %v3865
      %v3898 = vadd.f32 %v3834, %v3865
      %v3899 = vadd.f32 %v3835, %v3869
      %v3900 = vadd.f32 %v3836, %v3869
      %v3901 = vadd.f32 %v3837, %v3869
      %v3902 = vadd.f32 %v3838, %v3869
      %v3903 = vadd.f32 %v3839, %v3873
      %v3904 = vadd.f32 %v3840, %v3873
      %v3905 = vadd.f32 %v3841, %v3873
      %v3906 = vadd.f32 %v3842, %v3873
      %v3907 = vadd.f32 %v3843, %v3877
      %v3908 = vadd.f32 %v3844, %v3877
      %v3909 = vadd.f32 %v3845, %v3877
      %v3910 = vadd.f32 %v3846, %v3877
      %v3911 = vadd.f32 %v3847, %v3881
      %v3912 = vadd.f32 %v3848, %v3881
      %v3913 = vadd.f32 %v3849, %v3881
      %v3914 = vadd.f32 %v3850, %v3881
      %v3915 = vadd.f32 %v3851, %v3885
      %v3916 = vadd.f32 %v3852, %v3885
      %v3917 = vadd.f32 %v3853, %v3885
      %v3918 = vadd.f32 %v3854, %v3885
      %v3919 = vmax.f32 %v3887, 0.0
      %v3920 = vmax.f32 %v3888, 0.0
      %v3921 = vmax.f32 %v3889, 0.0
      %v3922 = vmax.f32 %v3890, 0.0
      %v3923 = vmax.f32 %v3891, 0.0
      %v3924 = vmax.f32 %v3892, 0.0
      %v3925 = vmax.f32 %v3893, 0.0
      %v3926 = vmax.f32 %v3894, 0.0
      %v3927 = vmax.f32 %v3895, 0.0
      %v3928 = vmax.f32 %v3896, 0.0
      %v3929 = vmax.f32 %v3897, 0.0
      %v3930 = vmax.f32 %v3898, 0.0
      %v3931 = vmax.f32 %v3899, 0.0
      %v3932 = vmax.f32 %v3900, 0.0
      %v3933 = vmax.f32 %v3901, 0.0
      %v3934 = vmax.f32 %v3902, 0.0
      %v3935 = vmax.f32 %v3903, 0.0
      %v3936 = vmax.f32 %v3904, 0.0
      %v3937 = vmax.f32 %v3905, 0.0
      %v3938 = vmax.f32 %v3906, 0.0
      %v3939 = vmax.f32 %v3907, 0.0
      %v3940 = vmax.f32 %v3908, 0.0
      %v3941 = vmax.f32 %v3909, 0.0
      %v3942 = vmax.f32 %v3910, 0.0
      %v3943 = vmax.f32 %v3911, 0.0
      %v3944 = vmax.f32 %v3912, 0.0
      %v3945 = vmax.f32 %v3913, 0.0
      %v3946 = vmax.f32 %v3914, 0.0
      %v3947 = vmax.f32 %v3915, 0.0
      %v3948 = vmax.f32 %v3916, 0.0
      %v3949 = vmax.f32 %v3917, 0.0
      %v3950 = vmax.f32 %v3918, 0.0
      %s3951 = scalar_lea.vmem %s4, 128
      %v3952 = vld [vmem:[%s3951] sm:$0xf]
      %v3953 = vld [vmem:[%s3951 + $0x4] sm:$0xf]
      %v3954 = vld [vmem:[%s3951 + $0x8] sm:$0xf]
      %v3955 = vld [vmem:[%s3951 + $0xc] sm:$0xf]
      %v3956 = vld [vmem:[%s3951 + $0x10] sm:$0xf]
      %v3957 = vld [vmem:[%s3951 + $0x14] sm:$0xf]
      %v3958 = vld [vmem:[%s3951 + $0x18] sm:$0xf]
      %v3959 = vld [vmem:[%s3951 + $0x1c] sm:$0xf]
      %v3960 = vpack.c.bf16 %v3923, %v3919
      %v3961 = vpack.c.bf16 %v3924, %v3920
      %v3962 = vpack.c.bf16 %v3925, %v3921
      %v3963 = vpack.c.bf16 %v3926, %v3922
      %v3964 = vpack.c.bf16 %v3931, %v3927
      %v3965 = vpack.c.bf16 %v3932, %v3928
      %v3966 = vpack.c.bf16 %v3933, %v3929
      %v3967 = vpack.c.bf16 %v3934, %v3930
      %v3968 = vpack.c.bf16 %v3939, %v3935
      %v3969 = vpack.c.bf16 %v3940, %v3936
      %v3970 = vpack.c.bf16 %v3941, %v3937
      %v3971 = vpack.c.bf16 %v3942, %v3938
      %v3972 = vpack.c.bf16 %v3947, %v3943
      %v3973 = vpack.c.bf16 %v3948, %v3944
      %v3974 = vpack.c.bf16 %v3949, %v3945
      %v3975 = vpack.c.bf16 %v3950, %v3946
      %v3984 = vunpack.c.l.b16 %v3952
      %v3985 = vunpack.c.l.b16 %v3953
      %v3986 = vunpack.c.l.b16 %v3954
      %v3987 = vunpack.c.l.b16 %v3955
      %v3988 = vunpack.c.l.b16 %v3956
      %v3989 = vunpack.c.l.b16 %v3957
      %v3990 = vunpack.c.l.b16 %v3958
      %v3991 = vunpack.c.l.b16 %v3959
      %v3992 = vpack.c.b16 %v3985, %v3984
      %v3993 = vpack.c.b16 %v3987, %v3986
      %v3994 = vpack.c.b16 %v3989, %v3988
      %v3995 = vpack.c.b16 %v3991, %v3990
      %v3997 = vsel %vm871, %v3992, 0
      %v4000 = vsel %vm871, %v3993, 0
      %v4003 = vsel %vm871, %v3994, 0
      %v4006 = vsel %vm871, %v3995, 0
      %4008 = vmatpush.bf16.msra.mxu0 0
      %4009 = vmatpush.bf16.msra.mxu0 0
      %4010 = vmatpush.bf16.msra.mxu0 0
      %4011 = vmatpush.bf16.msra.mxu0 0
      %4012 = vmatpush.bf16.msra.mxu0 %v3972
      %4013 = vmatpush.bf16.msra.mxu0 %v3968
      %4014 = vmatpush.bf16.msra.mxu0 %v3964
      %4015 = vmatpush.bf16.msra.mxu0 %v3960
      %4016 = vmatmul.bf16.gmra.mxu0 %v3997
      %v4017 = vpop.f32.mrf.mxu0
      %v4018 = vadd.f32 0.0, %v4017
      %v4019 = vpop.f32.mrf.mxu0
      %v4020 = vadd.f32 0.0, %v4019
      %4021 = vmatmul.bf16.gmra.mxu0 %v4000
      %v4022 = vpop.f32.mrf.mxu0
      %v4023 = vadd.f32 0.0, %v4022
      %v4024 = vpop.f32.mrf.mxu0
      %v4025 = vadd.f32 0.0, %v4024
      %4026 = vmatmul.bf16.gmra.mxu0 %v4003
      %v4027 = vpop.f32.mrf.mxu0
      %v4028 = vadd.f32 0.0, %v4027
      %v4029 = vpop.f32.mrf.mxu0
      %v4030 = vadd.f32 0.0, %v4029
      %4031 = vmatmul.bf16.gmra.mxu0 %v4006
      %v4032 = vpop.f32.mrf.mxu0
      %v4033 = vadd.f32 0.0, %v4032
      %v4034 = vpop.f32.mrf.mxu0
      %v4035 = vadd.f32 0.0, %v4034
      %4036 = vdwg.mxu0
      %4037 = vmatpush.bf16.msra.mxu0 0
      %4038 = vmatpush.bf16.msra.mxu0 0
      %4039 = vmatpush.bf16.msra.mxu0 0
      %4040 = vmatpush.bf16.msra.mxu0 0
      %4041 = vmatpush.bf16.msra.mxu0 %v3973
      %4042 = vmatpush.bf16.msra.mxu0 %v3969
      %4043 = vmatpush.bf16.msra.mxu0 %v3965
      %4044 = vmatpush.bf16.msra.mxu0 %v3961
      %4045 = vmatmul.bf16.gmra.mxu0 %v3997
      %v4046 = vpop.f32.mrf.mxu0
      %v4047 = vadd.f32 0.0, %v4046
      %v4048 = vpop.f32.mrf.mxu0
      %v4049 = vadd.f32 0.0, %v4048
      %4050 = vmatmul.bf16.gmra.mxu0 %v4000
      %v4051 = vpop.f32.mrf.mxu0
      %v4052 = vadd.f32 0.0, %v4051
      %v4053 = vpop.f32.mrf.mxu0
      %v4054 = vadd.f32 0.0, %v4053
      %4055 = vmatmul.bf16.gmra.mxu0 %v4003
      %v4056 = vpop.f32.mrf.mxu0
      %v4057 = vadd.f32 0.0, %v4056
      %v4058 = vpop.f32.mrf.mxu0
      %v4059 = vadd.f32 0.0, %v4058
      %4060 = vmatmul.bf16.gmra.mxu0 %v4006
      %v4061 = vpop.f32.mrf.mxu0
      %v4062 = vadd.f32 0.0, %v4061
      %v4063 = vpop.f32.mrf.mxu0
      %v4064 = vadd.f32 0.0, %v4063
      %4065 = vdwg.mxu0
      %4066 = vmatpush.bf16.msra.mxu0 0
      %4067 = vmatpush.bf16.msra.mxu0 0
      %4068 = vmatpush.bf16.msra.mxu0 0
      %4069 = vmatpush.bf16.msra.mxu0 0
      %4070 = vmatpush.bf16.msra.mxu0 %v3974
      %4071 = vmatpush.bf16.msra.mxu0 %v3970
      %4072 = vmatpush.bf16.msra.mxu0 %v3966
      %4073 = vmatpush.bf16.msra.mxu0 %v3962
      %4074 = vmatmul.bf16.gmra.mxu0 %v3997
      %v4075 = vpop.f32.mrf.mxu0
      %v4076 = vadd.f32 0.0, %v4075
      %v4077 = vpop.f32.mrf.mxu0
      %v4078 = vadd.f32 0.0, %v4077
      %4079 = vmatmul.bf16.gmra.mxu0 %v4000
      %v4080 = vpop.f32.mrf.mxu0
      %v4081 = vadd.f32 0.0, %v4080
      %v4082 = vpop.f32.mrf.mxu0
      %v4083 = vadd.f32 0.0, %v4082
      %4084 = vmatmul.bf16.gmra.mxu0 %v4003
      %v4085 = vpop.f32.mrf.mxu0
      %v4086 = vadd.f32 0.0, %v4085
      %v4087 = vpop.f32.mrf.mxu0
      %v4088 = vadd.f32 0.0, %v4087
      %4089 = vmatmul.bf16.gmra.mxu0 %v4006
      %v4090 = vpop.f32.mrf.mxu0
      %v4091 = vadd.f32 0.0, %v4090
      %v4092 = vpop.f32.mrf.mxu0
      %v4093 = vadd.f32 0.0, %v4092
      %4094 = vdwg.mxu0
      %4095 = vmatpush.bf16.msra.mxu0 0
      %4096 = vmatpush.bf16.msra.mxu0 0
      %4097 = vmatpush.bf16.msra.mxu0 0
      %4098 = vmatpush.bf16.msra.mxu0 0
      %4099 = vmatpush.bf16.msra.mxu0 %v3975
      %4100 = vmatpush.bf16.msra.mxu0 %v3971
      %4101 = vmatpush.bf16.msra.mxu0 %v3967
      %4102 = vmatpush.bf16.msra.mxu0 %v3963
      %4103 = vmatmul.bf16.gmra.mxu0 %v3997
      %v4104 = vpop.f32.mrf.mxu0
      %v4105 = vadd.f32 0.0, %v4104
      %v4106 = vpop.f32.mrf.mxu0
      %v4107 = vadd.f32 0.0, %v4106
      %4108 = vmatmul.bf16.gmra.mxu0 %v4000
      %v4109 = vpop.f32.mrf.mxu0
      %v4110 = vadd.f32 0.0, %v4109
      %v4111 = vpop.f32.mrf.mxu0
      %v4112 = vadd.f32 0.0, %v4111
      %4113 = vmatmul.bf16.gmra.mxu0 %v4003
      %v4114 = vpop.f32.mrf.mxu0
      %v4115 = vadd.f32 0.0, %v4114
      %v4116 = vpop.f32.mrf.mxu0
      %v4117 = vadd.f32 0.0, %v4116
      %4118 = vmatmul.bf16.gmra.mxu0 %v4006
      %v4119 = vpop.f32.mrf.mxu0
      %v4120 = vadd.f32 0.0, %v4119
      %v4121 = vpop.f32.mrf.mxu0
      %v4122 = vadd.f32 0.0, %v4121
      %4123 = vdwg.mxu0
      %v4124 = vadd.f32 %v3426, %v4018
      %v4125 = vadd.f32 %v3427, %v4047
      %v4126 = vadd.f32 %v3428, %v4076
      %v4127 = vadd.f32 %v3429, %v4105
      %v4128 = vadd.f32 %v3430, %v4020
      %v4129 = vadd.f32 %v3431, %v4049
      %v4130 = vadd.f32 %v3432, %v4078
      %v4131 = vadd.f32 %v3433, %v4107
      %v4132 = vadd.f32 %v3434, %v4023
      %v4133 = vadd.f32 %v3435, %v4052
      %v4134 = vadd.f32 %v3436, %v4081
      %v4135 = vadd.f32 %v3437, %v4110
      %v4136 = vadd.f32 %v3438, %v4025
      %v4137 = vadd.f32 %v3439, %v4054
      %v4138 = vadd.f32 %v3440, %v4083
      %v4139 = vadd.f32 %v3441, %v4112
      %v4140 = vadd.f32 %v3442, %v4028
      %v4141 = vadd.f32 %v3443, %v4057
      %v4142 = vadd.f32 %v3444, %v4086
      %v4143 = vadd.f32 %v3445, %v4115
      %v4144 = vadd.f32 %v3446, %v4030
      %v4145 = vadd.f32 %v3447, %v4059
      %v4146 = vadd.f32 %v3448, %v4088
      %v4147 = vadd.f32 %v3449, %v4117
      %v4148 = vadd.f32 %v3450, %v4033
      %v4149 = vadd.f32 %v3451, %v4062
      %v4150 = vadd.f32 %v3452, %v4091
      %v4151 = vadd.f32 %v3453, %v4120
      %v4152 = vadd.f32 %v3454, %v4035
      %v4153 = vadd.f32 %v3455, %v4064
      %v4154 = vadd.f32 %v3456, %v4093
      %v4155 = vadd.f32 %v3457, %v4122
      %4156 = vset.pattern.permute.xlu0 10
      %4157 = vperm.xlu0 %4156, %v651
      %v4158 = vpop.permute.xlu0 %4157
      %4160 = vset.pattern.permute.xlu0 10
      %4161 = vperm.xlu0 %4160, %v652
      %v4162 = vpop.permute.xlu0 %4161
      %4164 = vset.pattern.permute.xlu0 10
      %4165 = vperm.xlu0 %4164, %v653
      %v4166 = vpop.permute.xlu0 %4165
      %4168 = vset.pattern.permute.xlu0 10
      %4169 = vperm.xlu0 %4168, %v654
      %v4170 = vpop.permute.xlu0 %4169
      %4172 = vset.pattern.permute.xlu0 10
      %4173 = vperm.xlu0 %4172, %v655
      %v4174 = vpop.permute.xlu0 %4173
      %4176 = vset.pattern.permute.xlu0 10
      %4177 = vperm.xlu0 %4176, %v656
      %v4178 = vpop.permute.xlu0 %4177
      %4180 = vset.pattern.permute.xlu0 10
      %4181 = vperm.xlu0 %4180, %v657
      %v4182 = vpop.permute.xlu0 %4181
      %4184 = vset.pattern.permute.xlu0 10
      %4185 = vperm.xlu0 %4184, %v658
      %v4186 = vpop.permute.xlu0 %4185
      %v4188 = vmul.f32 %v4158, %v4124
      %v4189 = vmul.f32 %v4158, %v4125
      %v4190 = vmul.f32 %v4158, %v4126
      %v4191 = vmul.f32 %v4158, %v4127
      %v4192 = vmul.f32 %v4162, %v4128
      %v4193 = vmul.f32 %v4162, %v4129
      %v4194 = vmul.f32 %v4162, %v4130
      %v4195 = vmul.f32 %v4162, %v4131
      %v4196 = vmul.f32 %v4166, %v4132
      %v4197 = vmul.f32 %v4166, %v4133
      %v4198 = vmul.f32 %v4166, %v4134
      %v4199 = vmul.f32 %v4166, %v4135
      %v4200 = vmul.f32 %v4170, %v4136
      %v4201 = vmul.f32 %v4170, %v4137
      %v4202 = vmul.f32 %v4170, %v4138
      %v4203 = vmul.f32 %v4170, %v4139
      %v4204 = vmul.f32 %v4174, %v4140
      %v4205 = vmul.f32 %v4174, %v4141
      %v4206 = vmul.f32 %v4174, %v4142
      %v4207 = vmul.f32 %v4174, %v4143
      %v4208 = vmul.f32 %v4178, %v4144
      %v4209 = vmul.f32 %v4178, %v4145
      %v4210 = vmul.f32 %v4178, %v4146
      %v4211 = vmul.f32 %v4178, %v4147
      %v4212 = vmul.f32 %v4182, %v4148
      %v4213 = vmul.f32 %v4182, %v4149
      %v4214 = vmul.f32 %v4182, %v4150
      %v4215 = vmul.f32 %v4182, %v4151
      %v4216 = vmul.f32 %v4186, %v4152
      %v4217 = vmul.f32 %v4186, %v4153
      %v4218 = vmul.f32 %v4186, %v4154
      %v4219 = vmul.f32 %v4186, %v4155
      %4220 = vset.pattern.permute.xlu0 22
      %4221 = vperm.xlu0 %4220, %v651
      %v4222 = vpop.permute.xlu0 %4221
      %4224 = vset.pattern.permute.xlu0 22
      %4225 = vperm.xlu0 %4224, %v652
      %v4226 = vpop.permute.xlu0 %4225
      %4228 = vset.pattern.permute.xlu0 22
      %4229 = vperm.xlu0 %4228, %v653
      %v4230 = vpop.permute.xlu0 %4229
      %4232 = vset.pattern.permute.xlu0 22
      %4233 = vperm.xlu0 %4232, %v654
      %v4234 = vpop.permute.xlu0 %4233
      %4236 = vset.pattern.permute.xlu0 22
      %4237 = vperm.xlu0 %4236, %v655
      %v4238 = vpop.permute.xlu0 %4237
      %4240 = vset.pattern.permute.xlu0 22
      %4241 = vperm.xlu0 %4240, %v656
      %v4242 = vpop.permute.xlu0 %4241
      %4244 = vset.pattern.permute.xlu0 22
      %4245 = vperm.xlu0 %4244, %v657
      %v4246 = vpop.permute.xlu0 %4245
      %4248 = vset.pattern.permute.xlu0 22
      %4249 = vperm.xlu0 %4248, %v658
      %v4250 = vpop.permute.xlu0 %4249
      %v4252 = vadd.f32 %v4188, %v4222
      %v4253 = vadd.f32 %v4189, %v4222
      %v4254 = vadd.f32 %v4190, %v4222
      %v4255 = vadd.f32 %v4191, %v4222
      %v4256 = vadd.f32 %v4192, %v4226
      %v4257 = vadd.f32 %v4193, %v4226
      %v4258 = vadd.f32 %v4194, %v4226
      %v4259 = vadd.f32 %v4195, %v4226
      %v4260 = vadd.f32 %v4196, %v4230
      %v4261 = vadd.f32 %v4197, %v4230
      %v4262 = vadd.f32 %v4198, %v4230
      %v4263 = vadd.f32 %v4199, %v4230
      %v4264 = vadd.f32 %v4200, %v4234
      %v4265 = vadd.f32 %v4201, %v4234
      %v4266 = vadd.f32 %v4202, %v4234
      %v4267 = vadd.f32 %v4203, %v4234
      %v4268 = vadd.f32 %v4204, %v4238
      %v4269 = vadd.f32 %v4205, %v4238
      %v4270 = vadd.f32 %v4206, %v4238
      %v4271 = vadd.f32 %v4207, %v4238
      %v4272 = vadd.f32 %v4208, %v4242
      %v4273 = vadd.f32 %v4209, %v4242
      %v4274 = vadd.f32 %v4210, %v4242
      %v4275 = vadd.f32 %v4211, %v4242
      %v4276 = vadd.f32 %v4212, %v4246
      %v4277 = vadd.f32 %v4213, %v4246
      %v4278 = vadd.f32 %v4214, %v4246
      %v4279 = vadd.f32 %v4215, %v4246
      %v4280 = vadd.f32 %v4216, %v4250
      %v4281 = vadd.f32 %v4217, %v4250
      %v4282 = vadd.f32 %v4218, %v4250
      %v4283 = vadd.f32 %v4219, %v4250
      %v4284 = vmax.f32 %v4252, 0.0
      %v4285 = vmax.f32 %v4253, 0.0
      %v4286 = vmax.f32 %v4254, 0.0
      %v4287 = vmax.f32 %v4255, 0.0
      %v4288 = vmax.f32 %v4256, 0.0
      %v4289 = vmax.f32 %v4257, 0.0
      %v4290 = vmax.f32 %v4258, 0.0
      %v4291 = vmax.f32 %v4259, 0.0
      %v4292 = vmax.f32 %v4260, 0.0
      %v4293 = vmax.f32 %v4261, 0.0
      %v4294 = vmax.f32 %v4262, 0.0
      %v4295 = vmax.f32 %v4263, 0.0
      %v4296 = vmax.f32 %v4264, 0.0
      %v4297 = vmax.f32 %v4265, 0.0
      %v4298 = vmax.f32 %v4266, 0.0
      %v4299 = vmax.f32 %v4267, 0.0
      %v4300 = vmax.f32 %v4268, 0.0
      %v4301 = vmax.f32 %v4269, 0.0
      %v4302 = vmax.f32 %v4270, 0.0
      %v4303 = vmax.f32 %v4271, 0.0
      %v4304 = vmax.f32 %v4272, 0.0
      %v4305 = vmax.f32 %v4273, 0.0
      %v4306 = vmax.f32 %v4274, 0.0
      %v4307 = vmax.f32 %v4275, 0.0
      %v4308 = vmax.f32 %v4276, 0.0
      %v4309 = vmax.f32 %v4277, 0.0
      %v4310 = vmax.f32 %v4278, 0.0
      %v4311 = vmax.f32 %v4279, 0.0
      %v4312 = vmax.f32 %v4280, 0.0
      %v4313 = vmax.f32 %v4281, 0.0
      %v4314 = vmax.f32 %v4282, 0.0
      %v4315 = vmax.f32 %v4283, 0.0
      %v4316 = vld [vmem:[%s5] sm:$0xff]
      %v4317 = vld [vmem:[%s5 + $0x8] sm:$0xff]
      %v4318 = vld [vmem:[%s5 + $0x10] sm:$0xff]
      %v4319 = vld [vmem:[%s5 + $0x18] sm:$0xff]
      %v4320 = vld [vmem:[%s5 + $0x20] sm:$0xff]
      %v4321 = vld [vmem:[%s5 + $0x28] sm:$0xff]
      %v4322 = vld [vmem:[%s5 + $0x30] sm:$0xff]
      %v4323 = vld [vmem:[%s5 + $0x38] sm:$0xff]
      %4325 = vset.pattern.permute.xlu0 0
      %4326 = vperm.xlu0 %4325, %v4316
      %v4327 = vpop.permute.xlu0 %4326
      %4330 = vset.pattern.permute.xlu0 0
      %4331 = vperm.xlu0 %4330, %v4317
      %v4332 = vpop.permute.xlu0 %4331
      %4335 = vset.pattern.permute.xlu0 0
      %4336 = vperm.xlu0 %4335, %v4318
      %v4337 = vpop.permute.xlu0 %4336
      %4340 = vset.pattern.permute.xlu0 0
      %4341 = vperm.xlu0 %4340, %v4319
      %v4342 = vpop.permute.xlu0 %4341
      %4345 = vset.pattern.permute.xlu0 0
      %4346 = vperm.xlu0 %4345, %v4320
      %v4347 = vpop.permute.xlu0 %4346
      %4350 = vset.pattern.permute.xlu0 0
      %4351 = vperm.xlu0 %4350, %v4321
      %v4352 = vpop.permute.xlu0 %4351
      %4355 = vset.pattern.permute.xlu0 0
      %4356 = vperm.xlu0 %4355, %v4322
      %v4357 = vpop.permute.xlu0 %4356
      %4360 = vset.pattern.permute.xlu0 0
      %4361 = vperm.xlu0 %4360, %v4323
      %v4362 = vpop.permute.xlu0 %4361
      %v4364 = vmul.f32 %v4327, %v4284
      %v4365 = vmul.f32 %v4327, %v4285
      %v4366 = vmul.f32 %v4327, %v4286
      %v4367 = vmul.f32 %v4327, %v4287
      %v4368 = vmul.f32 %v4332, %v4288
      %v4369 = vmul.f32 %v4332, %v4289
      %v4370 = vmul.f32 %v4332, %v4290
      %v4371 = vmul.f32 %v4332, %v4291
      %v4372 = vmul.f32 %v4337, %v4292
      %v4373 = vmul.f32 %v4337, %v4293
      %v4374 = vmul.f32 %v4337, %v4294
      %v4375 = vmul.f32 %v4337, %v4295
      %v4376 = vmul.f32 %v4342, %v4296
      %v4377 = vmul.f32 %v4342, %v4297
      %v4378 = vmul.f32 %v4342, %v4298
      %v4379 = vmul.f32 %v4342, %v4299
      %v4380 = vmul.f32 %v4347, %v4300
      %v4381 = vmul.f32 %v4347, %v4301
      %v4382 = vmul.f32 %v4347, %v4302
      %v4383 = vmul.f32 %v4347, %v4303
      %v4384 = vmul.f32 %v4352, %v4304
      %v4385 = vmul.f32 %v4352, %v4305
      %v4386 = vmul.f32 %v4352, %v4306
      %v4387 = vmul.f32 %v4352, %v4307
      %v4388 = vmul.f32 %v4357, %v4308
      %v4389 = vmul.f32 %v4357, %v4309
      %v4390 = vmul.f32 %v4357, %v4310
      %v4391 = vmul.f32 %v4357, %v4311
      %v4392 = vmul.f32 %v4362, %v4312
      %v4393 = vmul.f32 %v4362, %v4313
      %v4394 = vmul.f32 %v4362, %v4314
      %v4395 = vmul.f32 %v4362, %v4315
      %v4396 = vadd.f32 %v4364, %v4368
      %v4397 = vadd.f32 %v4396, %v4372
      %v4398 = vadd.f32 %v4397, %v4376
      %v4399 = vadd.f32 %v4398, %v4380
      %v4400 = vadd.f32 %v4399, %v4384
      %v4401 = vadd.f32 %v4400, %v4388
      %v4402 = vadd.f32 %v4401, %v4392
      %v4403 = vrot.slane %v4402, 4
      %v4404 = vadd.f32 %v4402, %v4403
      %v4405 = vrot.slane %v4404, 2
      %v4406 = vadd.f32 %v4404, %v4405
      %v4407 = vrot.slane %v4406, 1
      %v4408 = vadd.f32 %v4406, %v4407
      %v4409 = vadd.f32 %v4365, %v4369
      %v4410 = vadd.f32 %v4409, %v4373
      %v4411 = vadd.f32 %v4410, %v4377
      %v4412 = vadd.f32 %v4411, %v4381
      %v4413 = vadd.f32 %v4412, %v4385
      %v4414 = vadd.f32 %v4413, %v4389
      %v4415 = vadd.f32 %v4414, %v4393
      %v4416 = vrot.slane %v4415, 4
      %v4417 = vadd.f32 %v4415, %v4416
      %v4418 = vrot.slane %v4417, 2
      %v4419 = vadd.f32 %v4417, %v4418
      %v4420 = vrot.slane %v4419, 1
      %v4421 = vadd.f32 %v4419, %v4420
      %v4422 = vadd.f32 %v4366, %v4370
      %v4423 = vadd.f32 %v4422, %v4374
      %v4424 = vadd.f32 %v4423, %v4378
      %v4425 = vadd.f32 %v4424, %v4382
      %v4426 = vadd.f32 %v4425, %v4386
      %v4427 = vadd.f32 %v4426, %v4390
      %v4428 = vadd.f32 %v4427, %v4394
      %v4429 = vrot.slane %v4428, 4
      %v4430 = vadd.f32 %v4428, %v4429
      %v4431 = vrot.slane %v4430, 2
      %v4432 = vadd.f32 %v4430, %v4431
      %v4433 = vrot.slane %v4432, 1
      %v4434 = vadd.f32 %v4432, %v4433
      %v4435 = vadd.f32 %v4367, %v4371
      %v4436 = vadd.f32 %v4435, %v4375
      %v4437 = vadd.f32 %v4436, %v4379
      %v4438 = vadd.f32 %v4437, %v4383
      %v4439 = vadd.f32 %v4438, %v4387
      %v4440 = vadd.f32 %v4439, %v4391
      %v4441 = vadd.f32 %v4440, %v4395
      %v4442 = vrot.slane %v4441, 4
      %v4443 = vadd.f32 %v4441, %v4442
      %v4444 = vrot.slane %v4443, 2
      %v4445 = vadd.f32 %v4443, %v4444
      %v4446 = vrot.slane %v4445, 1
      %v4447 = vadd.f32 %v4445, %v4446
      %v4448 = vld [vmem:[#allocation2] sm:$0x1]
      %4450 = vset.pattern.permute.xlu0 0
      %4451 = vperm.xlu0 %4450, %v4448
      %v4452 = vpop.permute.xlu0 %4451
      %v4454 = vperm.slane %v4452, 0
      %v4455 = vadd.f32 %v4408, %v4454
      %v4456 = vadd.f32 %v4421, %v4454
      %v4457 = vadd.f32 %v4434, %v4454
      %v4458 = vadd.f32 %v4447, %v4454
      %v4463 = vrot.slane %v4456, 7
      %v4464 = vrot.slane %v4457, 6
      %v4465 = vrot.slane %v4458, 5
      %vm4466 = vcmask 1040384
      %v4467 = vsel %vm4466, %v4455, %v4463
      %vm4468 = vcmask 1042434
      %v4469 = vsel %vm4468, %v4464, %v4465
      %vm4470 = vcmask 1041408
      %v4471 = vsel %vm4470, %v4467, %v4469
      %v4473 = vlaneseq
      %vm4474 = vcmp.ge.s32.totalorder %v4473, 0
      %vm4475 = vcmp.lt.s32.totalorder %v4473, 512
      %vm4476 = vmand %vm4474, %vm4475
      %4477 = vst.msk [vmem:[%s336] sm:$0xf] %vm4476, %v4471
      %s4478 = smul.u32 4, %s25
      %p4479 = scmp.lt.s32.totalorder %s24, 1
      %s4480 = scalar_select %p4479, %s24, 1
      %p4481 = scmp.lt.s32.totalorder %s4478, 7
      %s4482 = scalar_select %p4481, %s4478, 7
      %s4483 = smul.addr %s4480, 8
      %s4484 = sadd.s32 %s4482, %s4483
      %s4485 = scalar_lea.vmem %s7, %s4484
      // Predicated region
      $region49: #{onet_forward.1} parent=47 // pred_check
        %p4486 = pneg %p211
      $region50: #{onet_forward.1} parent=47 // pred_check_branch
        %4488 = sbr.rel (%p4486) target = $region52
      $region51: #{onet_forward.1} parent=47 // pred_region
        %s4489 = smul.u32 4, %s25
      $region52: #{onet_forward.1} parent=47 // pred_fallthru
        _
    $region48: #{onet_forward.1} parent=5 // pred_fallthru
      _
    %p4490 = scmp.le.s32.totalorder 2, %s15
    // Predicated region
    $region53: #{onet_forward.1} parent=5 // pred_check
      %p4491 = pneg %p4490
    $region54: #{onet_forward.1} parent=5 // pred_check_branch
      %4493 = sbr.rel (%p4491) target = $region56
    $region55: #{onet_forward.1} parent=5 // pred_region
      %s4494 = ssub.s32 %s15, 2
      // Predicated region
      $region57: #{onet_forward.1} parent=55 // pred_check
        %p4495 = pneg %p217
      $region58: #{onet_forward.1} parent=55 // pred_check_branch
        %4497 = sbr.rel (%p4495) target = $region60
      $region59: #{onet_forward.1} parent=55 // pred_region
        %s4498 = smul.u32 4, %s27
        %p4499 = scmp.lt.s32.totalorder %s26, 1
        %s4500 = scalar_select %p4499, %s26, 1
        %p4501 = scmp.lt.s32.totalorder %s4498, 7
        %s4502 = scalar_select %p4501, %s4498, 7
        %s4503 = smul.addr %s4500, 8
        %s4504 = sadd.s32 %s4502, %s4503
        %s4505 = scalar_lea.vmem %s7, %s4504
      $region60: #{onet_forward.1} parent=55 // pred_fallthru
        _
    $region56: #{onet_forward.1} parent=5 // pred_fallthru
      _
  $region6: #{onet_forward.1} parent=0 // loop_footer
    %s19 = sadd.s32 1, %s15
  $region7: #{onet_forward.1} parent=0 // loop_footer_branch
    %14 = sbr.rel target = $region3
  $region8: #{onet_forward.1} parent=0 // loop_exit
    _

</llo_original>
